<compile_context>
chip_gen: v6e
topology: v6e:2x2x1
jax: 0.10.0
libtpu: 0.0.40
codegen_flags: <defaults>
</compile_context>

<pallas_src>
import functools

import numpy as np
import jax
import jax.numpy as jnp
from jax.experimental import pallas as pl
from jax.experimental.pallas import tpu as pltpu


def fold_upsample_conv_weights(w_oihw):
    """Fold cat(x4) + PixelShuffle(2) + conv3x3 into per-sub-pixel 2x2 weights.

    Returns a (16, C, Co) array: slab index = ((a*2 + b)*2 + kh)*2 + kw,
    rows indexed by the low-res input channel, cols by the output channel.
    """
    w = np.asarray(w_oihw, dtype=np.float32)          # (Co, C, 3, 3) OIHW
    Co, C, KH, KW = w.shape
    assert KH == 3 and KW == 3, "kernel_size=3 is assumed (module default)"
    w_eff = np.zeros((2, 2, 2, 2, C, Co), np.float32)
    for a in range(2):                                # output row parity
        for b in range(2):                            # output col parity
            for kh in range(3):
                e = a + kh - 1                        # offset in upsampled rows
                dh, i = e // 2, e % 2                 # low-res row offset / parity
                khp = 1 + dh - a                      # tap index in the 2x2 window
                for kw in range(3):
                    f = b + kw - 1
                    dw, j = f // 2, f % 2
                    kwp = 1 + dw - b
                    for ci in range(C):
                        # cat(x4) + pixel_shuffle channel map:
                        # U[.., ci, 2h+i, 2w+j] = x[.., (4*ci + 2*i + j) % C, h, w]
                        cx = (4 * ci + 2 * i + j) % C
                        w_eff[a, b, khp, kwp, cx, :] += w[:, ci, kh, kw]
    return jnp.asarray(w_eff.reshape(16, C, Co))


def _upsample_conv_kernel(x_ref, w_ref, b_ref, o_ref, *, P, W, C, Co):
    # x_ref: (1, H+2, W+2, C)   zero-padded low-res image of one batch element
    # w_ref: (16, C, Co)        folded sub-pixel weights
    # b_ref: (1, Co)            conv bias
    # o_ref: (1, 4, P, W, Co)   sub-pixel output planes (index a*2+b) of this tile
    t = pl.program_id(1)
    p0 = pl.multiple_of(t * P, P)
    # (P + 2) padded input rows needed for this row tile (1-row halo each side).
    xwin = x_ref[0, pl.ds(p0, P + 2), :, :].astype(jnp.float32)   # (P+2, W+2, C)
    bias = b_ref[...].astype(jnp.float32)                         # (1, Co)

    for a in range(2):
        for b in range(2):
            acc = jnp.zeros((P * W, Co), jnp.float32)
            for kh in range(2):
                for kw in range(2):
                    patch = xwin[a + kh:a + kh + P, b + kw:b + kw + W, :]
                    w_tap = w_ref[((a * 2 + b) * 2 + kh) * 2 + kw]  # (C, Co)
                    acc = acc + jnp.dot(
                        patch.reshape(P * W, C),
                        w_tap.astype(jnp.float32),
                        preferred_element_type=jnp.float32)
            y = acc.reshape(P, W, Co) + bias
            o_ref[0, a * 2 + b] = y.astype(o_ref.dtype)


def upsample_conv_forward(x_nchw, w_oihw, bias, *, tile_p=8):
    """UpsampleConv forward. x: (N, C, H, W) -> (N, Co, 2H, 2W) (PyTorch layout)."""
    N, C, H, W = x_nchw.shape
    Co = w_oihw.shape[0]
    P = tile_p if H % tile_p == 0 else H              # low-res rows per tile
    n_tiles = H // P

    w_packed = fold_upsample_conv_weights(w_oihw)     # (16, C, Co)
    bias2d = jnp.asarray(bias, jnp.float32).reshape(1, Co)

    x_nhwc = jnp.transpose(x_nchw, (0, 2, 3, 1))      # NCHW -> NHWC
    # One-shot pad of the (4x smaller) pre-upsample tensor; the 2Hx2W upsampled
    # activation itself is never written to HBM.
    x_pad = jnp.pad(x_nhwc, ((0, 0), (1, 1), (1, 1), (0, 0)))

    kernel = functools.partial(_upsample_conv_kernel, P=P, W=W, C=C, Co=Co)
    out5 = pl.pallas_call(
        kernel,
        out_shape=jax.ShapeDtypeStruct((N, 4, H, W, Co), x_nchw.dtype),
        grid=(N, n_tiles),
        in_specs=[
            # full low-res image per batch element; block index is constant over
            # the row-tile axis, so it is DMA'd only once per batch element.
            pl.BlockSpec((1, H + 2, W + 2, C), lambda n, t: (n, 0, 0, 0)),
            pl.BlockSpec((16, C, Co), lambda n, t: (0, 0, 0)),
            pl.BlockSpec((1, Co), lambda n, t: (0, 0)),
        ],
        out_specs=pl.BlockSpec((1, 4, P, W, Co), lambda n, t: (n, 0, t, 0, 0)),
        compiler_params=pltpu.CompilerParams(
            dimension_semantics=("parallel", "parallel"),
            vmem_limit_bytes=32 * 1024 * 1024),
    )(x_pad, w_packed, bias2d)

    # (N, 4, H, W, Co) -> (N, 2, 2, H, W, Co) -> NCHW: out[n, co, 2p+a, 2q+b]
    out = out5.reshape(N, 2, 2, H, W, Co)
    out = jnp.transpose(out, (0, 5, 3, 1, 4, 2)).reshape(N, Co, 2 * H, 2 * W)
    return out


def upsample_conv_reference(x_nchw, w_oihw, bias):
    """Pure-JAX reference implementing the original ops (cat + shuffle + conv)."""
    N, C, H, W = x_nchw.shape
    t = jnp.concatenate([x_nchw] * 4, axis=1)                       # (N, 4C, H, W)
    u = t.reshape(N, C, 2, 2, H, W)                                 # PixelShuffle(2)
    u = jnp.transpose(u, (0, 1, 4, 2, 5, 3)).reshape(N, C, 2 * H, 2 * W)
    y = jax.lax.conv_general_dilated(
        u, jnp.asarray(w_oihw), window_strides=(1, 1),
        padding=((1, 1), (1, 1)),
        dimension_numbers=("NCHW", "OIHW", "NCHW"))
    return y + jnp.asarray(bias).reshape(1, -1, 1, 1)


if __name__ == "__main__":
    N, C, H, W = 2, 4, 16, 16      # input_dim = 4
    Co = 4                          # output_dim = 4

    key = jax.random.PRNGKey(0)
    kx, kw, kb = jax.random.split(key, 3)
    x = jax.random.normal(kx, (N, C, H, W), jnp.float32)
    w = jax.random.normal(kw, (Co, C, 3, 3), jnp.float32) * 0.1     # OIHW
    bias = jax.random.normal(kb, (Co,), jnp.float32) * 0.1

    out = jax.block_until_ready(upsample_conv_forward(x, w, bias))
    ref = jax.block_until_ready(upsample_conv_reference(x, w, bias))

    assert out.shape == (N, Co, 2 * H, 2 * W)
    assert jnp.allclose(out, ref, atol=1e-3, rtol=1e-3), "mismatch vs reference"

    print("KERNEL_OK")
</pallas_src>

<mosaic_0001>
module attributes {stable_mosaic.version = 11 : i64} {
  func.func @_upsample_conv_kernel(%arg0: i32, %arg1: i32, %arg2: memref<1x18x18x4xf32, #tpu.memory_space<vmem>>, %arg3: memref<16x4x4xf32, #tpu.memory_space<vmem>>, %arg4: memref<1x4xf32, #tpu.memory_space<vmem>>, %arg5: memref<1x4x8x16x4xf32, #tpu.memory_space<vmem>>) attributes {dimension_semantics = [#tpu.dimension_semantics<parallel>, #tpu.dimension_semantics<parallel>], iteration_bounds = array<i64: 2, 2>, scalar_prefetch = 0 : i64, scratch_operands = 0 : i64, tpu.core_type = #tpu.core_type<tc>, window_params = [{transform_indices = @transform_0, window_bounds = array<i64: 1, 18, 18, 4>}, {pipeline_mode = #tpu.pipeline_mode<synchronous>, transform_indices = @transform_1, window_bounds = array<i64: 16, 4, 4>}, {pipeline_mode = #tpu.pipeline_mode<synchronous>, transform_indices = @transform_2, window_bounds = array<i64: 1, 4>}, {transform_indices = @transform_3, window_bounds = array<i64: 1, 4, 8, 16, 4>}]} {
    %c8_i32 = arith.constant 8 : i32
    %0 = arith.muli %arg1, %c8_i32 : i32
    %1 = tpu.assume_multiple %0, 8 : i32
    %c0 = arith.constant 0 : index
    %2 = arith.index_cast %1 : i32 to index
    %c0_0 = arith.constant 0 : index
    %c0_1 = arith.constant 0 : index
    %3 = vector.load %arg2[%c0, %2, %c0_0, %c0_1] : memref<1x18x18x4xf32, #tpu.memory_space<vmem>>, vector<1x10x18x4xf32>
    %4 = vector.shape_cast %3 : vector<1x10x18x4xf32> to vector<10x18x4xf32>
    %c0_2 = arith.constant 0 : index
    %c0_3 = arith.constant 0 : index
    %5 = vector.load %arg4[%c0_2, %c0_3] : memref<1x4xf32, #tpu.memory_space<vmem>>, vector<1x4xf32>
    %cst = arith.constant 0.000000e+00 : f32
    %6 = vector.broadcast %cst : f32 to vector<128x4xf32>
    %7 = vector.extract_strided_slice %4 {offsets = [0, 0, 0], sizes = [8, 16, 4], strides = [1, 1, 1]} : vector<10x18x4xf32> to vector<8x16x4xf32>
    %c0_4 = arith.constant 0 : index
    %c0_5 = arith.constant 0 : index
    %c0_6 = arith.constant 0 : index
    %8 = vector.load %arg3[%c0_4, %c0_5, %c0_6] : memref<16x4x4xf32, #tpu.memory_space<vmem>>, vector<1x4x4xf32>
    %9 = vector.shape_cast %8 : vector<1x4x4xf32> to vector<4x4xf32>
    %10 = vector.shape_cast %7 : vector<8x16x4xf32> to vector<128x4xf32>
    %cst_7 = arith.constant dense<0.000000e+00> : vector<128x4xf32>
    %11 = tpu.matmul %10, %9, %cst_7 {dimension_numbers = #tpu.dot_dimension_numbers<[1], [0], [0], [1], [0, 0, 1, 1], [], []>} : vector<128x4xf32>, vector<4x4xf32>, vector<128x4xf32> -> vector<128x4xf32>
    %12 = arith.addf %6, %11 : vector<128x4xf32>
    %13 = vector.extract_strided_slice %4 {offsets = [0, 1, 0], sizes = [8, 16, 4], strides = [1, 1, 1]} : vector<10x18x4xf32> to vector<8x16x4xf32>
    %c1 = arith.constant 1 : index
    %c0_8 = arith.constant 0 : index
    %c0_9 = arith.constant 0 : index
    %14 = vector.load %arg3[%c1, %c0_8, %c0_9] : memref<16x4x4xf32, #tpu.memory_space<vmem>>, vector<1x4x4xf32>
    %15 = vector.shape_cast %14 : vector<1x4x4xf32> to vector<4x4xf32>
    %16 = vector.shape_cast %13 : vector<8x16x4xf32> to vector<128x4xf32>
    %cst_10 = arith.constant dense<0.000000e+00> : vector<128x4xf32>
    %17 = tpu.matmul %16, %15, %cst_10 {dimension_numbers = #tpu.dot_dimension_numbers<[1], [0], [0], [1], [0, 0, 1, 1], [], []>} : vector<128x4xf32>, vector<4x4xf32>, vector<128x4xf32> -> vector<128x4xf32>
    %18 = arith.addf %12, %17 : vector<128x4xf32>
    %19 = vector.extract_strided_slice %4 {offsets = [1, 0, 0], sizes = [8, 16, 4], strides = [1, 1, 1]} : vector<10x18x4xf32> to vector<8x16x4xf32>
    %c2 = arith.constant 2 : index
    %c0_11 = arith.constant 0 : index
    %c0_12 = arith.constant 0 : index
    %20 = vector.load %arg3[%c2, %c0_11, %c0_12] : memref<16x4x4xf32, #tpu.memory_space<vmem>>, vector<1x4x4xf32>
    %21 = vector.shape_cast %20 : vector<1x4x4xf32> to vector<4x4xf32>
    %22 = vector.shape_cast %19 : vector<8x16x4xf32> to vector<128x4xf32>
    %cst_13 = arith.constant dense<0.000000e+00> : vector<128x4xf32>
    %23 = tpu.matmul %22, %21, %cst_13 {dimension_numbers = #tpu.dot_dimension_numbers<[1], [0], [0], [1], [0, 0, 1, 1], [], []>} : vector<128x4xf32>, vector<4x4xf32>, vector<128x4xf32> -> vector<128x4xf32>
    %24 = arith.addf %18, %23 : vector<128x4xf32>
    %25 = vector.extract_strided_slice %4 {offsets = [1, 1, 0], sizes = [8, 16, 4], strides = [1, 1, 1]} : vector<10x18x4xf32> to vector<8x16x4xf32>
    %c3 = arith.constant 3 : index
    %c0_14 = arith.constant 0 : index
    %c0_15 = arith.constant 0 : index
    %26 = vector.load %arg3[%c3, %c0_14, %c0_15] : memref<16x4x4xf32, #tpu.memory_space<vmem>>, vector<1x4x4xf32>
    %27 = vector.shape_cast %26 : vector<1x4x4xf32> to vector<4x4xf32>
    %28 = vector.shape_cast %25 : vector<8x16x4xf32> to vector<128x4xf32>
    %cst_16 = arith.constant dense<0.000000e+00> : vector<128x4xf32>
    %29 = tpu.matmul %28, %27, %cst_16 {dimension_numbers = #tpu.dot_dimension_numbers<[1], [0], [0], [1], [0, 0, 1, 1], [], []>} : vector<128x4xf32>, vector<4x4xf32>, vector<128x4xf32> -> vector<128x4xf32>
    %30 = arith.addf %24, %29 : vector<128x4xf32>
    %31 = vector.shape_cast %30 : vector<128x4xf32> to vector<8x16x4xf32>
    %32 = vector.shape_cast %5 : vector<1x4xf32> to vector<1x1x4xf32>
    %33 = vector.broadcast %32 : vector<1x1x4xf32> to vector<8x16x4xf32>
    %34 = arith.addf %31, %33 : vector<8x16x4xf32>
    %c0_17 = arith.constant 0 : index
    %c0_18 = arith.constant 0 : index
    %c0_19 = arith.constant 0 : index
    %c0_20 = arith.constant 0 : index
    %c0_21 = arith.constant 0 : index
    %35 = vector.load %arg5[%c0_17, %c0_18, %c0_19, %c0_20, %c0_21] : memref<1x4x8x16x4xf32, #tpu.memory_space<vmem>>, vector<1x1x8x16x4xf32>
    %36 = vector.shape_cast %35 : vector<1x1x8x16x4xf32> to vector<8x16x4xf32>
    %37 = vector.shape_cast %34 : vector<8x16x4xf32> to vector<1x1x8x16x4xf32>
    tpu.vector_store %arg5[%c0_17, %c0_18, %c0_19, %c0_20, %c0_21], %37 {strides = array<i32>} : memref<1x4x8x16x4xf32, #tpu.memory_space<vmem>>, vector<1x1x8x16x4xf32>,
    %cst_22 = arith.constant 0.000000e+00 : f32
    %38 = vector.broadcast %cst_22 : f32 to vector<128x4xf32>
    %39 = vector.extract_strided_slice %4 {offsets = [0, 1, 0], sizes = [8, 16, 4], strides = [1, 1, 1]} : vector<10x18x4xf32> to vector<8x16x4xf32>
    %c4 = arith.constant 4 : index
    %c0_23 = arith.constant 0 : index
    %c0_24 = arith.constant 0 : index
    %40 = vector.load %arg3[%c4, %c0_23, %c0_24] : memref<16x4x4xf32, #tpu.memory_space<vmem>>, vector<1x4x4xf32>
    %41 = vector.shape_cast %40 : vector<1x4x4xf32> to vector<4x4xf32>
    %42 = vector.shape_cast %39 : vector<8x16x4xf32> to vector<128x4xf32>
    %cst_25 = arith.constant dense<0.000000e+00> : vector<128x4xf32>
    %43 = tpu.matmul %42, %41, %cst_25 {dimension_numbers = #tpu.dot_dimension_numbers<[1], [0], [0], [1], [0, 0, 1, 1], [], []>} : vector<128x4xf32>, vector<4x4xf32>, vector<128x4xf32> -> vector<128x4xf32>
    %44 = arith.addf %38, %43 : vector<128x4xf32>
    %45 = vector.extract_strided_slice %4 {offsets = [0, 2, 0], sizes = [8, 16, 4], strides = [1, 1, 1]} : vector<10x18x4xf32> to vector<8x16x4xf32>
    %c5 = arith.constant 5 : index
    %c0_26 = arith.constant 0 : index
    %c0_27 = arith.constant 0 : index
    %46 = vector.load %arg3[%c5, %c0_26, %c0_27] : memref<16x4x4xf32, #tpu.memory_space<vmem>>, vector<1x4x4xf32>
    %47 = vector.shape_cast %46 : vector<1x4x4xf32> to vector<4x4xf32>
    %48 = vector.shape_cast %45 : vector<8x16x4xf32> to vector<128x4xf32>
    %cst_28 = arith.constant dense<0.000000e+00> : vector<128x4xf32>
    %49 = tpu.matmul %48, %47, %cst_28 {dimension_numbers = #tpu.dot_dimension_numbers<[1], [0], [0], [1], [0, 0, 1, 1], [], []>} : vector<128x4xf32>, vector<4x4xf32>, vector<128x4xf32> -> vector<128x4xf32>
    %50 = arith.addf %44, %49 : vector<128x4xf32>
    %51 = vector.extract_strided_slice %4 {offsets = [1, 1, 0], sizes = [8, 16, 4], strides = [1, 1, 1]} : vector<10x18x4xf32> to vector<8x16x4xf32>
    %c6 = arith.constant 6 : index
    %c0_29 = arith.constant 0 : index
    %c0_30 = arith.constant 0 : index
    %52 = vector.load %arg3[%c6, %c0_29, %c0_30] : memref<16x4x4xf32, #tpu.memory_space<vmem>>, vector<1x4x4xf32>
    %53 = vector.shape_cast %52 : vector<1x4x4xf32> to vector<4x4xf32>
    %54 = vector.shape_cast %51 : vector<8x16x4xf32> to vector<128x4xf32>
    %cst_31 = arith.constant dense<0.000000e+00> : vector<128x4xf32>
    %55 = tpu.matmul %54, %53, %cst_31 {dimension_numbers = #tpu.dot_dimension_numbers<[1], [0], [0], [1], [0, 0, 1, 1], [], []>} : vector<128x4xf32>, vector<4x4xf32>, vector<128x4xf32> -> vector<128x4xf32>
    %56 = arith.addf %50, %55 : vector<128x4xf32>
    %57 = vector.extract_strided_slice %4 {offsets = [1, 2, 0], sizes = [8, 16, 4], strides = [1, 1, 1]} : vector<10x18x4xf32> to vector<8x16x4xf32>
    %c7 = arith.constant 7 : index
    %c0_32 = arith.constant 0 : index
    %c0_33 = arith.constant 0 : index
    %58 = vector.load %arg3[%c7, %c0_32, %c0_33] : memref<16x4x4xf32, #tpu.memory_space<vmem>>, vector<1x4x4xf32>
    %59 = vector.shape_cast %58 : vector<1x4x4xf32> to vector<4x4xf32>
    %60 = vector.shape_cast %57 : vector<8x16x4xf32> to vector<128x4xf32>
    %cst_34 = arith.constant dense<0.000000e+00> : vector<128x4xf32>
    %61 = tpu.matmul %60, %59, %cst_34 {dimension_numbers = #tpu.dot_dimension_numbers<[1], [0], [0], [1], [0, 0, 1, 1], [], []>} : vector<128x4xf32>, vector<4x4xf32>, vector<128x4xf32> -> vector<128x4xf32>
    %62 = arith.addf %56, %61 : vector<128x4xf32>
    %63 = vector.shape_cast %62 : vector<128x4xf32> to vector<8x16x4xf32>
    %64 = vector.shape_cast %5 : vector<1x4xf32> to vector<1x1x4xf32>
    %65 = vector.broadcast %64 : vector<1x1x4xf32> to vector<8x16x4xf32>
    %66 = arith.addf %63, %65 : vector<8x16x4xf32>
    %c0_35 = arith.constant 0 : index
    %c1_36 = arith.constant 1 : index
    %c0_37 = arith.constant 0 : index
    %c0_38 = arith.constant 0 : index
    %c0_39 = arith.constant 0 : index
    %67 = vector.load %arg5[%c0_35, %c1_36, %c0_37, %c0_38, %c0_39] : memref<1x4x8x16x4xf32, #tpu.memory_space<vmem>>, vector<1x1x8x16x4xf32>
    %68 = vector.shape_cast %67 : vector<1x1x8x16x4xf32> to vector<8x16x4xf32>
    %69 = vector.shape_cast %66 : vector<8x16x4xf32> to vector<1x1x8x16x4xf32>
    tpu.vector_store %arg5[%c0_35, %c1_36, %c0_37, %c0_38, %c0_39], %69 {strides = array<i32>} : memref<1x4x8x16x4xf32, #tpu.memory_space<vmem>>, vector<1x1x8x16x4xf32>,
    %cst_40 = arith.constant 0.000000e+00 : f32
    %70 = vector.broadcast %cst_40 : f32 to vector<128x4xf32>
    %71 = vector.extract_strided_slice %4 {offsets = [1, 0, 0], sizes = [8, 16, 4], strides = [1, 1, 1]} : vector<10x18x4xf32> to vector<8x16x4xf32>
    %c8 = arith.constant 8 : index
    %c0_41 = arith.constant 0 : index
    %c0_42 = arith.constant 0 : index
    %72 = vector.load %arg3[%c8, %c0_41, %c0_42] : memref<16x4x4xf32, #tpu.memory_space<vmem>>, vector<1x4x4xf32>
    %73 = vector.shape_cast %72 : vector<1x4x4xf32> to vector<4x4xf32>
    %74 = vector.shape_cast %71 : vector<8x16x4xf32> to vector<128x4xf32>
    %cst_43 = arith.constant dense<0.000000e+00> : vector<128x4xf32>
    %75 = tpu.matmul %74, %73, %cst_43 {dimension_numbers = #tpu.dot_dimension_numbers<[1], [0], [0], [1], [0, 0, 1, 1], [], []>} : vector<128x4xf32>, vector<4x4xf32>, vector<128x4xf32> -> vector<128x4xf32>
    %76 = arith.addf %70, %75 : vector<128x4xf32>
    %77 = vector.extract_strided_slice %4 {offsets = [1, 1, 0], sizes = [8, 16, 4], strides = [1, 1, 1]} : vector<10x18x4xf32> to vector<8x16x4xf32>
    %c9 = arith.constant 9 : index
    %c0_44 = arith.constant 0 : index
    %c0_45 = arith.constant 0 : index
    %78 = vector.load %arg3[%c9, %c0_44, %c0_45] : memref<16x4x4xf32, #tpu.memory_space<vmem>>, vector<1x4x4xf32>
    %79 = vector.shape_cast %78 : vector<1x4x4xf32> to vector<4x4xf32>
    %80 = vector.shape_cast %77 : vector<8x16x4xf32> to vector<128x4xf32>
    %cst_46 = arith.constant dense<0.000000e+00> : vector<128x4xf32>
    %81 = tpu.matmul %80, %79, %cst_46 {dimension_numbers = #tpu.dot_dimension_numbers<[1], [0], [0], [1], [0, 0, 1, 1], [], []>} : vector<128x4xf32>, vector<4x4xf32>, vector<128x4xf32> -> vector<128x4xf32>
    %82 = arith.addf %76, %81 : vector<128x4xf32>
    %83 = vector.extract_strided_slice %4 {offsets = [2, 0, 0], sizes = [8, 16, 4], strides = [1, 1, 1]} : vector<10x18x4xf32> to vector<8x16x4xf32>
    %c10 = arith.constant 10 : index
    %c0_47 = arith.constant 0 : index
    %c0_48 = arith.constant 0 : index
    %84 = vector.load %arg3[%c10, %c0_47, %c0_48] : memref<16x4x4xf32, #tpu.memory_space<vmem>>, vector<1x4x4xf32>
    %85 = vector.shape_cast %84 : vector<1x4x4xf32> to vector<4x4xf32>
    %86 = vector.shape_cast %83 : vector<8x16x4xf32> to vector<128x4xf32>
    %cst_49 = arith.constant dense<0.000000e+00> : vector<128x4xf32>
    %87 = tpu.matmul %86, %85, %cst_49 {dimension_numbers = #tpu.dot_dimension_numbers<[1], [0], [0], [1], [0, 0, 1, 1], [], []>} : vector<128x4xf32>, vector<4x4xf32>, vector<128x4xf32> -> vector<128x4xf32>
    %88 = arith.addf %82, %87 : vector<128x4xf32>
    %89 = vector.extract_strided_slice %4 {offsets = [2, 1, 0], sizes = [8, 16, 4], strides = [1, 1, 1]} : vector<10x18x4xf32> to vector<8x16x4xf32>
    %c11 = arith.constant 11 : index
    %c0_50 = arith.constant 0 : index
    %c0_51 = arith.constant 0 : index
    %90 = vector.load %arg3[%c11, %c0_50, %c0_51] : memref<16x4x4xf32, #tpu.memory_space<vmem>>, vector<1x4x4xf32>
    %91 = vector.shape_cast %90 : vector<1x4x4xf32> to vector<4x4xf32>
    %92 = vector.shape_cast %89 : vector<8x16x4xf32> to vector<128x4xf32>
    %cst_52 = arith.constant dense<0.000000e+00> : vector<128x4xf32>
    %93 = tpu.matmul %92, %91, %cst_52 {dimension_numbers = #tpu.dot_dimension_numbers<[1], [0], [0], [1], [0, 0, 1, 1], [], []>} : vector<128x4xf32>, vector<4x4xf32>, vector<128x4xf32> -> vector<128x4xf32>
    %94 = arith.addf %88, %93 : vector<128x4xf32>
    %95 = vector.shape_cast %94 : vector<128x4xf32> to vector<8x16x4xf32>
    %96 = vector.shape_cast %5 : vector<1x4xf32> to vector<1x1x4xf32>
    %97 = vector.broadcast %96 : vector<1x1x4xf32> to vector<8x16x4xf32>
    %98 = arith.addf %95, %97 : vector<8x16x4xf32>
    %c0_53 = arith.constant 0 : index
    %c2_54 = arith.constant 2 : index
    %c0_55 = arith.constant 0 : index
    %c0_56 = arith.constant 0 : index
    %c0_57 = arith.constant 0 : index
    %99 = vector.load %arg5[%c0_53, %c2_54, %c0_55, %c0_56, %c0_57] : memref<1x4x8x16x4xf32, #tpu.memory_space<vmem>>, vector<1x1x8x16x4xf32>
    %100 = vector.shape_cast %99 : vector<1x1x8x16x4xf32> to vector<8x16x4xf32>
    %101 = vector.shape_cast %98 : vector<8x16x4xf32> to vector<1x1x8x16x4xf32>
    tpu.vector_store %arg5[%c0_53, %c2_54, %c0_55, %c0_56, %c0_57], %101 {strides = array<i32>} : memref<1x4x8x16x4xf32, #tpu.memory_space<vmem>>, vector<1x1x8x16x4xf32>,
    %cst_58 = arith.constant 0.000000e+00 : f32
    %102 = vector.broadcast %cst_58 : f32 to vector<128x4xf32>
    %103 = vector.extract_strided_slice %4 {offsets = [1, 1, 0], sizes = [8, 16, 4], strides = [1, 1, 1]} : vector<10x18x4xf32> to vector<8x16x4xf32>
    %c12 = arith.constant 12 : index
    %c0_59 = arith.constant 0 : index
    %c0_60 = arith.constant 0 : index
    %104 = vector.load %arg3[%c12, %c0_59, %c0_60] : memref<16x4x4xf32, #tpu.memory_space<vmem>>, vector<1x4x4xf32>
    %105 = vector.shape_cast %104 : vector<1x4x4xf32> to vector<4x4xf32>
    %106 = vector.shape_cast %103 : vector<8x16x4xf32> to vector<128x4xf32>
    %cst_61 = arith.constant dense<0.000000e+00> : vector<128x4xf32>
    %107 = tpu.matmul %106, %105, %cst_61 {dimension_numbers = #tpu.dot_dimension_numbers<[1], [0], [0], [1], [0, 0, 1, 1], [], []>} : vector<128x4xf32>, vector<4x4xf32>, vector<128x4xf32> -> vector<128x4xf32>
    %108 = arith.addf %102, %107 : vector<128x4xf32>
    %109 = vector.extract_strided_slice %4 {offsets = [1, 2, 0], sizes = [8, 16, 4], strides = [1, 1, 1]} : vector<10x18x4xf32> to vector<8x16x4xf32>
    %c13 = arith.constant 13 : index
    %c0_62 = arith.constant 0 : index
    %c0_63 = arith.constant 0 : index
    %110 = vector.load %arg3[%c13, %c0_62, %c0_63] : memref<16x4x4xf32, #tpu.memory_space<vmem>>, vector<1x4x4xf32>
    %111 = vector.shape_cast %110 : vector<1x4x4xf32> to vector<4x4xf32>
    %112 = vector.shape_cast %109 : vector<8x16x4xf32> to vector<128x4xf32>
    %cst_64 = arith.constant dense<0.000000e+00> : vector<128x4xf32>
    %113 = tpu.matmul %112, %111, %cst_64 {dimension_numbers = #tpu.dot_dimension_numbers<[1], [0], [0], [1], [0, 0, 1, 1], [], []>} : vector<128x4xf32>, vector<4x4xf32>, vector<128x4xf32> -> vector<128x4xf32>
    %114 = arith.addf %108, %113 : vector<128x4xf32>
    %115 = vector.extract_strided_slice %4 {offsets = [2, 1, 0], sizes = [8, 16, 4], strides = [1, 1, 1]} : vector<10x18x4xf32> to vector<8x16x4xf32>
    %c14 = arith.constant 14 : index
    %c0_65 = arith.constant 0 : index
    %c0_66 = arith.constant 0 : index
    %116 = vector.load %arg3[%c14, %c0_65, %c0_66] : memref<16x4x4xf32, #tpu.memory_space<vmem>>, vector<1x4x4xf32>
    %117 = vector.shape_cast %116 : vector<1x4x4xf32> to vector<4x4xf32>
    %118 = vector.shape_cast %115 : vector<8x16x4xf32> to vector<128x4xf32>
    %cst_67 = arith.constant dense<0.000000e+00> : vector<128x4xf32>
    %119 = tpu.matmul %118, %117, %cst_67 {dimension_numbers = #tpu.dot_dimension_numbers<[1], [0], [0], [1], [0, 0, 1, 1], [], []>} : vector<128x4xf32>, vector<4x4xf32>, vector<128x4xf32> -> vector<128x4xf32>
    %120 = arith.addf %114, %119 : vector<128x4xf32>
    %121 = vector.extract_strided_slice %4 {offsets = [2, 2, 0], sizes = [8, 16, 4], strides = [1, 1, 1]} : vector<10x18x4xf32> to vector<8x16x4xf32>
    %c15 = arith.constant 15 : index
    %c0_68 = arith.constant 0 : index
    %c0_69 = arith.constant 0 : index
    %122 = vector.load %arg3[%c15, %c0_68, %c0_69] : memref<16x4x4xf32, #tpu.memory_space<vmem>>, vector<1x4x4xf32>
    %123 = vector.shape_cast %122 : vector<1x4x4xf32> to vector<4x4xf32>
    %124 = vector.shape_cast %121 : vector<8x16x4xf32> to vector<128x4xf32>
    %cst_70 = arith.constant dense<0.000000e+00> : vector<128x4xf32>
    %125 = tpu.matmul %124, %123, %cst_70 {dimension_numbers = #tpu.dot_dimension_numbers<[1], [0], [0], [1], [0, 0, 1, 1], [], []>} : vector<128x4xf32>, vector<4x4xf32>, vector<128x4xf32> -> vector<128x4xf32>
    %126 = arith.addf %120, %125 : vector<128x4xf32>
    %127 = vector.shape_cast %126 : vector<128x4xf32> to vector<8x16x4xf32>
    %128 = vector.shape_cast %5 : vector<1x4xf32> to vector<1x1x4xf32>
    %129 = vector.broadcast %128 : vector<1x1x4xf32> to vector<8x16x4xf32>
    %130 = arith.addf %127, %129 : vector<8x16x4xf32>
    %c0_71 = arith.constant 0 : index
    %c3_72 = arith.constant 3 : index
    %c0_73 = arith.constant 0 : index
    %c0_74 = arith.constant 0 : index
    %c0_75 = arith.constant 0 : index
    %131 = vector.load %arg5[%c0_71, %c3_72, %c0_73, %c0_74, %c0_75] : memref<1x4x8x16x4xf32, #tpu.memory_space<vmem>>, vector<1x1x8x16x4xf32>
    %132 = vector.shape_cast %131 : vector<1x1x8x16x4xf32> to vector<8x16x4xf32>
    %133 = vector.shape_cast %130 : vector<8x16x4xf32> to vector<1x1x8x16x4xf32>
    tpu.vector_store %arg5[%c0_71, %c3_72, %c0_73, %c0_74, %c0_75], %133 {strides = array<i32>} : memref<1x4x8x16x4xf32, #tpu.memory_space<vmem>>, vector<1x1x8x16x4xf32>,
    return
  }
  func.func @transform_0(%arg0: i32, %arg1: i32) -> (i32, i32, i32, i32) {
    %c0_i32 = arith.constant 0 : i32
    %c0_i32_0 = arith.constant 0 : i32
    %c0_i32_1 = arith.constant 0 : i32
    %c0_i32_2 = arith.constant 0 : i32
    return %arg0, %c0_i32, %c0_i32_0, %c0_i32_1 : i32, i32, i32, i32
  }
  func.func @transform_1(%arg0: i32, %arg1: i32) -> (i32, i32, i32) {
    %c0_i32 = arith.constant 0 : i32
    %c0_i32_0 = arith.constant 0 : i32
    %c0_i32_1 = arith.constant 0 : i32
    %c0_i32_2 = arith.constant 0 : i32
    return %c0_i32, %c0_i32_0, %c0_i32_1 : i32, i32, i32
  }
  func.func @transform_2(%arg0: i32, %arg1: i32) -> (i32, i32) {
    %c0_i32 = arith.constant 0 : i32
    %c0_i32_0 = arith.constant 0 : i32
    %c0_i32_1 = arith.constant 0 : i32
    return %c0_i32, %c0_i32_0 : i32, i32
  }
  func.func @transform_3(%arg0: i32, %arg1: i32) -> (i32, i32, i32, i32, i32) {
    %c0_i32 = arith.constant 0 : i32
    %c0_i32_0 = arith.constant 0 : i32
    %c0_i32_1 = arith.constant 0 : i32
    %c0_i32_2 = arith.constant 0 : i32
    return %arg0, %c0_i32, %arg1, %c0_i32_0, %c0_i32_1 : i32, i32, i32, i32, i32
  }
}

</mosaic_0001>

<llo_original>
// kernel: tpu_custom_call.1
$region0: #{tpu_custom_call.1}
  #allocation0 [shape = 'u32[]', space=smem, size = 0x4, offset = 0x4, fixed_abs, tag = 'smem constant byte address 0x4 - core index']
  #allocation1 [shape = 'u32[144,128]{1,0:T(1,128)}', space=vmem, size = 0x12000, scoped, tag = 'internal scratch']
  %s0 = inlined_call_operand.vmem [shape: f32[2,18,18,4], index: 0, kind: input, shape index: {}]
  %s1 = inlined_call_operand.vmem [shape: f32[16,4,4], index: 1, kind: input, shape index: {}]
  %s2 = inlined_call_operand.vmem [shape: f32[1,4], index: 2, kind: input, shape index: {}]
  %s3 = inlined_call_operand.vmem [shape: f32[2,4,16,16,4], index: 3, kind: output, shape index: {}]
  %s4 = sld [smem:[#allocation0]]
  $region79: #{tpu_custom_call.1} parent=0
    _
  %s6 = ssub.s32 1, %s4
  %s7 = scalar_select 0, %s6, %s4
  $region1: #{tpu_custom_call.1} parent=0
    #allocation2 [shape = 'u8[524288]{0}', space=vmem, size = 0x80000, scoped, tag = 'output window, operand 0']
    loop: start=0, step=1, limit=6
    $region2: #{tpu_custom_call.1} parent=1 // loop_pre_header
      _
    $region3: #{tpu_custom_call.1} parent=1 // loop_header
      %s9 = sphi 0, %s13
      %p10 = scmp.ge.s32.totalorder %s9, 6
      %s16 = sphi 0, %s28
      %s17 = sphi 0, %s24
      %s18 = sphi 0, %s16
      %s19 = sphi 0, %s17
      %s20 = sphi 0, %s18
      %s21 = sphi 0, %s19
      %s31 = sphi 0, %s33
      %s34 = sphi 0, %s31
      %s35 = sphi 0, %s34
      %s51 = sphi 0, %s35
      %s55 = sphi 0, %s55
      %s57 = sphi 0, %s55
      %s58 = sphi 0, %s57
      %s72 = sphi 0, %s58
      %s76 = sphi 0, %s76
      %s78 = sphi 0, %s76
      %s79 = sphi 0, %s78
      %s93 = sphi 0, %s79
      %s101 = sphi 0, %s103
      %s104 = sphi 0, %s101
      %s105 = sphi 0, %s104
      %s121 = sphi 0, %s105
    $region4: #{tpu_custom_call.1} parent=1 // loop_header_branch
      %12 = sbr.rel (%p10) target = $region8
    $region5: #{tpu_custom_call.1} parent=1 // loop_body
      %s14 = ssub.s32 %s9, 1
      %s15 = ssub.s32 %s9, 2
      %s22 = sadd.s32 1, %s17
      %p23 = scmp.ge.s32.totalorder %s22, 2
      %s24 = scalar_select %p23, 0, %s22
      %s25 = sadd.s32 1, %s16
      %s26 = scalar_select %p23, %s25, %s16
      %p27 = scmp.ge.s32.totalorder %s26, 2
      %s28 = scalar_select %p27, 0, %s26
      %s29 = ssub.s32 %s16, %s28
      %p30 = scmp.eq.s32.totalorder %s29, 0
      %s32 = sadd.s32 %s31, 1
      %s33 = scalar_select %p30, %s31, %s32
      %p36 = pneg %p30
      %p37 = scmp.eq.s32.totalorder %s9, 3
      %p38 = por %p36, %p37
      %p39 = scmp.ne.s32.totalorder %s31, %s34
      %p40 = scmp.eq.s32.totalorder %s9, 0
      %p41 = por %p39, %p40
      %p42 = scmp.ne.s32.totalorder %s31, %s34
      %p43 = scmp.eq.s32.totalorder %s14, 3
      %p44 = por %p42, %p43
      %p45 = scmp.ne.s32.totalorder %s34, %s35
      %p46 = scmp.eq.s32.totalorder %s14, 0
      %p47 = por %p45, %p46
      %p48 = scmp.ne.s32.totalorder %s34, %s35
      %p49 = scmp.eq.s32.totalorder %s15, 3
      %p50 = por %p48, %p49
      %p52 = scmp.ne.s32.totalorder %s35, %s51
      %p53 = scmp.eq.s32.totalorder %s15, 0
      %p54 = por %p52, %p53
      %s56 = sadd.s32 %s55, 1
      %p59 = scmp.eq.s32.totalorder %s9, 3
      %p60 = scmp.ne.s32.totalorder %s55, %s57
      %p61 = scmp.eq.s32.totalorder %s9, 0
      %p62 = por %p60, %p61
      %p63 = scmp.ne.s32.totalorder %s55, %s57
      %p64 = scmp.eq.s32.totalorder %s14, 3
      %p65 = por %p63, %p64
      %p66 = scmp.ne.s32.totalorder %s57, %s58
      %p67 = scmp.eq.s32.totalorder %s14, 0
      %p68 = por %p66, %p67
      %p69 = scmp.ne.s32.totalorder %s57, %s58
      %p70 = scmp.eq.s32.totalorder %s15, 3
      %p71 = por %p69, %p70
      %p73 = scmp.ne.s32.totalorder %s58, %s72
      %p74 = scmp.eq.s32.totalorder %s15, 0
      %p75 = por %p73, %p74
      %s77 = sadd.s32 %s76, 1
      %p80 = scmp.eq.s32.totalorder %s9, 3
      %p81 = scmp.ne.s32.totalorder %s76, %s78
      %p82 = scmp.eq.s32.totalorder %s9, 0
      %p83 = por %p81, %p82
      %p84 = scmp.ne.s32.totalorder %s76, %s78
      %p85 = scmp.eq.s32.totalorder %s14, 3
      %p86 = por %p84, %p85
      %p87 = scmp.ne.s32.totalorder %s78, %s79
      %p88 = scmp.eq.s32.totalorder %s14, 0
      %p89 = por %p87, %p88
      %p90 = scmp.ne.s32.totalorder %s78, %s79
      %p91 = scmp.eq.s32.totalorder %s15, 3
      %p92 = por %p90, %p91
      %p94 = scmp.ne.s32.totalorder %s79, %s93
      %p95 = scmp.eq.s32.totalorder %s15, 0
      %p96 = por %p94, %p95
      %s97 = ssub.s32 %s16, %s28
      %s98 = ssub.s32 %s17, %s24
      %s99 = sor.u32 %s97, %s98
      %p100 = scmp.eq.s32.totalorder %s99, 0
      %s102 = sadd.s32 %s101, 1
      %s103 = scalar_select %p100, %s101, %s102
      %p106 = pneg %p100
      %p107 = scmp.eq.s32.totalorder %s9, 3
      %p108 = por %p106, %p107
      %p109 = scmp.ne.s32.totalorder %s101, %s104
      %p110 = scmp.eq.s32.totalorder %s9, 0
      %p111 = por %p109, %p110
      %p112 = scmp.ne.s32.totalorder %s101, %s104
      %p113 = scmp.eq.s32.totalorder %s14, 3
      %p114 = por %p112, %p113
      %p115 = scmp.ne.s32.totalorder %s104, %s105
      %p116 = scmp.eq.s32.totalorder %s14, 0
      %p117 = por %p115, %p116
      %p118 = scmp.ne.s32.totalorder %s104, %s105
      %p119 = scmp.eq.s32.totalorder %s15, 3
      %p120 = por %p118, %p119
      %p122 = scmp.ne.s32.totalorder %s105, %s121
      %p123 = scmp.eq.s32.totalorder %s15, 0
      %p124 = por %p122, %p123
      %p125 = scmp.le.s32.totalorder 1, %s9
      %p126 = scmp.lt.s32.totalorder %s9, 5
      %p127 = pnand %p125, %p126
      %p128 = pneg %p127
      // Predicated region
      $region9: #{tpu_custom_call.1} parent=5 // pred_check
        _
      $region10: #{tpu_custom_call.1} parent=5 // pred_check_branch
        %130 = sbr.rel (%p127) target = $region12
      $region11: #{tpu_custom_call.1} parent=5 // pred_region
        %s131 = ssub.s32 %s9, 1
        // Predicated region
        $region13: #{tpu_custom_call.1} parent=11 // pred_check
          %p132 = pneg %p68
        $region14: #{tpu_custom_call.1} parent=11 // pred_check_branch
          %134 = sbr.rel (%p132) target = $region16
        $region15: #{tpu_custom_call.1} parent=11 // pred_region
          _
        $region16: #{tpu_custom_call.1} parent=11 // pred_fallthru
          _
        // Predicated region
        $region17: #{tpu_custom_call.1} parent=11 // pred_check
          %p135 = pneg %p89
        $region18: #{tpu_custom_call.1} parent=11 // pred_check_branch
          %137 = sbr.rel (%p135) target = $region20
        $region19: #{tpu_custom_call.1} parent=11 // pred_region
          _
        $region20: #{tpu_custom_call.1} parent=11 // pred_fallthru
          _
      $region12: #{tpu_custom_call.1} parent=5 // pred_fallthru
        _
      %p138 = scmp.lt.s32.totalorder %s9, 4
      // Predicated region
      $region21: #{tpu_custom_call.1} parent=5 // pred_check
        %p139 = pneg %p138
      $region22: #{tpu_custom_call.1} parent=5 // pred_check_branch
        %141 = sbr.rel (%p139) target = $region24
      $region23: #{tpu_custom_call.1} parent=5 // pred_region
        // Predicated region
        $region25: #{tpu_custom_call.1} parent=23 // pred_check
          %p142 = pneg %p41
        $region26: #{tpu_custom_call.1} parent=23 // pred_check_branch
          %144 = sbr.rel (%p142) target = $region28
        $region27: #{tpu_custom_call.1} parent=23 // pred_region
          %p145 = scmp.lt.s32.totalorder %s16, 1
          %s146 = scalar_select %p145, %s16, 1
          %s147 = smul.addr %s146, 54
          %s148 = smul.addr %s147, 8
          %s149 = scalar_lea.vmem %s0, %s148
        $region28: #{tpu_custom_call.1} parent=23 // pred_fallthru
          _
      $region24: #{tpu_custom_call.1} parent=5 // pred_fallthru
        _
      %p150 = scmp.le.s32.totalorder 1, %s9
      %p151 = scmp.lt.s32.totalorder %s9, 5
      %p152 = pnand %p150, %p151
      %p153 = pneg %p152
      // Predicated region
      $region29: #{tpu_custom_call.1} parent=5 // pred_check
        _
      $region30: #{tpu_custom_call.1} parent=5 // pred_check_branch
        %155 = sbr.rel (%p152) target = $region32
      $region31: #{tpu_custom_call.1} parent=5 // pred_region
        %s156 = ssub.s32 %s9, 1
        %p157 = scmp.lt.s32.totalorder %s18, 1
        %s158 = scalar_select %p157, %s18, 1
        %s159 = smul.addr %s158, 54
        %s160 = smul.addr %s159, 8
        %s161 = scalar_lea.vmem %s0, %s160
        %p162 = pneg %p47
        %p163 = pneg %p44
        %p164 = pneg %p68
        %p165 = pneg %p65
        %p166 = pneg %p89
        %p167 = pneg %p86
        %p168 = pneg %p117
        %p169 = pneg %p114
        %s170 = sand.u32 %s104, 1
        %s171 = sand.u32 %s104, 1
        %s172 = smul.addr %s171, 512
        %s173 = scalar_lea.vmem [#allocation2], %s172
        %p174 = scmp.lt.s32.totalorder %s18, 1
        %s175 = scalar_select %p174, %s18, 1
        %s176 = smul.addr %s175, 54
        %s177 = smul.addr %s176, 8
        %s178 = scalar_lea.vmem %s0, %s177
        %s179 = smul.u32 8, %s19
        %s180 = smul.u32 %s19, 8
        %s181 = smul.u32 %s180, 24
        %s182 = scalar_lea.vmem %s178, %s181
        %v183 = vld [vmem:[%s182] sm:$0xff]
        %v184 = vld [vmem:[%s182 + $0x8] sm:$0xff]
        %v185 = vld [vmem:[%s182 + $0x10] sm:$0x3]
        %v186 = vld [vmem:[%s182 + $0x18] sm:$0xff]
        %v187 = vld [vmem:[%s182 + $0x20] sm:$0xff]
        %v188 = vld [vmem:[%s182 + $0x28] sm:$0x3]
        %v189 = vld [vmem:[%s182 + $0x30] sm:$0xff]
        %v190 = vld [vmem:[%s182 + $0x38] sm:$0xff]
        %v191 = vld [vmem:[%s182 + $0x40] sm:$0x3]
        %v192 = vld [vmem:[%s182 + $0x48] sm:$0xff]
        %v193 = vld [vmem:[%s182 + $0x50] sm:$0xff]
        %v194 = vld [vmem:[%s182 + $0x58] sm:$0x3]
        %v195 = vld [vmem:[%s182 + $0x60] sm:$0xff]
        %v196 = vld [vmem:[%s182 + $0x68] sm:$0xff]
        %v197 = vld [vmem:[%s182 + $0x70] sm:$0x3]
        %v198 = vld [vmem:[%s182 + $0x78] sm:$0xff]
        %v199 = vld [vmem:[%s182 + $0x80] sm:$0xff]
        %v200 = vld [vmem:[%s182 + $0x88] sm:$0x3]
        %v201 = vld [vmem:[%s182 + $0x90] sm:$0xff]
        %v202 = vld [vmem:[%s182 + $0x98] sm:$0xff]
        %v203 = vld [vmem:[%s182 + $0xa0] sm:$0x3]
        %v204 = vld [vmem:[%s182 + $0xa8] sm:$0xff]
        %v205 = vld [vmem:[%s182 + $0xb0] sm:$0xff]
        %v206 = vld [vmem:[%s182 + $0xb8] sm:$0x3]
        %v207 = vld [vmem:[%s182 + $0xc0] sm:$0xff]
        %v208 = vld [vmem:[%s182 + $0xc8] sm:$0xff]
        %v209 = vld [vmem:[%s182 + $0xd0] sm:$0x3]
        %v210 = vld [vmem:[%s182 + $0xd8] sm:$0xff]
        %v211 = vld [vmem:[%s182 + $0xe0] sm:$0xff]
        %v212 = vld [vmem:[%s182 + $0xe8] sm:$0x3]
        %v213 = vld [vmem:[%s2] sm:$0x1]
        %v214 = vld [vmem:[%s1] sm:$0xf]
        %s215 = scalar_lea.vmem %s1, 4
        %v216 = vld [vmem:[%s215] sm:$0xf]
        %vm241 = vcmask 1046528
        %v242 = vrot.slane %v183, 1
        %v243 = vrot.slane %v184, 1
        %v244 = vsel %vm241, %v242, %v243
        %v245 = vrot.slane %v185, 1
        %v246 = vsel %vm241, %v243, %v245
        %v247 = vrot.slane %v186, 1
        %v248 = vrot.slane %v187, 1
        %v249 = vsel %vm241, %v247, %v248
        %v250 = vrot.slane %v188, 1
        %v251 = vsel %vm241, %v248, %v250
        %v252 = vrot.slane %v189, 1
        %v253 = vrot.slane %v190, 1
        %v254 = vsel %vm241, %v252, %v253
        %v255 = vrot.slane %v191, 1
        %v256 = vsel %vm241, %v253, %v255
        %v257 = vrot.slane %v192, 1
        %v258 = vrot.slane %v193, 1
        %v259 = vsel %vm241, %v257, %v258
        %v260 = vrot.slane %v194, 1
        %v261 = vsel %vm241, %v258, %v260
        %v262 = vrot.slane %v195, 1
        %v263 = vrot.slane %v196, 1
        %v264 = vsel %vm241, %v262, %v263
        %v265 = vrot.slane %v197, 1
        %v266 = vsel %vm241, %v263, %v265
        %v267 = vrot.slane %v198, 1
        %v268 = vrot.slane %v199, 1
        %v269 = vsel %vm241, %v267, %v268
        %v270 = vrot.slane %v200, 1
        %v271 = vsel %vm241, %v268, %v270
        %v272 = vrot.slane %v201, 1
        %v273 = vrot.slane %v202, 1
        %v274 = vsel %vm241, %v272, %v273
        %v275 = vrot.slane %v203, 1
        %v276 = vsel %vm241, %v273, %v275
        %v277 = vrot.slane %v204, 1
        %v278 = vrot.slane %v205, 1
        %v279 = vsel %vm241, %v277, %v278
        %v280 = vrot.slane %v206, 1
        %v281 = vsel %vm241, %v278, %v280
        %vm282 = vcmask 31744
        %v283 = vsel %vm282, %v244, 0
        %v285 = vsel %vm282, %v246, 0
        %v287 = vsel %vm282, %v249, 0
        %v289 = vsel %vm282, %v251, 0
        %v291 = vsel %vm282, %v254, 0
        %v293 = vsel %vm282, %v256, 0
        %v295 = vsel %vm282, %v259, 0
        %v297 = vsel %vm282, %v261, 0
        %v299 = vsel %vm282, %v264, 0
        %v301 = vsel %vm282, %v266, 0
        %v303 = vsel %vm282, %v269, 0
        %v305 = vsel %vm282, %v271, 0
        %v307 = vsel %vm282, %v274, 0
        %v309 = vsel %vm282, %v276, 0
        %v311 = vsel %vm282, %v279, 0
        %v313 = vsel %vm282, %v281, 0
        %vm315 = vcmask 1043456
        %v317 = vsel %vm315, %v216, 0
        %319 = vmatprep.subr.mxu0 0.0
        %320 = vmatpush1.msra.mxu0 0.0
        %321 = vmatprep.subr.mxu0 0.0
        %322 = vmatpush1.msra.mxu0 0.0
        %323 = vmatprep.subr.mxu0 0.0
        %324 = vmatpush1.msra.mxu0 0.0
        %325 = vmatprep.subr.mxu0 0.0
        %326 = vmatpush1.msra.mxu0 0.0
        %327 = vmatprep.subr.mxu0 0.0
        %328 = vmatpush1.msra.mxu0 0.0
        %329 = vmatprep.subr.mxu0 0.0
        %330 = vmatpush1.msra.mxu0 0.0
        %331 = vmatprep.subr.mxu0 0.0
        %332 = vmatpush1.msra.mxu0 0.0
        %333 = vmatprep.subr.mxu0 0.0
        %334 = vmatpush1.msra.mxu0 0.0
        %335 = vmatprep.subr.mxu0 0.0
        %336 = vmatpush1.msra.mxu0 0.0
        %337 = vmatprep.subr.mxu0 0.0
        %338 = vmatpush1.msra.mxu0 0.0
        %339 = vmatprep.subr.mxu0 0.0
        %340 = vmatpush1.msra.mxu0 0.0
        %341 = vmatprep.subr.mxu0 0.0
        %342 = vmatpush1.msra.mxu0 0.0
        %343 = vmatprep.subr.mxu0 0.0
        %344 = vmatpush1.msra.mxu0 0.0
        %345 = vmatprep.subr.mxu0 0.0
        %346 = vmatpush1.msra.mxu0 0.0
        %347 = vmatprep.subr.mxu0 0.0
        %348 = vmatpush1.msra.mxu0 0.0
        %349 = vmatprep.subr.mxu0 0.0
        %350 = vmatpush1.msra.mxu0 %v317
        %351 = vmatprep.subr.mxu0 0.0
        %352 = vmatpush2.msra.mxu0 0.0
        %353 = vmatprep.subr.mxu0 0.0
        %354 = vmatpush2.msra.mxu0 0.0
        %355 = vmatprep.subr.mxu0 0.0
        %356 = vmatpush2.msra.mxu0 0.0
        %357 = vmatprep.subr.mxu0 0.0
        %358 = vmatpush2.msra.mxu0 0.0
        %359 = vmatprep.subr.mxu0 0.0
        %360 = vmatpush2.msra.mxu0 0.0
        %361 = vmatprep.subr.mxu0 0.0
        %362 = vmatpush2.msra.mxu0 0.0
        %363 = vmatprep.subr.mxu0 0.0
        %364 = vmatpush2.msra.mxu0 0.0
        %365 = vmatprep.subr.mxu0 0.0
        %366 = vmatpush2.msra.mxu0 0.0
        %367 = vmatprep.subr.mxu0 0.0
        %368 = vmatpush2.msra.mxu0 0.0
        %369 = vmatprep.subr.mxu0 0.0
        %370 = vmatpush2.msra.mxu0 0.0
        %371 = vmatprep.subr.mxu0 0.0
        %372 = vmatpush2.msra.mxu0 0.0
        %373 = vmatprep.subr.mxu0 0.0
        %374 = vmatpush2.msra.mxu0 0.0
        %375 = vmatprep.subr.mxu0 0.0
        %376 = vmatpush2.msra.mxu0 0.0
        %377 = vmatprep.subr.mxu0 0.0
        %378 = vmatpush2.msra.mxu0 0.0
        %379 = vmatprep.subr.mxu0 0.0
        %380 = vmatpush2.msra.mxu0 0.0
        %381 = vmatprep.subr.mxu0 0.0
        %382 = vmatpush2.msra.mxu0 0.0
        %383 = vmatprep.mubr.f32.mxu0 0.0
        %384 = vmatmul.mubr.f32.gmra.mxu0 %v283
        %v385 = vpop.f32.mrf.mxu0
        %v386 = vadd.f32 0.0, %v385
        %v387 = vpop.f32.mrf.mxu0
        %388 = vmatprep.mubr.f32.mxu0 0.0
        %389 = vmatmul.mubr.f32.gmra.mxu0 %v285
        %v390 = vpop.f32.mrf.mxu0
        %v391 = vadd.f32 0.0, %v390
        %v392 = vpop.f32.mrf.mxu0
        %393 = vmatprep.mubr.f32.mxu0 0.0
        %394 = vmatmul.mubr.f32.gmra.mxu0 %v287
        %v395 = vpop.f32.mrf.mxu0
        %v396 = vadd.f32 0.0, %v395
        %v397 = vpop.f32.mrf.mxu0
        %398 = vmatprep.mubr.f32.mxu0 0.0
        %399 = vmatmul.mubr.f32.gmra.mxu0 %v289
        %v400 = vpop.f32.mrf.mxu0
        %v401 = vadd.f32 0.0, %v400
        %v402 = vpop.f32.mrf.mxu0
        %403 = vmatprep.mubr.f32.mxu0 0.0
        %404 = vmatmul.mubr.f32.gmra.mxu0 %v291
        %v405 = vpop.f32.mrf.mxu0
        %v406 = vadd.f32 0.0, %v405
        %v407 = vpop.f32.mrf.mxu0
        %408 = vmatprep.mubr.f32.mxu0 0.0
        %409 = vmatmul.mubr.f32.gmra.mxu0 %v293
        %v410 = vpop.f32.mrf.mxu0
        %v411 = vadd.f32 0.0, %v410
        %v412 = vpop.f32.mrf.mxu0
        %413 = vmatprep.mubr.f32.mxu0 0.0
        %414 = vmatmul.mubr.f32.gmra.mxu0 %v295
        %v415 = vpop.f32.mrf.mxu0
        %v416 = vadd.f32 0.0, %v415
        %v417 = vpop.f32.mrf.mxu0
        %418 = vmatprep.mubr.f32.mxu0 0.0
        %419 = vmatmul.mubr.f32.gmra.mxu0 %v297
        %v420 = vpop.f32.mrf.mxu0
        %v421 = vadd.f32 0.0, %v420
        %v422 = vpop.f32.mrf.mxu0
        %423 = vmatprep.mubr.f32.mxu0 0.0
        %424 = vmatmul.mubr.f32.gmra.mxu0 %v299
        %v425 = vpop.f32.mrf.mxu0
        %v426 = vadd.f32 0.0, %v425
        %v427 = vpop.f32.mrf.mxu0
        %428 = vmatprep.mubr.f32.mxu0 0.0
        %429 = vmatmul.mubr.f32.gmra.mxu0 %v301
        %v430 = vpop.f32.mrf.mxu0
        %v431 = vadd.f32 0.0, %v430
        %v432 = vpop.f32.mrf.mxu0
        %433 = vmatprep.mubr.f32.mxu0 0.0
        %434 = vmatmul.mubr.f32.gmra.mxu0 %v303
        %v435 = vpop.f32.mrf.mxu0
        %v436 = vadd.f32 0.0, %v435
        %v437 = vpop.f32.mrf.mxu0
        %438 = vmatprep.mubr.f32.mxu0 0.0
        %439 = vmatmul.mubr.f32.gmra.mxu0 %v305
        %v440 = vpop.f32.mrf.mxu0
        %v441 = vadd.f32 0.0, %v440
        %v442 = vpop.f32.mrf.mxu0
        %443 = vmatprep.mubr.f32.mxu0 0.0
        %444 = vmatmul.mubr.f32.gmra.mxu0 %v307
        %v445 = vpop.f32.mrf.mxu0
        %v446 = vadd.f32 0.0, %v445
        %v447 = vpop.f32.mrf.mxu0
        %448 = vmatprep.mubr.f32.mxu0 0.0
        %449 = vmatmul.mubr.f32.gmra.mxu0 %v309
        %v450 = vpop.f32.mrf.mxu0
        %v451 = vadd.f32 0.0, %v450
        %v452 = vpop.f32.mrf.mxu0
        %453 = vmatprep.mubr.f32.mxu0 0.0
        %454 = vmatmul.mubr.f32.gmra.mxu0 %v311
        %v455 = vpop.f32.mrf.mxu0
        %v456 = vadd.f32 0.0, %v455
        %v457 = vpop.f32.mrf.mxu0
        %458 = vmatprep.mubr.f32.mxu0 0.0
        %459 = vmatmul.mubr.f32.gmra.mxu0 %v313
        %v460 = vpop.f32.mrf.mxu0
        %v461 = vadd.f32 0.0, %v460
        %v462 = vpop.f32.mrf.mxu0
        %463 = vdwg.mxu0
        %v464 = vsel %vm282, %v183, 0
        %v466 = vsel %vm282, %v184, 0
        %v468 = vsel %vm282, %v186, 0
        %v470 = vsel %vm282, %v187, 0
        %v472 = vsel %vm282, %v189, 0
        %v474 = vsel %vm282, %v190, 0
        %v476 = vsel %vm282, %v192, 0
        %v478 = vsel %vm282, %v193, 0
        %v480 = vsel %vm282, %v195, 0
        %v482 = vsel %vm282, %v196, 0
        %v484 = vsel %vm282, %v198, 0
        %v486 = vsel %vm282, %v199, 0
        %v488 = vsel %vm282, %v201, 0
        %v490 = vsel %vm282, %v202, 0
        %v492 = vsel %vm282, %v204, 0
        %v494 = vsel %vm282, %v205, 0
        %v497 = vsel %vm315, %v214, 0
        %499 = vmatprep.subr.mxu0 0.0
        %500 = vmatpush1.msra.mxu0 0.0
        %501 = vmatprep.subr.mxu0 0.0
        %502 = vmatpush1.msra.mxu0 0.0
        %503 = vmatprep.subr.mxu0 0.0
        %504 = vmatpush1.msra.mxu0 0.0
        %505 = vmatprep.subr.mxu0 0.0
        %506 = vmatpush1.msra.mxu0 0.0
        %507 = vmatprep.subr.mxu0 0.0
        %508 = vmatpush1.msra.mxu0 0.0
        %509 = vmatprep.subr.mxu0 0.0
        %510 = vmatpush1.msra.mxu0 0.0
        %511 = vmatprep.subr.mxu0 0.0
        %512 = vmatpush1.msra.mxu0 0.0
        %513 = vmatprep.subr.mxu0 0.0
        %514 = vmatpush1.msra.mxu0 0.0
        %515 = vmatprep.subr.mxu0 0.0
        %516 = vmatpush1.msra.mxu0 0.0
        %517 = vmatprep.subr.mxu0 0.0
        %518 = vmatpush1.msra.mxu0 0.0
        %519 = vmatprep.subr.mxu0 0.0
        %520 = vmatpush1.msra.mxu0 0.0
        %521 = vmatprep.subr.mxu0 0.0
        %522 = vmatpush1.msra.mxu0 0.0
        %523 = vmatprep.subr.mxu0 0.0
        %524 = vmatpush1.msra.mxu0 0.0
        %525 = vmatprep.subr.mxu0 0.0
        %526 = vmatpush1.msra.mxu0 0.0
        %527 = vmatprep.subr.mxu0 0.0
        %528 = vmatpush1.msra.mxu0 0.0
        %529 = vmatprep.subr.mxu0 0.0
        %530 = vmatpush1.msra.mxu0 %v497
        %531 = vmatprep.subr.mxu0 0.0
        %532 = vmatpush2.msra.mxu0 0.0
        %533 = vmatprep.subr.mxu0 0.0
        %534 = vmatpush2.msra.mxu0 0.0
        %535 = vmatprep.subr.mxu0 0.0
        %536 = vmatpush2.msra.mxu0 0.0
        %537 = vmatprep.subr.mxu0 0.0
        %538 = vmatpush2.msra.mxu0 0.0
        %539 = vmatprep.subr.mxu0 0.0
        %540 = vmatpush2.msra.mxu0 0.0
        %541 = vmatprep.subr.mxu0 0.0
        %542 = vmatpush2.msra.mxu0 0.0
        %543 = vmatprep.subr.mxu0 0.0
        %544 = vmatpush2.msra.mxu0 0.0
        %545 = vmatprep.subr.mxu0 0.0
        %546 = vmatpush2.msra.mxu0 0.0
        %547 = vmatprep.subr.mxu0 0.0
        %548 = vmatpush2.msra.mxu0 0.0
        %549 = vmatprep.subr.mxu0 0.0
        %550 = vmatpush2.msra.mxu0 0.0
        %551 = vmatprep.subr.mxu0 0.0
        %552 = vmatpush2.msra.mxu0 0.0
        %553 = vmatprep.subr.mxu0 0.0
        %554 = vmatpush2.msra.mxu0 0.0
        %555 = vmatprep.subr.mxu0 0.0
        %556 = vmatpush2.msra.mxu0 0.0
        %557 = vmatprep.subr.mxu0 0.0
        %558 = vmatpush2.msra.mxu0 0.0
        %559 = vmatprep.subr.mxu0 0.0
        %560 = vmatpush2.msra.mxu0 0.0
        %561 = vmatprep.subr.mxu0 0.0
        %562 = vmatpush2.msra.mxu0 0.0
        %563 = vmatprep.mubr.f32.mxu0 0.0
        %564 = vmatmul.mubr.f32.gmra.mxu0 %v464
        %v565 = vpop.f32.mrf.mxu0
        %v566 = vadd.f32 %v386, %v565
        %v567 = vpop.f32.mrf.mxu0
        %568 = vmatprep.mubr.f32.mxu0 0.0
        %569 = vmatmul.mubr.f32.gmra.mxu0 %v466
        %v570 = vpop.f32.mrf.mxu0
        %v571 = vadd.f32 %v391, %v570
        %v572 = vpop.f32.mrf.mxu0
        %573 = vmatprep.mubr.f32.mxu0 0.0
        %574 = vmatmul.mubr.f32.gmra.mxu0 %v468
        %v575 = vpop.f32.mrf.mxu0
        %v576 = vadd.f32 %v396, %v575
        %v577 = vpop.f32.mrf.mxu0
        %578 = vmatprep.mubr.f32.mxu0 0.0
        %579 = vmatmul.mubr.f32.gmra.mxu0 %v470
        %v580 = vpop.f32.mrf.mxu0
        %v581 = vadd.f32 %v401, %v580
        %v582 = vpop.f32.mrf.mxu0
        %583 = vmatprep.mubr.f32.mxu0 0.0
        %584 = vmatmul.mubr.f32.gmra.mxu0 %v472
        %v585 = vpop.f32.mrf.mxu0
        %v586 = vadd.f32 %v406, %v585
        %v587 = vpop.f32.mrf.mxu0
        %588 = vmatprep.mubr.f32.mxu0 0.0
        %589 = vmatmul.mubr.f32.gmra.mxu0 %v474
        %v590 = vpop.f32.mrf.mxu0
        %v591 = vadd.f32 %v411, %v590
        %v592 = vpop.f32.mrf.mxu0
        %593 = vmatprep.mubr.f32.mxu0 0.0
        %594 = vmatmul.mubr.f32.gmra.mxu0 %v476
        %v595 = vpop.f32.mrf.mxu0
        %v596 = vadd.f32 %v416, %v595
        %v597 = vpop.f32.mrf.mxu0
        %598 = vmatprep.mubr.f32.mxu0 0.0
        %599 = vmatmul.mubr.f32.gmra.mxu0 %v478
        %v600 = vpop.f32.mrf.mxu0
        %v601 = vadd.f32 %v421, %v600
        %v602 = vpop.f32.mrf.mxu0
        %603 = vmatprep.mubr.f32.mxu0 0.0
        %604 = vmatmul.mubr.f32.gmra.mxu0 %v480
        %v605 = vpop.f32.mrf.mxu0
        %v606 = vadd.f32 %v426, %v605
        %v607 = vpop.f32.mrf.mxu0
        %608 = vmatprep.mubr.f32.mxu0 0.0
        %609 = vmatmul.mubr.f32.gmra.mxu0 %v482
        %v610 = vpop.f32.mrf.mxu0
        %v611 = vadd.f32 %v431, %v610
        %v612 = vpop.f32.mrf.mxu0
        %613 = vmatprep.mubr.f32.mxu0 0.0
        %614 = vmatmul.mubr.f32.gmra.mxu0 %v484
        %v615 = vpop.f32.mrf.mxu0
        %v616 = vadd.f32 %v436, %v615
        %v617 = vpop.f32.mrf.mxu0
        %618 = vmatprep.mubr.f32.mxu0 0.0
        %619 = vmatmul.mubr.f32.gmra.mxu0 %v486
        %v620 = vpop.f32.mrf.mxu0
        %v621 = vadd.f32 %v441, %v620
        %v622 = vpop.f32.mrf.mxu0
        %623 = vmatprep.mubr.f32.mxu0 0.0
        %624 = vmatmul.mubr.f32.gmra.mxu0 %v488
        %v625 = vpop.f32.mrf.mxu0
        %v626 = vadd.f32 %v446, %v625
        %v627 = vpop.f32.mrf.mxu0
        %628 = vmatprep.mubr.f32.mxu0 0.0
        %629 = vmatmul.mubr.f32.gmra.mxu0 %v490
        %v630 = vpop.f32.mrf.mxu0
        %v631 = vadd.f32 %v451, %v630
        %v632 = vpop.f32.mrf.mxu0
        %633 = vmatprep.mubr.f32.mxu0 0.0
        %634 = vmatmul.mubr.f32.gmra.mxu0 %v492
        %v635 = vpop.f32.mrf.mxu0
        %v636 = vadd.f32 %v456, %v635
        %v637 = vpop.f32.mrf.mxu0
        %638 = vmatprep.mubr.f32.mxu0 0.0
        %639 = vmatmul.mubr.f32.gmra.mxu0 %v494
        %v640 = vpop.f32.mrf.mxu0
        %v641 = vadd.f32 %v461, %v640
        %v642 = vpop.f32.mrf.mxu0
        %643 = vdwg.mxu0
        %s644 = scalar_lea.vmem %s1, 8
        %v645 = vld [vmem:[%s644] sm:$0xf]
        %v647 = vsel %vm282, %v207, 0
        %v650 = vsel %vm282, %v208, 0
        %v653 = vsel %vm315, %v645, 0
        %655 = vmatprep.subr.mxu0 0.0
        %656 = vmatpush1.msra.mxu0 0.0
        %657 = vmatprep.subr.mxu0 0.0
        %658 = vmatpush1.msra.mxu0 0.0
        %659 = vmatprep.subr.mxu0 0.0
        %660 = vmatpush1.msra.mxu0 0.0
        %661 = vmatprep.subr.mxu0 0.0
        %662 = vmatpush1.msra.mxu0 0.0
        %663 = vmatprep.subr.mxu0 0.0
        %664 = vmatpush1.msra.mxu0 0.0
        %665 = vmatprep.subr.mxu0 0.0
        %666 = vmatpush1.msra.mxu0 0.0
        %667 = vmatprep.subr.mxu0 0.0
        %668 = vmatpush1.msra.mxu0 0.0
        %669 = vmatprep.subr.mxu0 0.0
        %670 = vmatpush1.msra.mxu0 0.0
        %671 = vmatprep.subr.mxu0 0.0
        %672 = vmatpush1.msra.mxu0 0.0
        %673 = vmatprep.subr.mxu0 0.0
        %674 = vmatpush1.msra.mxu0 0.0
        %675 = vmatprep.subr.mxu0 0.0
        %676 = vmatpush1.msra.mxu0 0.0
        %677 = vmatprep.subr.mxu0 0.0
        %678 = vmatpush1.msra.mxu0 0.0
        %679 = vmatprep.subr.mxu0 0.0
        %680 = vmatpush1.msra.mxu0 0.0
        %681 = vmatprep.subr.mxu0 0.0
        %682 = vmatpush1.msra.mxu0 0.0
        %683 = vmatprep.subr.mxu0 0.0
        %684 = vmatpush1.msra.mxu0 0.0
        %685 = vmatprep.subr.mxu0 0.0
        %686 = vmatpush1.msra.mxu0 %v653
        %687 = vmatprep.subr.mxu0 0.0
        %688 = vmatpush2.msra.mxu0 0.0
        %689 = vmatprep.subr.mxu0 0.0
        %690 = vmatpush2.msra.mxu0 0.0
        %691 = vmatprep.subr.mxu0 0.0
        %692 = vmatpush2.msra.mxu0 0.0
        %693 = vmatprep.subr.mxu0 0.0
        %694 = vmatpush2.msra.mxu0 0.0
        %695 = vmatprep.subr.mxu0 0.0
        %696 = vmatpush2.msra.mxu0 0.0
        %697 = vmatprep.subr.mxu0 0.0
        %698 = vmatpush2.msra.mxu0 0.0
        %699 = vmatprep.subr.mxu0 0.0
        %700 = vmatpush2.msra.mxu0 0.0
        %701 = vmatprep.subr.mxu0 0.0
        %702 = vmatpush2.msra.mxu0 0.0
        %703 = vmatprep.subr.mxu0 0.0
        %704 = vmatpush2.msra.mxu0 0.0
        %705 = vmatprep.subr.mxu0 0.0
        %706 = vmatpush2.msra.mxu0 0.0
        %707 = vmatprep.subr.mxu0 0.0
        %708 = vmatpush2.msra.mxu0 0.0
        %709 = vmatprep.subr.mxu0 0.0
        %710 = vmatpush2.msra.mxu0 0.0
        %711 = vmatprep.subr.mxu0 0.0
        %712 = vmatpush2.msra.mxu0 0.0
        %713 = vmatprep.subr.mxu0 0.0
        %714 = vmatpush2.msra.mxu0 0.0
        %715 = vmatprep.subr.mxu0 0.0
        %716 = vmatpush2.msra.mxu0 0.0
        %717 = vmatprep.subr.mxu0 0.0
        %718 = vmatpush2.msra.mxu0 0.0
        %719 = vmatprep.mubr.f32.mxu0 0.0
        %720 = vmatmul.mubr.f32.gmra.mxu0 %v468
        %v721 = vpop.f32.mrf.mxu0
        %v722 = vadd.f32 0.0, %v721
        %v723 = vpop.f32.mrf.mxu0
        %724 = vmatprep.mubr.f32.mxu0 0.0
        %725 = vmatmul.mubr.f32.gmra.mxu0 %v470
        %v726 = vpop.f32.mrf.mxu0
        %v727 = vadd.f32 0.0, %v726
        %v728 = vpop.f32.mrf.mxu0
        %729 = vmatprep.mubr.f32.mxu0 0.0
        %730 = vmatmul.mubr.f32.gmra.mxu0 %v472
        %v731 = vpop.f32.mrf.mxu0
        %v732 = vadd.f32 0.0, %v731
        %v733 = vpop.f32.mrf.mxu0
        %734 = vmatprep.mubr.f32.mxu0 0.0
        %735 = vmatmul.mubr.f32.gmra.mxu0 %v474
        %v736 = vpop.f32.mrf.mxu0
        %v737 = vadd.f32 0.0, %v736
        %v738 = vpop.f32.mrf.mxu0
        %739 = vmatprep.mubr.f32.mxu0 0.0
        %740 = vmatmul.mubr.f32.gmra.mxu0 %v476
        %v741 = vpop.f32.mrf.mxu0
        %v742 = vadd.f32 0.0, %v741
        %v743 = vpop.f32.mrf.mxu0
        %744 = vmatprep.mubr.f32.mxu0 0.0
        %745 = vmatmul.mubr.f32.gmra.mxu0 %v478
        %v746 = vpop.f32.mrf.mxu0
        %v747 = vadd.f32 0.0, %v746
        %v748 = vpop.f32.mrf.mxu0
        %749 = vmatprep.mubr.f32.mxu0 0.0
        %750 = vmatmul.mubr.f32.gmra.mxu0 %v480
        %v751 = vpop.f32.mrf.mxu0
        %v752 = vadd.f32 0.0, %v751
        %v753 = vpop.f32.mrf.mxu0
        %754 = vmatprep.mubr.f32.mxu0 0.0
        %755 = vmatmul.mubr.f32.gmra.mxu0 %v482
        %v756 = vpop.f32.mrf.mxu0
        %v757 = vadd.f32 0.0, %v756
        %v758 = vpop.f32.mrf.mxu0
        %759 = vmatprep.mubr.f32.mxu0 0.0
        %760 = vmatmul.mubr.f32.gmra.mxu0 %v484
        %v761 = vpop.f32.mrf.mxu0
        %v762 = vadd.f32 0.0, %v761
        %v763 = vpop.f32.mrf.mxu0
        %764 = vmatprep.mubr.f32.mxu0 0.0
        %765 = vmatmul.mubr.f32.gmra.mxu0 %v486
        %v766 = vpop.f32.mrf.mxu0
        %v767 = vadd.f32 0.0, %v766
        %v768 = vpop.f32.mrf.mxu0
        %769 = vmatprep.mubr.f32.mxu0 0.0
        %770 = vmatmul.mubr.f32.gmra.mxu0 %v488
        %v771 = vpop.f32.mrf.mxu0
        %v772 = vadd.f32 0.0, %v771
        %v773 = vpop.f32.mrf.mxu0
        %774 = vmatprep.mubr.f32.mxu0 0.0
        %775 = vmatmul.mubr.f32.gmra.mxu0 %v490
        %v776 = vpop.f32.mrf.mxu0
        %v777 = vadd.f32 0.0, %v776
        %v778 = vpop.f32.mrf.mxu0
        %779 = vmatprep.mubr.f32.mxu0 0.0
        %780 = vmatmul.mubr.f32.gmra.mxu0 %v492
        %v781 = vpop.f32.mrf.mxu0
        %v782 = vadd.f32 0.0, %v781
        %v783 = vpop.f32.mrf.mxu0
        %784 = vmatprep.mubr.f32.mxu0 0.0
        %785 = vmatmul.mubr.f32.gmra.mxu0 %v494
        %v786 = vpop.f32.mrf.mxu0
        %v787 = vadd.f32 0.0, %v786
        %v788 = vpop.f32.mrf.mxu0
        %789 = vmatprep.mubr.f32.mxu0 0.0
        %790 = vmatmul.mubr.f32.gmra.mxu0 %v647
        %v791 = vpop.f32.mrf.mxu0
        %v792 = vadd.f32 0.0, %v791
        %v793 = vpop.f32.mrf.mxu0
        %794 = vmatprep.mubr.f32.mxu0 0.0
        %795 = vmatmul.mubr.f32.gmra.mxu0 %v650
        %v796 = vpop.f32.mrf.mxu0
        %v797 = vadd.f32 0.0, %v796
        %v798 = vpop.f32.mrf.mxu0
        %799 = vdwg.mxu0
        %v800 = vadd.f32 %v566, %v722
        %v801 = vadd.f32 %v571, %v727
        %v802 = vadd.f32 %v576, %v732
        %v803 = vadd.f32 %v581, %v737
        %v804 = vadd.f32 %v586, %v742
        %v805 = vadd.f32 %v591, %v747
        %v806 = vadd.f32 %v596, %v752
        %v807 = vadd.f32 %v601, %v757
        %v808 = vadd.f32 %v606, %v762
        %v809 = vadd.f32 %v611, %v767
        %v810 = vadd.f32 %v616, %v772
        %v811 = vadd.f32 %v621, %v777
        %v812 = vadd.f32 %v626, %v782
        %v813 = vadd.f32 %v631, %v787
        %v814 = vadd.f32 %v636, %v792
        %v815 = vadd.f32 %v641, %v797
        %s816 = scalar_lea.vmem %s1, 12
        %v817 = vld [vmem:[%s816] sm:$0xf]
        %v819 = vrot.slane %v207, 1
        %v820 = vrot.slane %v208, 1
        %v821 = vsel %vm241, %v819, %v820
        %v822 = vrot.slane %v209, 1
        %v823 = vsel %vm241, %v820, %v822
        %v824 = vsel %vm282, %v821, 0
        %v826 = vsel %vm282, %v823, 0
        %v829 = vsel %vm315, %v817, 0
        %831 = vmatprep.subr.mxu0 0.0
        %832 = vmatpush1.msra.mxu0 0.0
        %833 = vmatprep.subr.mxu0 0.0
        %834 = vmatpush1.msra.mxu0 0.0
        %835 = vmatprep.subr.mxu0 0.0
        %836 = vmatpush1.msra.mxu0 0.0
        %837 = vmatprep.subr.mxu0 0.0
        %838 = vmatpush1.msra.mxu0 0.0
        %839 = vmatprep.subr.mxu0 0.0
        %840 = vmatpush1.msra.mxu0 0.0
        %841 = vmatprep.subr.mxu0 0.0
        %842 = vmatpush1.msra.mxu0 0.0
        %843 = vmatprep.subr.mxu0 0.0
        %844 = vmatpush1.msra.mxu0 0.0
        %845 = vmatprep.subr.mxu0 0.0
        %846 = vmatpush1.msra.mxu0 0.0
        %847 = vmatprep.subr.mxu0 0.0
        %848 = vmatpush1.msra.mxu0 0.0
        %849 = vmatprep.subr.mxu0 0.0
        %850 = vmatpush1.msra.mxu0 0.0
        %851 = vmatprep.subr.mxu0 0.0
        %852 = vmatpush1.msra.mxu0 0.0
        %853 = vmatprep.subr.mxu0 0.0
        %854 = vmatpush1.msra.mxu0 0.0
        %855 = vmatprep.subr.mxu0 0.0
        %856 = vmatpush1.msra.mxu0 0.0
        %857 = vmatprep.subr.mxu0 0.0
        %858 = vmatpush1.msra.mxu0 0.0
        %859 = vmatprep.subr.mxu0 0.0
        %860 = vmatpush1.msra.mxu0 0.0
        %861 = vmatprep.subr.mxu0 0.0
        %862 = vmatpush1.msra.mxu0 %v829
        %863 = vmatprep.subr.mxu0 0.0
        %864 = vmatpush2.msra.mxu0 0.0
        %865 = vmatprep.subr.mxu0 0.0
        %866 = vmatpush2.msra.mxu0 0.0
        %867 = vmatprep.subr.mxu0 0.0
        %868 = vmatpush2.msra.mxu0 0.0
        %869 = vmatprep.subr.mxu0 0.0
        %870 = vmatpush2.msra.mxu0 0.0
        %871 = vmatprep.subr.mxu0 0.0
        %872 = vmatpush2.msra.mxu0 0.0
        %873 = vmatprep.subr.mxu0 0.0
        %874 = vmatpush2.msra.mxu0 0.0
        %875 = vmatprep.subr.mxu0 0.0
        %876 = vmatpush2.msra.mxu0 0.0
        %877 = vmatprep.subr.mxu0 0.0
        %878 = vmatpush2.msra.mxu0 0.0
        %879 = vmatprep.subr.mxu0 0.0
        %880 = vmatpush2.msra.mxu0 0.0
        %881 = vmatprep.subr.mxu0 0.0
        %882 = vmatpush2.msra.mxu0 0.0
        %883 = vmatprep.subr.mxu0 0.0
        %884 = vmatpush2.msra.mxu0 0.0
        %885 = vmatprep.subr.mxu0 0.0
        %886 = vmatpush2.msra.mxu0 0.0
        %887 = vmatprep.subr.mxu0 0.0
        %888 = vmatpush2.msra.mxu0 0.0
        %889 = vmatprep.subr.mxu0 0.0
        %890 = vmatpush2.msra.mxu0 0.0
        %891 = vmatprep.subr.mxu0 0.0
        %892 = vmatpush2.msra.mxu0 0.0
        %893 = vmatprep.subr.mxu0 0.0
        %894 = vmatpush2.msra.mxu0 0.0
        %895 = vmatprep.mubr.f32.mxu0 0.0
        %896 = vmatmul.mubr.f32.gmra.mxu0 %v287
        %v897 = vpop.f32.mrf.mxu0
        %v898 = vadd.f32 0.0, %v897
        %v899 = vpop.f32.mrf.mxu0
        %900 = vmatprep.mubr.f32.mxu0 0.0
        %901 = vmatmul.mubr.f32.gmra.mxu0 %v289
        %v902 = vpop.f32.mrf.mxu0
        %v903 = vadd.f32 0.0, %v902
        %v904 = vpop.f32.mrf.mxu0
        %905 = vmatprep.mubr.f32.mxu0 0.0
        %906 = vmatmul.mubr.f32.gmra.mxu0 %v291
        %v907 = vpop.f32.mrf.mxu0
        %v908 = vadd.f32 0.0, %v907
        %v909 = vpop.f32.mrf.mxu0
        %910 = vmatprep.mubr.f32.mxu0 0.0
        %911 = vmatmul.mubr.f32.gmra.mxu0 %v293
        %v912 = vpop.f32.mrf.mxu0
        %v913 = vadd.f32 0.0, %v912
        %v914 = vpop.f32.mrf.mxu0
        %915 = vmatprep.mubr.f32.mxu0 0.0
        %916 = vmatmul.mubr.f32.gmra.mxu0 %v295
        %v917 = vpop.f32.mrf.mxu0
        %v918 = vadd.f32 0.0, %v917
        %v919 = vpop.f32.mrf.mxu0
        %920 = vmatprep.mubr.f32.mxu0 0.0
        %921 = vmatmul.mubr.f32.gmra.mxu0 %v297
        %v922 = vpop.f32.mrf.mxu0
        %v923 = vadd.f32 0.0, %v922
        %v924 = vpop.f32.mrf.mxu0
        %925 = vmatprep.mubr.f32.mxu0 0.0
        %926 = vmatmul.mubr.f32.gmra.mxu0 %v299
        %v927 = vpop.f32.mrf.mxu0
        %v928 = vadd.f32 0.0, %v927
        %v929 = vpop.f32.mrf.mxu0
        %930 = vmatprep.mubr.f32.mxu0 0.0
        %931 = vmatmul.mubr.f32.gmra.mxu0 %v301
        %v932 = vpop.f32.mrf.mxu0
        %v933 = vadd.f32 0.0, %v932
        %v934 = vpop.f32.mrf.mxu0
        %935 = vmatprep.mubr.f32.mxu0 0.0
        %936 = vmatmul.mubr.f32.gmra.mxu0 %v303
        %v937 = vpop.f32.mrf.mxu0
        %v938 = vadd.f32 0.0, %v937
        %v939 = vpop.f32.mrf.mxu0
        %940 = vmatprep.mubr.f32.mxu0 0.0
        %941 = vmatmul.mubr.f32.gmra.mxu0 %v305
        %v942 = vpop.f32.mrf.mxu0
        %v943 = vadd.f32 0.0, %v942
        %v944 = vpop.f32.mrf.mxu0
        %945 = vmatprep.mubr.f32.mxu0 0.0
        %946 = vmatmul.mubr.f32.gmra.mxu0 %v307
        %v947 = vpop.f32.mrf.mxu0
        %v948 = vadd.f32 0.0, %v947
        %v949 = vpop.f32.mrf.mxu0
        %950 = vmatprep.mubr.f32.mxu0 0.0
        %951 = vmatmul.mubr.f32.gmra.mxu0 %v309
        %v952 = vpop.f32.mrf.mxu0
        %v953 = vadd.f32 0.0, %v952
        %v954 = vpop.f32.mrf.mxu0
        %955 = vmatprep.mubr.f32.mxu0 0.0
        %956 = vmatmul.mubr.f32.gmra.mxu0 %v311
        %v957 = vpop.f32.mrf.mxu0
        %v958 = vadd.f32 0.0, %v957
        %v959 = vpop.f32.mrf.mxu0
        %960 = vmatprep.mubr.f32.mxu0 0.0
        %961 = vmatmul.mubr.f32.gmra.mxu0 %v313
        %v962 = vpop.f32.mrf.mxu0
        %v963 = vadd.f32 0.0, %v962
        %v964 = vpop.f32.mrf.mxu0
        %965 = vmatprep.mubr.f32.mxu0 0.0
        %966 = vmatmul.mubr.f32.gmra.mxu0 %v824
        %v967 = vpop.f32.mrf.mxu0
        %v968 = vadd.f32 0.0, %v967
        %v969 = vpop.f32.mrf.mxu0
        %970 = vmatprep.mubr.f32.mxu0 0.0
        %971 = vmatmul.mubr.f32.gmra.mxu0 %v826
        %v972 = vpop.f32.mrf.mxu0
        %v973 = vadd.f32 0.0, %v972
        %v974 = vpop.f32.mrf.mxu0
        %975 = vdwg.mxu0
        %v976 = vadd.f32 %v800, %v898
        %v977 = vadd.f32 %v801, %v903
        %v978 = vadd.f32 %v802, %v908
        %v979 = vadd.f32 %v803, %v913
        %v980 = vadd.f32 %v804, %v918
        %v981 = vadd.f32 %v805, %v923
        %v982 = vadd.f32 %v806, %v928
        %v983 = vadd.f32 %v807, %v933
        %v984 = vadd.f32 %v808, %v938
        %v985 = vadd.f32 %v809, %v943
        %v986 = vadd.f32 %v810, %v948
        %v987 = vadd.f32 %v811, %v953
        %v988 = vadd.f32 %v812, %v958
        %v989 = vadd.f32 %v813, %v963
        %v990 = vadd.f32 %v814, %v968
        %v991 = vadd.f32 %v815, %v973
        %v993 = vlaneseq
        %v994 = vshrl.u32 %v993, 7
        %v995 = vsub.s32 0, %v994
        %v996 = vrot.slane %v213, %v995
        %v998 = vadd.f32 %v976, %v996
        %v999 = vadd.f32 %v977, %v996
        %v1000 = vadd.f32 %v978, %v996
        %v1001 = vadd.f32 %v979, %v996
        %v1002 = vadd.f32 %v980, %v996
        %v1003 = vadd.f32 %v981, %v996
        %v1004 = vadd.f32 %v982, %v996
        %v1005 = vadd.f32 %v983, %v996
        %v1006 = vadd.f32 %v984, %v996
        %v1007 = vadd.f32 %v985, %v996
        %v1008 = vadd.f32 %v986, %v996
        %v1009 = vadd.f32 %v987, %v996
        %v1010 = vadd.f32 %v988, %v996
        %v1011 = vadd.f32 %v989, %v996
        %v1012 = vadd.f32 %v990, %v996
        %v1013 = vadd.f32 %v991, %v996
        %1014 = vst.msk [vmem:[%s173] sm:$0xff] %vm282, %v998
        %1015 = vst.msk [vmem:[%s173 + $0x8] sm:$0xff] %vm282, %v999
        %1016 = vst.msk [vmem:[%s173 + $0x10] sm:$0xff] %vm282, %v1000
        %1017 = vst.msk [vmem:[%s173 + $0x18] sm:$0xff] %vm282, %v1001
        %1018 = vst.msk [vmem:[%s173 + $0x20] sm:$0xff] %vm282, %v1002
        %1019 = vst.msk [vmem:[%s173 + $0x28] sm:$0xff] %vm282, %v1003
        %1020 = vst.msk [vmem:[%s173 + $0x30] sm:$0xff] %vm282, %v1004
        %1021 = vst.msk [vmem:[%s173 + $0x38] sm:$0xff] %vm282, %v1005
        %1022 = vst.msk [vmem:[%s173 + $0x40] sm:$0xff] %vm282, %v1006
        %1023 = vst.msk [vmem:[%s173 + $0x48] sm:$0xff] %vm282, %v1007
        %1024 = vst.msk [vmem:[%s173 + $0x50] sm:$0xff] %vm282, %v1008
        %1025 = vst.msk [vmem:[%s173 + $0x58] sm:$0xff] %vm282, %v1009
        %1026 = vst.msk [vmem:[%s173 + $0x60] sm:$0xff] %vm282, %v1010
        %1027 = vst.msk [vmem:[%s173 + $0x68] sm:$0xff] %vm282, %v1011
        %1028 = vst.msk [vmem:[%s173 + $0x70] sm:$0xff] %vm282, %v1012
        %1029 = vst.msk [vmem:[%s173 + $0x78] sm:$0xff] %vm282, %v1013
        %s1030 = scalar_lea.vmem %s1, 16
        %v1031 = vld [vmem:[%s1030] sm:$0xf]
        %s1032 = scalar_lea.vmem %s1, 20
        %v1033 = vld [vmem:[%s1032] sm:$0xf]
        %vm1034 = vcmask 1045504
        %v1035 = vrot.slane %v183, 2
        %v1036 = vrot.slane %v184, 2
        %v1037 = vsel %vm1034, %v1035, %v1036
        %v1038 = vrot.slane %v185, 2
        %v1039 = vsel %vm1034, %v1036, %v1038
        %v1040 = vrot.slane %v186, 2
        %v1041 = vrot.slane %v187, 2
        %v1042 = vsel %vm1034, %v1040, %v1041
        %v1043 = vrot.slane %v188, 2
        %v1044 = vsel %vm1034, %v1041, %v1043
        %v1045 = vrot.slane %v189, 2
        %v1046 = vrot.slane %v190, 2
        %v1047 = vsel %vm1034, %v1045, %v1046
        %v1048 = vrot.slane %v191, 2
        %v1049 = vsel %vm1034, %v1046, %v1048
        %v1050 = vrot.slane %v192, 2
        %v1051 = vrot.slane %v193, 2
        %v1052 = vsel %vm1034, %v1050, %v1051
        %v1053 = vrot.slane %v194, 2
        %v1054 = vsel %vm1034, %v1051, %v1053
        %v1055 = vrot.slane %v195, 2
        %v1056 = vrot.slane %v196, 2
        %v1057 = vsel %vm1034, %v1055, %v1056
        %v1058 = vrot.slane %v197, 2
        %v1059 = vsel %vm1034, %v1056, %v1058
        %v1060 = vrot.slane %v198, 2
        %v1061 = vrot.slane %v199, 2
        %v1062 = vsel %vm1034, %v1060, %v1061
        %v1063 = vrot.slane %v200, 2
        %v1064 = vsel %vm1034, %v1061, %v1063
        %v1065 = vrot.slane %v201, 2
        %v1066 = vrot.slane %v202, 2
        %v1067 = vsel %vm1034, %v1065, %v1066
        %v1068 = vrot.slane %v203, 2
        %v1069 = vsel %vm1034, %v1066, %v1068
        %v1070 = vrot.slane %v204, 2
        %v1071 = vrot.slane %v205, 2
        %v1072 = vsel %vm1034, %v1070, %v1071
        %v1073 = vrot.slane %v206, 2
        %v1074 = vsel %vm1034, %v1071, %v1073
        %v1075 = vsel %vm282, %v1037, 0
        %v1077 = vsel %vm282, %v1039, 0
        %v1079 = vsel %vm282, %v1042, 0
        %v1081 = vsel %vm282, %v1044, 0
        %v1083 = vsel %vm282, %v1047, 0
        %v1085 = vsel %vm282, %v1049, 0
        %v1087 = vsel %vm282, %v1052, 0
        %v1089 = vsel %vm282, %v1054, 0
        %v1091 = vsel %vm282, %v1057, 0
        %v1093 = vsel %vm282, %v1059, 0
        %v1095 = vsel %vm282, %v1062, 0
        %v1097 = vsel %vm282, %v1064, 0
        %v1099 = vsel %vm282, %v1067, 0
        %v1101 = vsel %vm282, %v1069, 0
        %v1103 = vsel %vm282, %v1072, 0
        %v1105 = vsel %vm282, %v1074, 0
        %v1108 = vsel %vm315, %v1033, 0
        %1110 = vmatprep.subr.mxu0 0.0
        %1111 = vmatpush1.msra.mxu0 0.0
        %1112 = vmatprep.subr.mxu0 0.0
        %1113 = vmatpush1.msra.mxu0 0.0
        %1114 = vmatprep.subr.mxu0 0.0
        %1115 = vmatpush1.msra.mxu0 0.0
        %1116 = vmatprep.subr.mxu0 0.0
        %1117 = vmatpush1.msra.mxu0 0.0
        %1118 = vmatprep.subr.mxu0 0.0
        %1119 = vmatpush1.msra.mxu0 0.0
        %1120 = vmatprep.subr.mxu0 0.0
        %1121 = vmatpush1.msra.mxu0 0.0
        %1122 = vmatprep.subr.mxu0 0.0
        %1123 = vmatpush1.msra.mxu0 0.0
        %1124 = vmatprep.subr.mxu0 0.0
        %1125 = vmatpush1.msra.mxu0 0.0
        %1126 = vmatprep.subr.mxu0 0.0
        %1127 = vmatpush1.msra.mxu0 0.0
        %1128 = vmatprep.subr.mxu0 0.0
        %1129 = vmatpush1.msra.mxu0 0.0
        %1130 = vmatprep.subr.mxu0 0.0
        %1131 = vmatpush1.msra.mxu0 0.0
        %1132 = vmatprep.subr.mxu0 0.0
        %1133 = vmatpush1.msra.mxu0 0.0
        %1134 = vmatprep.subr.mxu0 0.0
        %1135 = vmatpush1.msra.mxu0 0.0
        %1136 = vmatprep.subr.mxu0 0.0
        %1137 = vmatpush1.msra.mxu0 0.0
        %1138 = vmatprep.subr.mxu0 0.0
        %1139 = vmatpush1.msra.mxu0 0.0
        %1140 = vmatprep.subr.mxu0 0.0
        %1141 = vmatpush1.msra.mxu0 %v1108
        %1142 = vmatprep.subr.mxu0 0.0
        %1143 = vmatpush2.msra.mxu0 0.0
        %1144 = vmatprep.subr.mxu0 0.0
        %1145 = vmatpush2.msra.mxu0 0.0
        %1146 = vmatprep.subr.mxu0 0.0
        %1147 = vmatpush2.msra.mxu0 0.0
        %1148 = vmatprep.subr.mxu0 0.0
        %1149 = vmatpush2.msra.mxu0 0.0
        %1150 = vmatprep.subr.mxu0 0.0
        %1151 = vmatpush2.msra.mxu0 0.0
        %1152 = vmatprep.subr.mxu0 0.0
        %1153 = vmatpush2.msra.mxu0 0.0
        %1154 = vmatprep.subr.mxu0 0.0
        %1155 = vmatpush2.msra.mxu0 0.0
        %1156 = vmatprep.subr.mxu0 0.0
        %1157 = vmatpush2.msra.mxu0 0.0
        %1158 = vmatprep.subr.mxu0 0.0
        %1159 = vmatpush2.msra.mxu0 0.0
        %1160 = vmatprep.subr.mxu0 0.0
        %1161 = vmatpush2.msra.mxu0 0.0
        %1162 = vmatprep.subr.mxu0 0.0
        %1163 = vmatpush2.msra.mxu0 0.0
        %1164 = vmatprep.subr.mxu0 0.0
        %1165 = vmatpush2.msra.mxu0 0.0
        %1166 = vmatprep.subr.mxu0 0.0
        %1167 = vmatpush2.msra.mxu0 0.0
        %1168 = vmatprep.subr.mxu0 0.0
        %1169 = vmatpush2.msra.mxu0 0.0
        %1170 = vmatprep.subr.mxu0 0.0
        %1171 = vmatpush2.msra.mxu0 0.0
        %1172 = vmatprep.subr.mxu0 0.0
        %1173 = vmatpush2.msra.mxu0 0.0
        %1174 = vmatprep.mubr.f32.mxu0 0.0
        %1175 = vmatmul.mubr.f32.gmra.mxu0 %v1075
        %v1176 = vpop.f32.mrf.mxu0
        %v1177 = vadd.f32 0.0, %v1176
        %v1178 = vpop.f32.mrf.mxu0
        %1179 = vmatprep.mubr.f32.mxu0 0.0
        %1180 = vmatmul.mubr.f32.gmra.mxu0 %v1077
        %v1181 = vpop.f32.mrf.mxu0
        %v1182 = vadd.f32 0.0, %v1181
        %v1183 = vpop.f32.mrf.mxu0
        %1184 = vmatprep.mubr.f32.mxu0 0.0
        %1185 = vmatmul.mubr.f32.gmra.mxu0 %v1079
        %v1186 = vpop.f32.mrf.mxu0
        %v1187 = vadd.f32 0.0, %v1186
        %v1188 = vpop.f32.mrf.mxu0
        %1189 = vmatprep.mubr.f32.mxu0 0.0
        %1190 = vmatmul.mubr.f32.gmra.mxu0 %v1081
        %v1191 = vpop.f32.mrf.mxu0
        %v1192 = vadd.f32 0.0, %v1191
        %v1193 = vpop.f32.mrf.mxu0
        %1194 = vmatprep.mubr.f32.mxu0 0.0
        %1195 = vmatmul.mubr.f32.gmra.mxu0 %v1083
        %v1196 = vpop.f32.mrf.mxu0
        %v1197 = vadd.f32 0.0, %v1196
        %v1198 = vpop.f32.mrf.mxu0
        %1199 = vmatprep.mubr.f32.mxu0 0.0
        %1200 = vmatmul.mubr.f32.gmra.mxu0 %v1085
        %v1201 = vpop.f32.mrf.mxu0
        %v1202 = vadd.f32 0.0, %v1201
        %v1203 = vpop.f32.mrf.mxu0
        %1204 = vmatprep.mubr.f32.mxu0 0.0
        %1205 = vmatmul.mubr.f32.gmra.mxu0 %v1087
        %v1206 = vpop.f32.mrf.mxu0
        %v1207 = vadd.f32 0.0, %v1206
        %v1208 = vpop.f32.mrf.mxu0
        %1209 = vmatprep.mubr.f32.mxu0 0.0
        %1210 = vmatmul.mubr.f32.gmra.mxu0 %v1089
        %v1211 = vpop.f32.mrf.mxu0
        %v1212 = vadd.f32 0.0, %v1211
        %v1213 = vpop.f32.mrf.mxu0
        %1214 = vmatprep.mubr.f32.mxu0 0.0
        %1215 = vmatmul.mubr.f32.gmra.mxu0 %v1091
        %v1216 = vpop.f32.mrf.mxu0
        %v1217 = vadd.f32 0.0, %v1216
        %v1218 = vpop.f32.mrf.mxu0
        %1219 = vmatprep.mubr.f32.mxu0 0.0
        %1220 = vmatmul.mubr.f32.gmra.mxu0 %v1093
        %v1221 = vpop.f32.mrf.mxu0
        %v1222 = vadd.f32 0.0, %v1221
        %v1223 = vpop.f32.mrf.mxu0
        %1224 = vmatprep.mubr.f32.mxu0 0.0
        %1225 = vmatmul.mubr.f32.gmra.mxu0 %v1095
        %v1226 = vpop.f32.mrf.mxu0
        %v1227 = vadd.f32 0.0, %v1226
        %v1228 = vpop.f32.mrf.mxu0
        %1229 = vmatprep.mubr.f32.mxu0 0.0
        %1230 = vmatmul.mubr.f32.gmra.mxu0 %v1097
        %v1231 = vpop.f32.mrf.mxu0
        %v1232 = vadd.f32 0.0, %v1231
        %v1233 = vpop.f32.mrf.mxu0
        %1234 = vmatprep.mubr.f32.mxu0 0.0
        %1235 = vmatmul.mubr.f32.gmra.mxu0 %v1099
        %v1236 = vpop.f32.mrf.mxu0
        %v1237 = vadd.f32 0.0, %v1236
        %v1238 = vpop.f32.mrf.mxu0
        %1239 = vmatprep.mubr.f32.mxu0 0.0
        %1240 = vmatmul.mubr.f32.gmra.mxu0 %v1101
        %v1241 = vpop.f32.mrf.mxu0
        %v1242 = vadd.f32 0.0, %v1241
        %v1243 = vpop.f32.mrf.mxu0
        %1244 = vmatprep.mubr.f32.mxu0 0.0
        %1245 = vmatmul.mubr.f32.gmra.mxu0 %v1103
        %v1246 = vpop.f32.mrf.mxu0
        %v1247 = vadd.f32 0.0, %v1246
        %v1248 = vpop.f32.mrf.mxu0
        %1249 = vmatprep.mubr.f32.mxu0 0.0
        %1250 = vmatmul.mubr.f32.gmra.mxu0 %v1105
        %v1251 = vpop.f32.mrf.mxu0
        %v1252 = vadd.f32 0.0, %v1251
        %v1253 = vpop.f32.mrf.mxu0
        %1254 = vdwg.mxu0
        %v1256 = vsel %vm315, %v1031, 0
        %1258 = vmatprep.subr.mxu0 0.0
        %1259 = vmatpush1.msra.mxu0 0.0
        %1260 = vmatprep.subr.mxu0 0.0
        %1261 = vmatpush1.msra.mxu0 0.0
        %1262 = vmatprep.subr.mxu0 0.0
        %1263 = vmatpush1.msra.mxu0 0.0
        %1264 = vmatprep.subr.mxu0 0.0
        %1265 = vmatpush1.msra.mxu0 0.0
        %1266 = vmatprep.subr.mxu0 0.0
        %1267 = vmatpush1.msra.mxu0 0.0
        %1268 = vmatprep.subr.mxu0 0.0
        %1269 = vmatpush1.msra.mxu0 0.0
        %1270 = vmatprep.subr.mxu0 0.0
        %1271 = vmatpush1.msra.mxu0 0.0
        %1272 = vmatprep.subr.mxu0 0.0
        %1273 = vmatpush1.msra.mxu0 0.0
        %1274 = vmatprep.subr.mxu0 0.0
        %1275 = vmatpush1.msra.mxu0 0.0
        %1276 = vmatprep.subr.mxu0 0.0
        %1277 = vmatpush1.msra.mxu0 0.0
        %1278 = vmatprep.subr.mxu0 0.0
        %1279 = vmatpush1.msra.mxu0 0.0
        %1280 = vmatprep.subr.mxu0 0.0
        %1281 = vmatpush1.msra.mxu0 0.0
        %1282 = vmatprep.subr.mxu0 0.0
        %1283 = vmatpush1.msra.mxu0 0.0
        %1284 = vmatprep.subr.mxu0 0.0
        %1285 = vmatpush1.msra.mxu0 0.0
        %1286 = vmatprep.subr.mxu0 0.0
        %1287 = vmatpush1.msra.mxu0 0.0
        %1288 = vmatprep.subr.mxu0 0.0
        %1289 = vmatpush1.msra.mxu0 %v1256
        %1290 = vmatprep.subr.mxu0 0.0
        %1291 = vmatpush2.msra.mxu0 0.0
        %1292 = vmatprep.subr.mxu0 0.0
        %1293 = vmatpush2.msra.mxu0 0.0
        %1294 = vmatprep.subr.mxu0 0.0
        %1295 = vmatpush2.msra.mxu0 0.0
        %1296 = vmatprep.subr.mxu0 0.0
        %1297 = vmatpush2.msra.mxu0 0.0
        %1298 = vmatprep.subr.mxu0 0.0
        %1299 = vmatpush2.msra.mxu0 0.0
        %1300 = vmatprep.subr.mxu0 0.0
        %1301 = vmatpush2.msra.mxu0 0.0
        %1302 = vmatprep.subr.mxu0 0.0
        %1303 = vmatpush2.msra.mxu0 0.0
        %1304 = vmatprep.subr.mxu0 0.0
        %1305 = vmatpush2.msra.mxu0 0.0
        %1306 = vmatprep.subr.mxu0 0.0
        %1307 = vmatpush2.msra.mxu0 0.0
        %1308 = vmatprep.subr.mxu0 0.0
        %1309 = vmatpush2.msra.mxu0 0.0
        %1310 = vmatprep.subr.mxu0 0.0
        %1311 = vmatpush2.msra.mxu0 0.0
        %1312 = vmatprep.subr.mxu0 0.0
        %1313 = vmatpush2.msra.mxu0 0.0
        %1314 = vmatprep.subr.mxu0 0.0
        %1315 = vmatpush2.msra.mxu0 0.0
        %1316 = vmatprep.subr.mxu0 0.0
        %1317 = vmatpush2.msra.mxu0 0.0
        %1318 = vmatprep.subr.mxu0 0.0
        %1319 = vmatpush2.msra.mxu0 0.0
        %1320 = vmatprep.subr.mxu0 0.0
        %1321 = vmatpush2.msra.mxu0 0.0
        %1322 = vmatprep.mubr.f32.mxu0 0.0
        %1323 = vmatmul.mubr.f32.gmra.mxu0 %v283
        %v1324 = vpop.f32.mrf.mxu0
        %v1325 = vadd.f32 %v1177, %v1324
        %v1326 = vpop.f32.mrf.mxu0
        %1327 = vmatprep.mubr.f32.mxu0 0.0
        %1328 = vmatmul.mubr.f32.gmra.mxu0 %v285
        %v1329 = vpop.f32.mrf.mxu0
        %v1330 = vadd.f32 %v1182, %v1329
        %v1331 = vpop.f32.mrf.mxu0
        %1332 = vmatprep.mubr.f32.mxu0 0.0
        %1333 = vmatmul.mubr.f32.gmra.mxu0 %v287
        %v1334 = vpop.f32.mrf.mxu0
        %v1335 = vadd.f32 %v1187, %v1334
        %v1336 = vpop.f32.mrf.mxu0
        %1337 = vmatprep.mubr.f32.mxu0 0.0
        %1338 = vmatmul.mubr.f32.gmra.mxu0 %v289
        %v1339 = vpop.f32.mrf.mxu0
        %v1340 = vadd.f32 %v1192, %v1339
        %v1341 = vpop.f32.mrf.mxu0
        %1342 = vmatprep.mubr.f32.mxu0 0.0
        %1343 = vmatmul.mubr.f32.gmra.mxu0 %v291
        %v1344 = vpop.f32.mrf.mxu0
        %v1345 = vadd.f32 %v1197, %v1344
        %v1346 = vpop.f32.mrf.mxu0
        %1347 = vmatprep.mubr.f32.mxu0 0.0
        %1348 = vmatmul.mubr.f32.gmra.mxu0 %v293
        %v1349 = vpop.f32.mrf.mxu0
        %v1350 = vadd.f32 %v1202, %v1349
        %v1351 = vpop.f32.mrf.mxu0
        %1352 = vmatprep.mubr.f32.mxu0 0.0
        %1353 = vmatmul.mubr.f32.gmra.mxu0 %v295
        %v1354 = vpop.f32.mrf.mxu0
        %v1355 = vadd.f32 %v1207, %v1354
        %v1356 = vpop.f32.mrf.mxu0
        %1357 = vmatprep.mubr.f32.mxu0 0.0
        %1358 = vmatmul.mubr.f32.gmra.mxu0 %v297
        %v1359 = vpop.f32.mrf.mxu0
        %v1360 = vadd.f32 %v1212, %v1359
        %v1361 = vpop.f32.mrf.mxu0
        %1362 = vmatprep.mubr.f32.mxu0 0.0
        %1363 = vmatmul.mubr.f32.gmra.mxu0 %v299
        %v1364 = vpop.f32.mrf.mxu0
        %v1365 = vadd.f32 %v1217, %v1364
        %v1366 = vpop.f32.mrf.mxu0
        %1367 = vmatprep.mubr.f32.mxu0 0.0
        %1368 = vmatmul.mubr.f32.gmra.mxu0 %v301
        %v1369 = vpop.f32.mrf.mxu0
        %v1370 = vadd.f32 %v1222, %v1369
        %v1371 = vpop.f32.mrf.mxu0
        %1372 = vmatprep.mubr.f32.mxu0 0.0
        %1373 = vmatmul.mubr.f32.gmra.mxu0 %v303
        %v1374 = vpop.f32.mrf.mxu0
        %v1375 = vadd.f32 %v1227, %v1374
        %v1376 = vpop.f32.mrf.mxu0
        %1377 = vmatprep.mubr.f32.mxu0 0.0
        %1378 = vmatmul.mubr.f32.gmra.mxu0 %v305
        %v1379 = vpop.f32.mrf.mxu0
        %v1380 = vadd.f32 %v1232, %v1379
        %v1381 = vpop.f32.mrf.mxu0
        %1382 = vmatprep.mubr.f32.mxu0 0.0
        %1383 = vmatmul.mubr.f32.gmra.mxu0 %v307
        %v1384 = vpop.f32.mrf.mxu0
        %v1385 = vadd.f32 %v1237, %v1384
        %v1386 = vpop.f32.mrf.mxu0
        %1387 = vmatprep.mubr.f32.mxu0 0.0
        %1388 = vmatmul.mubr.f32.gmra.mxu0 %v309
        %v1389 = vpop.f32.mrf.mxu0
        %v1390 = vadd.f32 %v1242, %v1389
        %v1391 = vpop.f32.mrf.mxu0
        %1392 = vmatprep.mubr.f32.mxu0 0.0
        %1393 = vmatmul.mubr.f32.gmra.mxu0 %v311
        %v1394 = vpop.f32.mrf.mxu0
        %v1395 = vadd.f32 %v1247, %v1394
        %v1396 = vpop.f32.mrf.mxu0
        %1397 = vmatprep.mubr.f32.mxu0 0.0
        %1398 = vmatmul.mubr.f32.gmra.mxu0 %v313
        %v1399 = vpop.f32.mrf.mxu0
        %v1400 = vadd.f32 %v1252, %v1399
        %v1401 = vpop.f32.mrf.mxu0
        %1402 = vdwg.mxu0
        %s1403 = scalar_lea.vmem %s1, 24
        %v1404 = vld [vmem:[%s1403] sm:$0xf]
        %v1406 = vsel %vm315, %v1404, 0
        %1408 = vmatprep.subr.mxu0 0.0
        %1409 = vmatpush1.msra.mxu0 0.0
        %1410 = vmatprep.subr.mxu0 0.0
        %1411 = vmatpush1.msra.mxu0 0.0
        %1412 = vmatprep.subr.mxu0 0.0
        %1413 = vmatpush1.msra.mxu0 0.0
        %1414 = vmatprep.subr.mxu0 0.0
        %1415 = vmatpush1.msra.mxu0 0.0
        %1416 = vmatprep.subr.mxu0 0.0
        %1417 = vmatpush1.msra.mxu0 0.0
        %1418 = vmatprep.subr.mxu0 0.0
        %1419 = vmatpush1.msra.mxu0 0.0
        %1420 = vmatprep.subr.mxu0 0.0
        %1421 = vmatpush1.msra.mxu0 0.0
        %1422 = vmatprep.subr.mxu0 0.0
        %1423 = vmatpush1.msra.mxu0 0.0
        %1424 = vmatprep.subr.mxu0 0.0
        %1425 = vmatpush1.msra.mxu0 0.0
        %1426 = vmatprep.subr.mxu0 0.0
        %1427 = vmatpush1.msra.mxu0 0.0
        %1428 = vmatprep.subr.mxu0 0.0
        %1429 = vmatpush1.msra.mxu0 0.0
        %1430 = vmatprep.subr.mxu0 0.0
        %1431 = vmatpush1.msra.mxu0 0.0
        %1432 = vmatprep.subr.mxu0 0.0
        %1433 = vmatpush1.msra.mxu0 0.0
        %1434 = vmatprep.subr.mxu0 0.0
        %1435 = vmatpush1.msra.mxu0 0.0
        %1436 = vmatprep.subr.mxu0 0.0
        %1437 = vmatpush1.msra.mxu0 0.0
        %1438 = vmatprep.subr.mxu0 0.0
        %1439 = vmatpush1.msra.mxu0 %v1406
        %1440 = vmatprep.subr.mxu0 0.0
        %1441 = vmatpush2.msra.mxu0 0.0
        %1442 = vmatprep.subr.mxu0 0.0
        %1443 = vmatpush2.msra.mxu0 0.0
        %1444 = vmatprep.subr.mxu0 0.0
        %1445 = vmatpush2.msra.mxu0 0.0
        %1446 = vmatprep.subr.mxu0 0.0
        %1447 = vmatpush2.msra.mxu0 0.0
        %1448 = vmatprep.subr.mxu0 0.0
        %1449 = vmatpush2.msra.mxu0 0.0
        %1450 = vmatprep.subr.mxu0 0.0
        %1451 = vmatpush2.msra.mxu0 0.0
        %1452 = vmatprep.subr.mxu0 0.0
        %1453 = vmatpush2.msra.mxu0 0.0
        %1454 = vmatprep.subr.mxu0 0.0
        %1455 = vmatpush2.msra.mxu0 0.0
        %1456 = vmatprep.subr.mxu0 0.0
        %1457 = vmatpush2.msra.mxu0 0.0
        %1458 = vmatprep.subr.mxu0 0.0
        %1459 = vmatpush2.msra.mxu0 0.0
        %1460 = vmatprep.subr.mxu0 0.0
        %1461 = vmatpush2.msra.mxu0 0.0
        %1462 = vmatprep.subr.mxu0 0.0
        %1463 = vmatpush2.msra.mxu0 0.0
        %1464 = vmatprep.subr.mxu0 0.0
        %1465 = vmatpush2.msra.mxu0 0.0
        %1466 = vmatprep.subr.mxu0 0.0
        %1467 = vmatpush2.msra.mxu0 0.0
        %1468 = vmatprep.subr.mxu0 0.0
        %1469 = vmatpush2.msra.mxu0 0.0
        %1470 = vmatprep.subr.mxu0 0.0
        %1471 = vmatpush2.msra.mxu0 0.0
        %1472 = vmatprep.mubr.f32.mxu0 0.0
        %1473 = vmatmul.mubr.f32.gmra.mxu0 %v287
        %v1474 = vpop.f32.mrf.mxu0
        %v1475 = vadd.f32 0.0, %v1474
        %v1476 = vpop.f32.mrf.mxu0
        %1477 = vmatprep.mubr.f32.mxu0 0.0
        %1478 = vmatmul.mubr.f32.gmra.mxu0 %v289
        %v1479 = vpop.f32.mrf.mxu0
        %v1480 = vadd.f32 0.0, %v1479
        %v1481 = vpop.f32.mrf.mxu0
        %1482 = vmatprep.mubr.f32.mxu0 0.0
        %1483 = vmatmul.mubr.f32.gmra.mxu0 %v291
        %v1484 = vpop.f32.mrf.mxu0
        %v1485 = vadd.f32 0.0, %v1484
        %v1486 = vpop.f32.mrf.mxu0
        %1487 = vmatprep.mubr.f32.mxu0 0.0
        %1488 = vmatmul.mubr.f32.gmra.mxu0 %v293
        %v1489 = vpop.f32.mrf.mxu0
        %v1490 = vadd.f32 0.0, %v1489
        %v1491 = vpop.f32.mrf.mxu0
        %1492 = vmatprep.mubr.f32.mxu0 0.0
        %1493 = vmatmul.mubr.f32.gmra.mxu0 %v295
        %v1494 = vpop.f32.mrf.mxu0
        %v1495 = vadd.f32 0.0, %v1494
        %v1496 = vpop.f32.mrf.mxu0
        %1497 = vmatprep.mubr.f32.mxu0 0.0
        %1498 = vmatmul.mubr.f32.gmra.mxu0 %v297
        %v1499 = vpop.f32.mrf.mxu0
        %v1500 = vadd.f32 0.0, %v1499
        %v1501 = vpop.f32.mrf.mxu0
        %1502 = vmatprep.mubr.f32.mxu0 0.0
        %1503 = vmatmul.mubr.f32.gmra.mxu0 %v299
        %v1504 = vpop.f32.mrf.mxu0
        %v1505 = vadd.f32 0.0, %v1504
        %v1506 = vpop.f32.mrf.mxu0
        %1507 = vmatprep.mubr.f32.mxu0 0.0
        %1508 = vmatmul.mubr.f32.gmra.mxu0 %v301
        %v1509 = vpop.f32.mrf.mxu0
        %v1510 = vadd.f32 0.0, %v1509
        %v1511 = vpop.f32.mrf.mxu0
        %1512 = vmatprep.mubr.f32.mxu0 0.0
        %1513 = vmatmul.mubr.f32.gmra.mxu0 %v303
        %v1514 = vpop.f32.mrf.mxu0
        %v1515 = vadd.f32 0.0, %v1514
        %v1516 = vpop.f32.mrf.mxu0
        %1517 = vmatprep.mubr.f32.mxu0 0.0
        %1518 = vmatmul.mubr.f32.gmra.mxu0 %v305
        %v1519 = vpop.f32.mrf.mxu0
        %v1520 = vadd.f32 0.0, %v1519
        %v1521 = vpop.f32.mrf.mxu0
        %1522 = vmatprep.mubr.f32.mxu0 0.0
        %1523 = vmatmul.mubr.f32.gmra.mxu0 %v307
        %v1524 = vpop.f32.mrf.mxu0
        %v1525 = vadd.f32 0.0, %v1524
        %v1526 = vpop.f32.mrf.mxu0
        %1527 = vmatprep.mubr.f32.mxu0 0.0
        %1528 = vmatmul.mubr.f32.gmra.mxu0 %v309
        %v1529 = vpop.f32.mrf.mxu0
        %v1530 = vadd.f32 0.0, %v1529
        %v1531 = vpop.f32.mrf.mxu0
        %1532 = vmatprep.mubr.f32.mxu0 0.0
        %1533 = vmatmul.mubr.f32.gmra.mxu0 %v311
        %v1534 = vpop.f32.mrf.mxu0
        %v1535 = vadd.f32 0.0, %v1534
        %v1536 = vpop.f32.mrf.mxu0
        %1537 = vmatprep.mubr.f32.mxu0 0.0
        %1538 = vmatmul.mubr.f32.gmra.mxu0 %v313
        %v1539 = vpop.f32.mrf.mxu0
        %v1540 = vadd.f32 0.0, %v1539
        %v1541 = vpop.f32.mrf.mxu0
        %1542 = vmatprep.mubr.f32.mxu0 0.0
        %1543 = vmatmul.mubr.f32.gmra.mxu0 %v824
        %v1544 = vpop.f32.mrf.mxu0
        %v1545 = vadd.f32 0.0, %v1544
        %v1546 = vpop.f32.mrf.mxu0
        %1547 = vmatprep.mubr.f32.mxu0 0.0
        %1548 = vmatmul.mubr.f32.gmra.mxu0 %v826
        %v1549 = vpop.f32.mrf.mxu0
        %v1550 = vadd.f32 0.0, %v1549
        %v1551 = vpop.f32.mrf.mxu0
        %1552 = vdwg.mxu0
        %v1553 = vadd.f32 %v1325, %v1475
        %v1554 = vadd.f32 %v1330, %v1480
        %v1555 = vadd.f32 %v1335, %v1485
        %v1556 = vadd.f32 %v1340, %v1490
        %v1557 = vadd.f32 %v1345, %v1495
        %v1558 = vadd.f32 %v1350, %v1500
        %v1559 = vadd.f32 %v1355, %v1505
        %v1560 = vadd.f32 %v1360, %v1510
        %v1561 = vadd.f32 %v1365, %v1515
        %v1562 = vadd.f32 %v1370, %v1520
        %v1563 = vadd.f32 %v1375, %v1525
        %v1564 = vadd.f32 %v1380, %v1530
        %v1565 = vadd.f32 %v1385, %v1535
        %v1566 = vadd.f32 %v1390, %v1540
        %v1567 = vadd.f32 %v1395, %v1545
        %v1568 = vadd.f32 %v1400, %v1550
        %s1569 = scalar_lea.vmem %s1, 28
        %v1570 = vld [vmem:[%s1569] sm:$0xf]
        %v1571 = vrot.slane %v207, 2
        %v1572 = vrot.slane %v208, 2
        %v1573 = vsel %vm1034, %v1571, %v1572
        %v1574 = vrot.slane %v209, 2
        %v1575 = vsel %vm1034, %v1572, %v1574
        %v1576 = vsel %vm282, %v1573, 0
        %v1578 = vsel %vm282, %v1575, 0
        %v1581 = vsel %vm315, %v1570, 0
        %1583 = vmatprep.subr.mxu0 0.0
        %1584 = vmatpush1.msra.mxu0 0.0
        %1585 = vmatprep.subr.mxu0 0.0
        %1586 = vmatpush1.msra.mxu0 0.0
        %1587 = vmatprep.subr.mxu0 0.0
        %1588 = vmatpush1.msra.mxu0 0.0
        %1589 = vmatprep.subr.mxu0 0.0
        %1590 = vmatpush1.msra.mxu0 0.0
        %1591 = vmatprep.subr.mxu0 0.0
        %1592 = vmatpush1.msra.mxu0 0.0
        %1593 = vmatprep.subr.mxu0 0.0
        %1594 = vmatpush1.msra.mxu0 0.0
        %1595 = vmatprep.subr.mxu0 0.0
        %1596 = vmatpush1.msra.mxu0 0.0
        %1597 = vmatprep.subr.mxu0 0.0
        %1598 = vmatpush1.msra.mxu0 0.0
        %1599 = vmatprep.subr.mxu0 0.0
        %1600 = vmatpush1.msra.mxu0 0.0
        %1601 = vmatprep.subr.mxu0 0.0
        %1602 = vmatpush1.msra.mxu0 0.0
        %1603 = vmatprep.subr.mxu0 0.0
        %1604 = vmatpush1.msra.mxu0 0.0
        %1605 = vmatprep.subr.mxu0 0.0
        %1606 = vmatpush1.msra.mxu0 0.0
        %1607 = vmatprep.subr.mxu0 0.0
        %1608 = vmatpush1.msra.mxu0 0.0
        %1609 = vmatprep.subr.mxu0 0.0
        %1610 = vmatpush1.msra.mxu0 0.0
        %1611 = vmatprep.subr.mxu0 0.0
        %1612 = vmatpush1.msra.mxu0 0.0
        %1613 = vmatprep.subr.mxu0 0.0
        %1614 = vmatpush1.msra.mxu0 %v1581
        %1615 = vmatprep.subr.mxu0 0.0
        %1616 = vmatpush2.msra.mxu0 0.0
        %1617 = vmatprep.subr.mxu0 0.0
        %1618 = vmatpush2.msra.mxu0 0.0
        %1619 = vmatprep.subr.mxu0 0.0
        %1620 = vmatpush2.msra.mxu0 0.0
        %1621 = vmatprep.subr.mxu0 0.0
        %1622 = vmatpush2.msra.mxu0 0.0
        %1623 = vmatprep.subr.mxu0 0.0
        %1624 = vmatpush2.msra.mxu0 0.0
        %1625 = vmatprep.subr.mxu0 0.0
        %1626 = vmatpush2.msra.mxu0 0.0
        %1627 = vmatprep.subr.mxu0 0.0
        %1628 = vmatpush2.msra.mxu0 0.0
        %1629 = vmatprep.subr.mxu0 0.0
        %1630 = vmatpush2.msra.mxu0 0.0
        %1631 = vmatprep.subr.mxu0 0.0
        %1632 = vmatpush2.msra.mxu0 0.0
        %1633 = vmatprep.subr.mxu0 0.0
        %1634 = vmatpush2.msra.mxu0 0.0
        %1635 = vmatprep.subr.mxu0 0.0
        %1636 = vmatpush2.msra.mxu0 0.0
        %1637 = vmatprep.subr.mxu0 0.0
        %1638 = vmatpush2.msra.mxu0 0.0
        %1639 = vmatprep.subr.mxu0 0.0
        %1640 = vmatpush2.msra.mxu0 0.0
        %1641 = vmatprep.subr.mxu0 0.0
        %1642 = vmatpush2.msra.mxu0 0.0
        %1643 = vmatprep.subr.mxu0 0.0
        %1644 = vmatpush2.msra.mxu0 0.0
        %1645 = vmatprep.subr.mxu0 0.0
        %1646 = vmatpush2.msra.mxu0 0.0
        %1647 = vmatprep.mubr.f32.mxu0 0.0
        %1648 = vmatmul.mubr.f32.gmra.mxu0 %v1079
        %v1649 = vpop.f32.mrf.mxu0
        %v1650 = vadd.f32 0.0, %v1649
        %v1651 = vpop.f32.mrf.mxu0
        %1652 = vmatprep.mubr.f32.mxu0 0.0
        %1653 = vmatmul.mubr.f32.gmra.mxu0 %v1081
        %v1654 = vpop.f32.mrf.mxu0
        %v1655 = vadd.f32 0.0, %v1654
        %v1656 = vpop.f32.mrf.mxu0
        %1657 = vmatprep.mubr.f32.mxu0 0.0
        %1658 = vmatmul.mubr.f32.gmra.mxu0 %v1083
        %v1659 = vpop.f32.mrf.mxu0
        %v1660 = vadd.f32 0.0, %v1659
        %v1661 = vpop.f32.mrf.mxu0
        %1662 = vmatprep.mubr.f32.mxu0 0.0
        %1663 = vmatmul.mubr.f32.gmra.mxu0 %v1085
        %v1664 = vpop.f32.mrf.mxu0
        %v1665 = vadd.f32 0.0, %v1664
        %v1666 = vpop.f32.mrf.mxu0
        %1667 = vmatprep.mubr.f32.mxu0 0.0
        %1668 = vmatmul.mubr.f32.gmra.mxu0 %v1087
        %v1669 = vpop.f32.mrf.mxu0
        %v1670 = vadd.f32 0.0, %v1669
        %v1671 = vpop.f32.mrf.mxu0
        %1672 = vmatprep.mubr.f32.mxu0 0.0
        %1673 = vmatmul.mubr.f32.gmra.mxu0 %v1089
        %v1674 = vpop.f32.mrf.mxu0
        %v1675 = vadd.f32 0.0, %v1674
        %v1676 = vpop.f32.mrf.mxu0
        %1677 = vmatprep.mubr.f32.mxu0 0.0
        %1678 = vmatmul.mubr.f32.gmra.mxu0 %v1091
        %v1679 = vpop.f32.mrf.mxu0
        %v1680 = vadd.f32 0.0, %v1679
        %v1681 = vpop.f32.mrf.mxu0
        %1682 = vmatprep.mubr.f32.mxu0 0.0
        %1683 = vmatmul.mubr.f32.gmra.mxu0 %v1093
        %v1684 = vpop.f32.mrf.mxu0
        %v1685 = vadd.f32 0.0, %v1684
        %v1686 = vpop.f32.mrf.mxu0
        %1687 = vmatprep.mubr.f32.mxu0 0.0
        %1688 = vmatmul.mubr.f32.gmra.mxu0 %v1095
        %v1689 = vpop.f32.mrf.mxu0
        %v1690 = vadd.f32 0.0, %v1689
        %v1691 = vpop.f32.mrf.mxu0
        %1692 = vmatprep.mubr.f32.mxu0 0.0
        %1693 = vmatmul.mubr.f32.gmra.mxu0 %v1097
        %v1694 = vpop.f32.mrf.mxu0
        %v1695 = vadd.f32 0.0, %v1694
        %v1696 = vpop.f32.mrf.mxu0
        %1697 = vmatprep.mubr.f32.mxu0 0.0
        %1698 = vmatmul.mubr.f32.gmra.mxu0 %v1099
        %v1699 = vpop.f32.mrf.mxu0
        %v1700 = vadd.f32 0.0, %v1699
        %v1701 = vpop.f32.mrf.mxu0
        %1702 = vmatprep.mubr.f32.mxu0 0.0
        %1703 = vmatmul.mubr.f32.gmra.mxu0 %v1101
        %v1704 = vpop.f32.mrf.mxu0
        %v1705 = vadd.f32 0.0, %v1704
        %v1706 = vpop.f32.mrf.mxu0
        %1707 = vmatprep.mubr.f32.mxu0 0.0
        %1708 = vmatmul.mubr.f32.gmra.mxu0 %v1103
        %v1709 = vpop.f32.mrf.mxu0
        %v1710 = vadd.f32 0.0, %v1709
        %v1711 = vpop.f32.mrf.mxu0
        %1712 = vmatprep.mubr.f32.mxu0 0.0
        %1713 = vmatmul.mubr.f32.gmra.mxu0 %v1105
        %v1714 = vpop.f32.mrf.mxu0
        %v1715 = vadd.f32 0.0, %v1714
        %v1716 = vpop.f32.mrf.mxu0
        %1717 = vmatprep.mubr.f32.mxu0 0.0
        %1718 = vmatmul.mubr.f32.gmra.mxu0 %v1576
        %v1719 = vpop.f32.mrf.mxu0
        %v1720 = vadd.f32 0.0, %v1719
        %v1721 = vpop.f32.mrf.mxu0
        %1722 = vmatprep.mubr.f32.mxu0 0.0
        %1723 = vmatmul.mubr.f32.gmra.mxu0 %v1578
        %v1724 = vpop.f32.mrf.mxu0
        %v1725 = vadd.f32 0.0, %v1724
        %v1726 = vpop.f32.mrf.mxu0
        %1727 = vdwg.mxu0
        %v1728 = vadd.f32 %v1553, %v1650
        %v1729 = vadd.f32 %v1554, %v1655
        %v1730 = vadd.f32 %v1555, %v1660
        %v1731 = vadd.f32 %v1556, %v1665
        %v1732 = vadd.f32 %v1557, %v1670
        %v1733 = vadd.f32 %v1558, %v1675
        %v1734 = vadd.f32 %v1559, %v1680
        %v1735 = vadd.f32 %v1560, %v1685
        %v1736 = vadd.f32 %v1561, %v1690
        %v1737 = vadd.f32 %v1562, %v1695
        %v1738 = vadd.f32 %v1563, %v1700
        %v1739 = vadd.f32 %v1564, %v1705
        %v1740 = vadd.f32 %v1565, %v1710
        %v1741 = vadd.f32 %v1566, %v1715
        %v1742 = vadd.f32 %v1567, %v1720
        %v1743 = vadd.f32 %v1568, %v1725
        %v1744 = vadd.f32 %v1728, %v996
        %v1745 = vadd.f32 %v1729, %v996
        %v1746 = vadd.f32 %v1730, %v996
        %v1747 = vadd.f32 %v1731, %v996
        %v1748 = vadd.f32 %v1732, %v996
        %v1749 = vadd.f32 %v1733, %v996
        %v1750 = vadd.f32 %v1734, %v996
        %v1751 = vadd.f32 %v1735, %v996
        %v1752 = vadd.f32 %v1736, %v996
        %v1753 = vadd.f32 %v1737, %v996
        %v1754 = vadd.f32 %v1738, %v996
        %v1755 = vadd.f32 %v1739, %v996
        %v1756 = vadd.f32 %v1740, %v996
        %v1757 = vadd.f32 %v1741, %v996
        %v1758 = vadd.f32 %v1742, %v996
        %v1759 = vadd.f32 %v1743, %v996
        %s1760 = scalar_lea.vmem %s173, 128 [#allocation2]
        %1761 = vst.msk [vmem:[%s1760] sm:$0xff] %vm282, %v1744
        %1762 = vst.msk [vmem:[%s1760 + $0x8] sm:$0xff] %vm282, %v1745
        %1763 = vst.msk [vmem:[%s1760 + $0x10] sm:$0xff] %vm282, %v1746
        %1764 = vst.msk [vmem:[%s1760 + $0x18] sm:$0xff] %vm282, %v1747
        %1765 = vst.msk [vmem:[%s1760 + $0x20] sm:$0xff] %vm282, %v1748
        %1766 = vst.msk [vmem:[%s1760 + $0x28] sm:$0xff] %vm282, %v1749
        %1767 = vst.msk [vmem:[%s1760 + $0x30] sm:$0xff] %vm282, %v1750
        %1768 = vst.msk [vmem:[%s1760 + $0x38] sm:$0xff] %vm282, %v1751
        %1769 = vst.msk [vmem:[%s1760 + $0x40] sm:$0xff] %vm282, %v1752
        %1770 = vst.msk [vmem:[%s1760 + $0x48] sm:$0xff] %vm282, %v1753
        %1771 = vst.msk [vmem:[%s1760 + $0x50] sm:$0xff] %vm282, %v1754
        %1772 = vst.msk [vmem:[%s1760 + $0x58] sm:$0xff] %vm282, %v1755
        %1773 = vst.msk [vmem:[%s1760 + $0x60] sm:$0xff] %vm282, %v1756
        %1774 = vst.msk [vmem:[%s1760 + $0x68] sm:$0xff] %vm282, %v1757
        %1775 = vst.msk [vmem:[%s1760 + $0x70] sm:$0xff] %vm282, %v1758
        %1776 = vst.msk [vmem:[%s1760 + $0x78] sm:$0xff] %vm282, %v1759
        %s1777 = scalar_lea.vmem %s1, 32
        %v1778 = vld [vmem:[%s1777] sm:$0xf]
        %s1779 = scalar_lea.vmem %s1, 36
        %v1780 = vld [vmem:[%s1779] sm:$0xf]
        %v1782 = vsel %vm315, %v1780, 0
        %1784 = vmatprep.subr.mxu0 0.0
        %1785 = vmatpush1.msra.mxu0 0.0
        %1786 = vmatprep.subr.mxu0 0.0
        %1787 = vmatpush1.msra.mxu0 0.0
        %1788 = vmatprep.subr.mxu0 0.0
        %1789 = vmatpush1.msra.mxu0 0.0
        %1790 = vmatprep.subr.mxu0 0.0
        %1791 = vmatpush1.msra.mxu0 0.0
        %1792 = vmatprep.subr.mxu0 0.0
        %1793 = vmatpush1.msra.mxu0 0.0
        %1794 = vmatprep.subr.mxu0 0.0
        %1795 = vmatpush1.msra.mxu0 0.0
        %1796 = vmatprep.subr.mxu0 0.0
        %1797 = vmatpush1.msra.mxu0 0.0
        %1798 = vmatprep.subr.mxu0 0.0
        %1799 = vmatpush1.msra.mxu0 0.0
        %1800 = vmatprep.subr.mxu0 0.0
        %1801 = vmatpush1.msra.mxu0 0.0
        %1802 = vmatprep.subr.mxu0 0.0
        %1803 = vmatpush1.msra.mxu0 0.0
        %1804 = vmatprep.subr.mxu0 0.0
        %1805 = vmatpush1.msra.mxu0 0.0
        %1806 = vmatprep.subr.mxu0 0.0
        %1807 = vmatpush1.msra.mxu0 0.0
        %1808 = vmatprep.subr.mxu0 0.0
        %1809 = vmatpush1.msra.mxu0 0.0
        %1810 = vmatprep.subr.mxu0 0.0
        %1811 = vmatpush1.msra.mxu0 0.0
        %1812 = vmatprep.subr.mxu0 0.0
        %1813 = vmatpush1.msra.mxu0 0.0
        %1814 = vmatprep.subr.mxu0 0.0
        %1815 = vmatpush1.msra.mxu0 %v1782
        %1816 = vmatprep.subr.mxu0 0.0
        %1817 = vmatpush2.msra.mxu0 0.0
        %1818 = vmatprep.subr.mxu0 0.0
        %1819 = vmatpush2.msra.mxu0 0.0
        %1820 = vmatprep.subr.mxu0 0.0
        %1821 = vmatpush2.msra.mxu0 0.0
        %1822 = vmatprep.subr.mxu0 0.0
        %1823 = vmatpush2.msra.mxu0 0.0
        %1824 = vmatprep.subr.mxu0 0.0
        %1825 = vmatpush2.msra.mxu0 0.0
        %1826 = vmatprep.subr.mxu0 0.0
        %1827 = vmatpush2.msra.mxu0 0.0
        %1828 = vmatprep.subr.mxu0 0.0
        %1829 = vmatpush2.msra.mxu0 0.0
        %1830 = vmatprep.subr.mxu0 0.0
        %1831 = vmatpush2.msra.mxu0 0.0
        %1832 = vmatprep.subr.mxu0 0.0
        %1833 = vmatpush2.msra.mxu0 0.0
        %1834 = vmatprep.subr.mxu0 0.0
        %1835 = vmatpush2.msra.mxu0 0.0
        %1836 = vmatprep.subr.mxu0 0.0
        %1837 = vmatpush2.msra.mxu0 0.0
        %1838 = vmatprep.subr.mxu0 0.0
        %1839 = vmatpush2.msra.mxu0 0.0
        %1840 = vmatprep.subr.mxu0 0.0
        %1841 = vmatpush2.msra.mxu0 0.0
        %1842 = vmatprep.subr.mxu0 0.0
        %1843 = vmatpush2.msra.mxu0 0.0
        %1844 = vmatprep.subr.mxu0 0.0
        %1845 = vmatpush2.msra.mxu0 0.0
        %1846 = vmatprep.subr.mxu0 0.0
        %1847 = vmatpush2.msra.mxu0 0.0
        %1848 = vmatprep.mubr.f32.mxu0 0.0
        %1849 = vmatmul.mubr.f32.gmra.mxu0 %v287
        %v1850 = vpop.f32.mrf.mxu0
        %v1851 = vadd.f32 0.0, %v1850
        %v1852 = vpop.f32.mrf.mxu0
        %1853 = vmatprep.mubr.f32.mxu0 0.0
        %1854 = vmatmul.mubr.f32.gmra.mxu0 %v289
        %v1855 = vpop.f32.mrf.mxu0
        %v1856 = vadd.f32 0.0, %v1855
        %v1857 = vpop.f32.mrf.mxu0
        %1858 = vmatprep.mubr.f32.mxu0 0.0
        %1859 = vmatmul.mubr.f32.gmra.mxu0 %v291
        %v1860 = vpop.f32.mrf.mxu0
        %v1861 = vadd.f32 0.0, %v1860
        %v1862 = vpop.f32.mrf.mxu0
        %1863 = vmatprep.mubr.f32.mxu0 0.0
        %1864 = vmatmul.mubr.f32.gmra.mxu0 %v293
        %v1865 = vpop.f32.mrf.mxu0
        %v1866 = vadd.f32 0.0, %v1865
        %v1867 = vpop.f32.mrf.mxu0
        %1868 = vmatprep.mubr.f32.mxu0 0.0
        %1869 = vmatmul.mubr.f32.gmra.mxu0 %v295
        %v1870 = vpop.f32.mrf.mxu0
        %v1871 = vadd.f32 0.0, %v1870
        %v1872 = vpop.f32.mrf.mxu0
        %1873 = vmatprep.mubr.f32.mxu0 0.0
        %1874 = vmatmul.mubr.f32.gmra.mxu0 %v297
        %v1875 = vpop.f32.mrf.mxu0
        %v1876 = vadd.f32 0.0, %v1875
        %v1877 = vpop.f32.mrf.mxu0
        %1878 = vmatprep.mubr.f32.mxu0 0.0
        %1879 = vmatmul.mubr.f32.gmra.mxu0 %v299
        %v1880 = vpop.f32.mrf.mxu0
        %v1881 = vadd.f32 0.0, %v1880
        %v1882 = vpop.f32.mrf.mxu0
        %1883 = vmatprep.mubr.f32.mxu0 0.0
        %1884 = vmatmul.mubr.f32.gmra.mxu0 %v301
        %v1885 = vpop.f32.mrf.mxu0
        %v1886 = vadd.f32 0.0, %v1885
        %v1887 = vpop.f32.mrf.mxu0
        %1888 = vmatprep.mubr.f32.mxu0 0.0
        %1889 = vmatmul.mubr.f32.gmra.mxu0 %v303
        %v1890 = vpop.f32.mrf.mxu0
        %v1891 = vadd.f32 0.0, %v1890
        %v1892 = vpop.f32.mrf.mxu0
        %1893 = vmatprep.mubr.f32.mxu0 0.0
        %1894 = vmatmul.mubr.f32.gmra.mxu0 %v305
        %v1895 = vpop.f32.mrf.mxu0
        %v1896 = vadd.f32 0.0, %v1895
        %v1897 = vpop.f32.mrf.mxu0
        %1898 = vmatprep.mubr.f32.mxu0 0.0
        %1899 = vmatmul.mubr.f32.gmra.mxu0 %v307
        %v1900 = vpop.f32.mrf.mxu0
        %v1901 = vadd.f32 0.0, %v1900
        %v1902 = vpop.f32.mrf.mxu0
        %1903 = vmatprep.mubr.f32.mxu0 0.0
        %1904 = vmatmul.mubr.f32.gmra.mxu0 %v309
        %v1905 = vpop.f32.mrf.mxu0
        %v1906 = vadd.f32 0.0, %v1905
        %v1907 = vpop.f32.mrf.mxu0
        %1908 = vmatprep.mubr.f32.mxu0 0.0
        %1909 = vmatmul.mubr.f32.gmra.mxu0 %v311
        %v1910 = vpop.f32.mrf.mxu0
        %v1911 = vadd.f32 0.0, %v1910
        %v1912 = vpop.f32.mrf.mxu0
        %1913 = vmatprep.mubr.f32.mxu0 0.0
        %1914 = vmatmul.mubr.f32.gmra.mxu0 %v313
        %v1915 = vpop.f32.mrf.mxu0
        %v1916 = vadd.f32 0.0, %v1915
        %v1917 = vpop.f32.mrf.mxu0
        %1918 = vmatprep.mubr.f32.mxu0 0.0
        %1919 = vmatmul.mubr.f32.gmra.mxu0 %v824
        %v1920 = vpop.f32.mrf.mxu0
        %v1921 = vadd.f32 0.0, %v1920
        %v1922 = vpop.f32.mrf.mxu0
        %1923 = vmatprep.mubr.f32.mxu0 0.0
        %1924 = vmatmul.mubr.f32.gmra.mxu0 %v826
        %v1925 = vpop.f32.mrf.mxu0
        %v1926 = vadd.f32 0.0, %v1925
        %v1927 = vpop.f32.mrf.mxu0
        %1928 = vdwg.mxu0
        %v1930 = vsel %vm315, %v1778, 0
        %1932 = vmatprep.subr.mxu0 0.0
        %1933 = vmatpush1.msra.mxu0 0.0
        %1934 = vmatprep.subr.mxu0 0.0
        %1935 = vmatpush1.msra.mxu0 0.0
        %1936 = vmatprep.subr.mxu0 0.0
        %1937 = vmatpush1.msra.mxu0 0.0
        %1938 = vmatprep.subr.mxu0 0.0
        %1939 = vmatpush1.msra.mxu0 0.0
        %1940 = vmatprep.subr.mxu0 0.0
        %1941 = vmatpush1.msra.mxu0 0.0
        %1942 = vmatprep.subr.mxu0 0.0
        %1943 = vmatpush1.msra.mxu0 0.0
        %1944 = vmatprep.subr.mxu0 0.0
        %1945 = vmatpush1.msra.mxu0 0.0
        %1946 = vmatprep.subr.mxu0 0.0
        %1947 = vmatpush1.msra.mxu0 0.0
        %1948 = vmatprep.subr.mxu0 0.0
        %1949 = vmatpush1.msra.mxu0 0.0
        %1950 = vmatprep.subr.mxu0 0.0
        %1951 = vmatpush1.msra.mxu0 0.0
        %1952 = vmatprep.subr.mxu0 0.0
        %1953 = vmatpush1.msra.mxu0 0.0
        %1954 = vmatprep.subr.mxu0 0.0
        %1955 = vmatpush1.msra.mxu0 0.0
        %1956 = vmatprep.subr.mxu0 0.0
        %1957 = vmatpush1.msra.mxu0 0.0
        %1958 = vmatprep.subr.mxu0 0.0
        %1959 = vmatpush1.msra.mxu0 0.0
        %1960 = vmatprep.subr.mxu0 0.0
        %1961 = vmatpush1.msra.mxu0 0.0
        %1962 = vmatprep.subr.mxu0 0.0
        %1963 = vmatpush1.msra.mxu0 %v1930
        %1964 = vmatprep.subr.mxu0 0.0
        %1965 = vmatpush2.msra.mxu0 0.0
        %1966 = vmatprep.subr.mxu0 0.0
        %1967 = vmatpush2.msra.mxu0 0.0
        %1968 = vmatprep.subr.mxu0 0.0
        %1969 = vmatpush2.msra.mxu0 0.0
        %1970 = vmatprep.subr.mxu0 0.0
        %1971 = vmatpush2.msra.mxu0 0.0
        %1972 = vmatprep.subr.mxu0 0.0
        %1973 = vmatpush2.msra.mxu0 0.0
        %1974 = vmatprep.subr.mxu0 0.0
        %1975 = vmatpush2.msra.mxu0 0.0
        %1976 = vmatprep.subr.mxu0 0.0
        %1977 = vmatpush2.msra.mxu0 0.0
        %1978 = vmatprep.subr.mxu0 0.0
        %1979 = vmatpush2.msra.mxu0 0.0
        %1980 = vmatprep.subr.mxu0 0.0
        %1981 = vmatpush2.msra.mxu0 0.0
        %1982 = vmatprep.subr.mxu0 0.0
        %1983 = vmatpush2.msra.mxu0 0.0
        %1984 = vmatprep.subr.mxu0 0.0
        %1985 = vmatpush2.msra.mxu0 0.0
        %1986 = vmatprep.subr.mxu0 0.0
        %1987 = vmatpush2.msra.mxu0 0.0
        %1988 = vmatprep.subr.mxu0 0.0
        %1989 = vmatpush2.msra.mxu0 0.0
        %1990 = vmatprep.subr.mxu0 0.0
        %1991 = vmatpush2.msra.mxu0 0.0
        %1992 = vmatprep.subr.mxu0 0.0
        %1993 = vmatpush2.msra.mxu0 0.0
        %1994 = vmatprep.subr.mxu0 0.0
        %1995 = vmatpush2.msra.mxu0 0.0
        %1996 = vmatprep.mubr.f32.mxu0 0.0
        %1997 = vmatmul.mubr.f32.gmra.mxu0 %v468
        %v1998 = vpop.f32.mrf.mxu0
        %v1999 = vadd.f32 %v1851, %v1998
        %v2000 = vpop.f32.mrf.mxu0
        %2001 = vmatprep.mubr.f32.mxu0 0.0
        %2002 = vmatmul.mubr.f32.gmra.mxu0 %v470
        %v2003 = vpop.f32.mrf.mxu0
        %v2004 = vadd.f32 %v1856, %v2003
        %v2005 = vpop.f32.mrf.mxu0
        %2006 = vmatprep.mubr.f32.mxu0 0.0
        %2007 = vmatmul.mubr.f32.gmra.mxu0 %v472
        %v2008 = vpop.f32.mrf.mxu0
        %v2009 = vadd.f32 %v1861, %v2008
        %v2010 = vpop.f32.mrf.mxu0
        %2011 = vmatprep.mubr.f32.mxu0 0.0
        %2012 = vmatmul.mubr.f32.gmra.mxu0 %v474
        %v2013 = vpop.f32.mrf.mxu0
        %v2014 = vadd.f32 %v1866, %v2013
        %v2015 = vpop.f32.mrf.mxu0
        %2016 = vmatprep.mubr.f32.mxu0 0.0
        %2017 = vmatmul.mubr.f32.gmra.mxu0 %v476
        %v2018 = vpop.f32.mrf.mxu0
        %v2019 = vadd.f32 %v1871, %v2018
        %v2020 = vpop.f32.mrf.mxu0
        %2021 = vmatprep.mubr.f32.mxu0 0.0
        %2022 = vmatmul.mubr.f32.gmra.mxu0 %v478
        %v2023 = vpop.f32.mrf.mxu0
        %v2024 = vadd.f32 %v1876, %v2023
        %v2025 = vpop.f32.mrf.mxu0
        %2026 = vmatprep.mubr.f32.mxu0 0.0
        %2027 = vmatmul.mubr.f32.gmra.mxu0 %v480
        %v2028 = vpop.f32.mrf.mxu0
        %v2029 = vadd.f32 %v1881, %v2028
        %v2030 = vpop.f32.mrf.mxu0
        %2031 = vmatprep.mubr.f32.mxu0 0.0
        %2032 = vmatmul.mubr.f32.gmra.mxu0 %v482
        %v2033 = vpop.f32.mrf.mxu0
        %v2034 = vadd.f32 %v1886, %v2033
        %v2035 = vpop.f32.mrf.mxu0
        %2036 = vmatprep.mubr.f32.mxu0 0.0
        %2037 = vmatmul.mubr.f32.gmra.mxu0 %v484
        %v2038 = vpop.f32.mrf.mxu0
        %v2039 = vadd.f32 %v1891, %v2038
        %v2040 = vpop.f32.mrf.mxu0
        %2041 = vmatprep.mubr.f32.mxu0 0.0
        %2042 = vmatmul.mubr.f32.gmra.mxu0 %v486
        %v2043 = vpop.f32.mrf.mxu0
        %v2044 = vadd.f32 %v1896, %v2043
        %v2045 = vpop.f32.mrf.mxu0
        %2046 = vmatprep.mubr.f32.mxu0 0.0
        %2047 = vmatmul.mubr.f32.gmra.mxu0 %v488
        %v2048 = vpop.f32.mrf.mxu0
        %v2049 = vadd.f32 %v1901, %v2048
        %v2050 = vpop.f32.mrf.mxu0
        %2051 = vmatprep.mubr.f32.mxu0 0.0
        %2052 = vmatmul.mubr.f32.gmra.mxu0 %v490
        %v2053 = vpop.f32.mrf.mxu0
        %v2054 = vadd.f32 %v1906, %v2053
        %v2055 = vpop.f32.mrf.mxu0
        %2056 = vmatprep.mubr.f32.mxu0 0.0
        %2057 = vmatmul.mubr.f32.gmra.mxu0 %v492
        %v2058 = vpop.f32.mrf.mxu0
        %v2059 = vadd.f32 %v1911, %v2058
        %v2060 = vpop.f32.mrf.mxu0
        %2061 = vmatprep.mubr.f32.mxu0 0.0
        %2062 = vmatmul.mubr.f32.gmra.mxu0 %v494
        %v2063 = vpop.f32.mrf.mxu0
        %v2064 = vadd.f32 %v1916, %v2063
        %v2065 = vpop.f32.mrf.mxu0
        %2066 = vmatprep.mubr.f32.mxu0 0.0
        %2067 = vmatmul.mubr.f32.gmra.mxu0 %v647
        %v2068 = vpop.f32.mrf.mxu0
        %v2069 = vadd.f32 %v1921, %v2068
        %v2070 = vpop.f32.mrf.mxu0
        %2071 = vmatprep.mubr.f32.mxu0 0.0
        %2072 = vmatmul.mubr.f32.gmra.mxu0 %v650
        %v2073 = vpop.f32.mrf.mxu0
        %v2074 = vadd.f32 %v1926, %v2073
        %v2075 = vpop.f32.mrf.mxu0
        %2076 = vdwg.mxu0
        %s2077 = scalar_lea.vmem %s1, 40
        %v2078 = vld [vmem:[%s2077] sm:$0xf]
        %v2080 = vsel %vm282, %v210, 0
        %v2083 = vsel %vm282, %v211, 0
        %v2086 = vsel %vm315, %v2078, 0
        %2088 = vmatprep.subr.mxu0 0.0
        %2089 = vmatpush1.msra.mxu0 0.0
        %2090 = vmatprep.subr.mxu0 0.0
        %2091 = vmatpush1.msra.mxu0 0.0
        %2092 = vmatprep.subr.mxu0 0.0
        %2093 = vmatpush1.msra.mxu0 0.0
        %2094 = vmatprep.subr.mxu0 0.0
        %2095 = vmatpush1.msra.mxu0 0.0
        %2096 = vmatprep.subr.mxu0 0.0
        %2097 = vmatpush1.msra.mxu0 0.0
        %2098 = vmatprep.subr.mxu0 0.0
        %2099 = vmatpush1.msra.mxu0 0.0
        %2100 = vmatprep.subr.mxu0 0.0
        %2101 = vmatpush1.msra.mxu0 0.0
        %2102 = vmatprep.subr.mxu0 0.0
        %2103 = vmatpush1.msra.mxu0 0.0
        %2104 = vmatprep.subr.mxu0 0.0
        %2105 = vmatpush1.msra.mxu0 0.0
        %2106 = vmatprep.subr.mxu0 0.0
        %2107 = vmatpush1.msra.mxu0 0.0
        %2108 = vmatprep.subr.mxu0 0.0
        %2109 = vmatpush1.msra.mxu0 0.0
        %2110 = vmatprep.subr.mxu0 0.0
        %2111 = vmatpush1.msra.mxu0 0.0
        %2112 = vmatprep.subr.mxu0 0.0
        %2113 = vmatpush1.msra.mxu0 0.0
        %2114 = vmatprep.subr.mxu0 0.0
        %2115 = vmatpush1.msra.mxu0 0.0
        %2116 = vmatprep.subr.mxu0 0.0
        %2117 = vmatpush1.msra.mxu0 0.0
        %2118 = vmatprep.subr.mxu0 0.0
        %2119 = vmatpush1.msra.mxu0 %v2086
        %2120 = vmatprep.subr.mxu0 0.0
        %2121 = vmatpush2.msra.mxu0 0.0
        %2122 = vmatprep.subr.mxu0 0.0
        %2123 = vmatpush2.msra.mxu0 0.0
        %2124 = vmatprep.subr.mxu0 0.0
        %2125 = vmatpush2.msra.mxu0 0.0
        %2126 = vmatprep.subr.mxu0 0.0
        %2127 = vmatpush2.msra.mxu0 0.0
        %2128 = vmatprep.subr.mxu0 0.0
        %2129 = vmatpush2.msra.mxu0 0.0
        %2130 = vmatprep.subr.mxu0 0.0
        %2131 = vmatpush2.msra.mxu0 0.0
        %2132 = vmatprep.subr.mxu0 0.0
        %2133 = vmatpush2.msra.mxu0 0.0
        %2134 = vmatprep.subr.mxu0 0.0
        %2135 = vmatpush2.msra.mxu0 0.0
        %2136 = vmatprep.subr.mxu0 0.0
        %2137 = vmatpush2.msra.mxu0 0.0
        %2138 = vmatprep.subr.mxu0 0.0
        %2139 = vmatpush2.msra.mxu0 0.0
        %2140 = vmatprep.subr.mxu0 0.0
        %2141 = vmatpush2.msra.mxu0 0.0
        %2142 = vmatprep.subr.mxu0 0.0
        %2143 = vmatpush2.msra.mxu0 0.0
        %2144 = vmatprep.subr.mxu0 0.0
        %2145 = vmatpush2.msra.mxu0 0.0
        %2146 = vmatprep.subr.mxu0 0.0
        %2147 = vmatpush2.msra.mxu0 0.0
        %2148 = vmatprep.subr.mxu0 0.0
        %2149 = vmatpush2.msra.mxu0 0.0
        %2150 = vmatprep.subr.mxu0 0.0
        %2151 = vmatpush2.msra.mxu0 0.0
        %2152 = vmatprep.mubr.f32.mxu0 0.0
        %2153 = vmatmul.mubr.f32.gmra.mxu0 %v472
        %v2154 = vpop.f32.mrf.mxu0
        %v2155 = vadd.f32 0.0, %v2154
        %v2156 = vpop.f32.mrf.mxu0
        %2157 = vmatprep.mubr.f32.mxu0 0.0
        %2158 = vmatmul.mubr.f32.gmra.mxu0 %v474
        %v2159 = vpop.f32.mrf.mxu0
        %v2160 = vadd.f32 0.0, %v2159
        %v2161 = vpop.f32.mrf.mxu0
        %2162 = vmatprep.mubr.f32.mxu0 0.0
        %2163 = vmatmul.mubr.f32.gmra.mxu0 %v476
        %v2164 = vpop.f32.mrf.mxu0
        %v2165 = vadd.f32 0.0, %v2164
        %v2166 = vpop.f32.mrf.mxu0
        %2167 = vmatprep.mubr.f32.mxu0 0.0
        %2168 = vmatmul.mubr.f32.gmra.mxu0 %v478
        %v2169 = vpop.f32.mrf.mxu0
        %v2170 = vadd.f32 0.0, %v2169
        %v2171 = vpop.f32.mrf.mxu0
        %2172 = vmatprep.mubr.f32.mxu0 0.0
        %2173 = vmatmul.mubr.f32.gmra.mxu0 %v480
        %v2174 = vpop.f32.mrf.mxu0
        %v2175 = vadd.f32 0.0, %v2174
        %v2176 = vpop.f32.mrf.mxu0
        %2177 = vmatprep.mubr.f32.mxu0 0.0
        %2178 = vmatmul.mubr.f32.gmra.mxu0 %v482
        %v2179 = vpop.f32.mrf.mxu0
        %v2180 = vadd.f32 0.0, %v2179
        %v2181 = vpop.f32.mrf.mxu0
        %2182 = vmatprep.mubr.f32.mxu0 0.0
        %2183 = vmatmul.mubr.f32.gmra.mxu0 %v484
        %v2184 = vpop.f32.mrf.mxu0
        %v2185 = vadd.f32 0.0, %v2184
        %v2186 = vpop.f32.mrf.mxu0
        %2187 = vmatprep.mubr.f32.mxu0 0.0
        %2188 = vmatmul.mubr.f32.gmra.mxu0 %v486
        %v2189 = vpop.f32.mrf.mxu0
        %v2190 = vadd.f32 0.0, %v2189
        %v2191 = vpop.f32.mrf.mxu0
        %2192 = vmatprep.mubr.f32.mxu0 0.0
        %2193 = vmatmul.mubr.f32.gmra.mxu0 %v488
        %v2194 = vpop.f32.mrf.mxu0
        %v2195 = vadd.f32 0.0, %v2194
        %v2196 = vpop.f32.mrf.mxu0
        %2197 = vmatprep.mubr.f32.mxu0 0.0
        %2198 = vmatmul.mubr.f32.gmra.mxu0 %v490
        %v2199 = vpop.f32.mrf.mxu0
        %v2200 = vadd.f32 0.0, %v2199
        %v2201 = vpop.f32.mrf.mxu0
        %2202 = vmatprep.mubr.f32.mxu0 0.0
        %2203 = vmatmul.mubr.f32.gmra.mxu0 %v492
        %v2204 = vpop.f32.mrf.mxu0
        %v2205 = vadd.f32 0.0, %v2204
        %v2206 = vpop.f32.mrf.mxu0
        %2207 = vmatprep.mubr.f32.mxu0 0.0
        %2208 = vmatmul.mubr.f32.gmra.mxu0 %v494
        %v2209 = vpop.f32.mrf.mxu0
        %v2210 = vadd.f32 0.0, %v2209
        %v2211 = vpop.f32.mrf.mxu0
        %2212 = vmatprep.mubr.f32.mxu0 0.0
        %2213 = vmatmul.mubr.f32.gmra.mxu0 %v647
        %v2214 = vpop.f32.mrf.mxu0
        %v2215 = vadd.f32 0.0, %v2214
        %v2216 = vpop.f32.mrf.mxu0
        %2217 = vmatprep.mubr.f32.mxu0 0.0
        %2218 = vmatmul.mubr.f32.gmra.mxu0 %v650
        %v2219 = vpop.f32.mrf.mxu0
        %v2220 = vadd.f32 0.0, %v2219
        %v2221 = vpop.f32.mrf.mxu0
        %2222 = vmatprep.mubr.f32.mxu0 0.0
        %2223 = vmatmul.mubr.f32.gmra.mxu0 %v2080
        %v2224 = vpop.f32.mrf.mxu0
        %v2225 = vadd.f32 0.0, %v2224
        %v2226 = vpop.f32.mrf.mxu0
        %2227 = vmatprep.mubr.f32.mxu0 0.0
        %2228 = vmatmul.mubr.f32.gmra.mxu0 %v2083
        %v2229 = vpop.f32.mrf.mxu0
        %v2230 = vadd.f32 0.0, %v2229
        %v2231 = vpop.f32.mrf.mxu0
        %2232 = vdwg.mxu0
        %v2233 = vadd.f32 %v1999, %v2155
        %v2234 = vadd.f32 %v2004, %v2160
        %v2235 = vadd.f32 %v2009, %v2165
        %v2236 = vadd.f32 %v2014, %v2170
        %v2237 = vadd.f32 %v2019, %v2175
        %v2238 = vadd.f32 %v2024, %v2180
        %v2239 = vadd.f32 %v2029, %v2185
        %v2240 = vadd.f32 %v2034, %v2190
        %v2241 = vadd.f32 %v2039, %v2195
        %v2242 = vadd.f32 %v2044, %v2200
        %v2243 = vadd.f32 %v2049, %v2205
        %v2244 = vadd.f32 %v2054, %v2210
        %v2245 = vadd.f32 %v2059, %v2215
        %v2246 = vadd.f32 %v2064, %v2220
        %v2247 = vadd.f32 %v2069, %v2225
        %v2248 = vadd.f32 %v2074, %v2230
        %s2249 = scalar_lea.vmem %s1, 44
        %v2250 = vld [vmem:[%s2249] sm:$0xf]
        %v2252 = vrot.slane %v210, 1
        %v2253 = vrot.slane %v211, 1
        %v2254 = vsel %vm241, %v2252, %v2253
        %v2255 = vrot.slane %v212, 1
        %v2256 = vsel %vm241, %v2253, %v2255
        %v2257 = vsel %vm282, %v2254, 0
        %v2259 = vsel %vm282, %v2256, 0
        %v2262 = vsel %vm315, %v2250, 0
        %2264 = vmatprep.subr.mxu0 0.0
        %2265 = vmatpush1.msra.mxu0 0.0
        %2266 = vmatprep.subr.mxu0 0.0
        %2267 = vmatpush1.msra.mxu0 0.0
        %2268 = vmatprep.subr.mxu0 0.0
        %2269 = vmatpush1.msra.mxu0 0.0
        %2270 = vmatprep.subr.mxu0 0.0
        %2271 = vmatpush1.msra.mxu0 0.0
        %2272 = vmatprep.subr.mxu0 0.0
        %2273 = vmatpush1.msra.mxu0 0.0
        %2274 = vmatprep.subr.mxu0 0.0
        %2275 = vmatpush1.msra.mxu0 0.0
        %2276 = vmatprep.subr.mxu0 0.0
        %2277 = vmatpush1.msra.mxu0 0.0
        %2278 = vmatprep.subr.mxu0 0.0
        %2279 = vmatpush1.msra.mxu0 0.0
        %2280 = vmatprep.subr.mxu0 0.0
        %2281 = vmatpush1.msra.mxu0 0.0
        %2282 = vmatprep.subr.mxu0 0.0
        %2283 = vmatpush1.msra.mxu0 0.0
        %2284 = vmatprep.subr.mxu0 0.0
        %2285 = vmatpush1.msra.mxu0 0.0
        %2286 = vmatprep.subr.mxu0 0.0
        %2287 = vmatpush1.msra.mxu0 0.0
        %2288 = vmatprep.subr.mxu0 0.0
        %2289 = vmatpush1.msra.mxu0 0.0
        %2290 = vmatprep.subr.mxu0 0.0
        %2291 = vmatpush1.msra.mxu0 0.0
        %2292 = vmatprep.subr.mxu0 0.0
        %2293 = vmatpush1.msra.mxu0 0.0
        %2294 = vmatprep.subr.mxu0 0.0
        %2295 = vmatpush1.msra.mxu0 %v2262
        %2296 = vmatprep.subr.mxu0 0.0
        %2297 = vmatpush2.msra.mxu0 0.0
        %2298 = vmatprep.subr.mxu0 0.0
        %2299 = vmatpush2.msra.mxu0 0.0
        %2300 = vmatprep.subr.mxu0 0.0
        %2301 = vmatpush2.msra.mxu0 0.0
        %2302 = vmatprep.subr.mxu0 0.0
        %2303 = vmatpush2.msra.mxu0 0.0
        %2304 = vmatprep.subr.mxu0 0.0
        %2305 = vmatpush2.msra.mxu0 0.0
        %2306 = vmatprep.subr.mxu0 0.0
        %2307 = vmatpush2.msra.mxu0 0.0
        %2308 = vmatprep.subr.mxu0 0.0
        %2309 = vmatpush2.msra.mxu0 0.0
        %2310 = vmatprep.subr.mxu0 0.0
        %2311 = vmatpush2.msra.mxu0 0.0
        %2312 = vmatprep.subr.mxu0 0.0
        %2313 = vmatpush2.msra.mxu0 0.0
        %2314 = vmatprep.subr.mxu0 0.0
        %2315 = vmatpush2.msra.mxu0 0.0
        %2316 = vmatprep.subr.mxu0 0.0
        %2317 = vmatpush2.msra.mxu0 0.0
        %2318 = vmatprep.subr.mxu0 0.0
        %2319 = vmatpush2.msra.mxu0 0.0
        %2320 = vmatprep.subr.mxu0 0.0
        %2321 = vmatpush2.msra.mxu0 0.0
        %2322 = vmatprep.subr.mxu0 0.0
        %2323 = vmatpush2.msra.mxu0 0.0
        %2324 = vmatprep.subr.mxu0 0.0
        %2325 = vmatpush2.msra.mxu0 0.0
        %2326 = vmatprep.subr.mxu0 0.0
        %2327 = vmatpush2.msra.mxu0 0.0
        %2328 = vmatprep.mubr.f32.mxu0 0.0
        %2329 = vmatmul.mubr.f32.gmra.mxu0 %v291
        %v2330 = vpop.f32.mrf.mxu0
        %v2331 = vadd.f32 0.0, %v2330
        %v2332 = vpop.f32.mrf.mxu0
        %2333 = vmatprep.mubr.f32.mxu0 0.0
        %2334 = vmatmul.mubr.f32.gmra.mxu0 %v293
        %v2335 = vpop.f32.mrf.mxu0
        %v2336 = vadd.f32 0.0, %v2335
        %v2337 = vpop.f32.mrf.mxu0
        %2338 = vmatprep.mubr.f32.mxu0 0.0
        %2339 = vmatmul.mubr.f32.gmra.mxu0 %v295
        %v2340 = vpop.f32.mrf.mxu0
        %v2341 = vadd.f32 0.0, %v2340
        %v2342 = vpop.f32.mrf.mxu0
        %2343 = vmatprep.mubr.f32.mxu0 0.0
        %2344 = vmatmul.mubr.f32.gmra.mxu0 %v297
        %v2345 = vpop.f32.mrf.mxu0
        %v2346 = vadd.f32 0.0, %v2345
        %v2347 = vpop.f32.mrf.mxu0
        %2348 = vmatprep.mubr.f32.mxu0 0.0
        %2349 = vmatmul.mubr.f32.gmra.mxu0 %v299
        %v2350 = vpop.f32.mrf.mxu0
        %v2351 = vadd.f32 0.0, %v2350
        %v2352 = vpop.f32.mrf.mxu0
        %2353 = vmatprep.mubr.f32.mxu0 0.0
        %2354 = vmatmul.mubr.f32.gmra.mxu0 %v301
        %v2355 = vpop.f32.mrf.mxu0
        %v2356 = vadd.f32 0.0, %v2355
        %v2357 = vpop.f32.mrf.mxu0
        %2358 = vmatprep.mubr.f32.mxu0 0.0
        %2359 = vmatmul.mubr.f32.gmra.mxu0 %v303
        %v2360 = vpop.f32.mrf.mxu0
        %v2361 = vadd.f32 0.0, %v2360
        %v2362 = vpop.f32.mrf.mxu0
        %2363 = vmatprep.mubr.f32.mxu0 0.0
        %2364 = vmatmul.mubr.f32.gmra.mxu0 %v305
        %v2365 = vpop.f32.mrf.mxu0
        %v2366 = vadd.f32 0.0, %v2365
        %v2367 = vpop.f32.mrf.mxu0
        %2368 = vmatprep.mubr.f32.mxu0 0.0
        %2369 = vmatmul.mubr.f32.gmra.mxu0 %v307
        %v2370 = vpop.f32.mrf.mxu0
        %v2371 = vadd.f32 0.0, %v2370
        %v2372 = vpop.f32.mrf.mxu0
        %2373 = vmatprep.mubr.f32.mxu0 0.0
        %2374 = vmatmul.mubr.f32.gmra.mxu0 %v309
        %v2375 = vpop.f32.mrf.mxu0
        %v2376 = vadd.f32 0.0, %v2375
        %v2377 = vpop.f32.mrf.mxu0
        %2378 = vmatprep.mubr.f32.mxu0 0.0
        %2379 = vmatmul.mubr.f32.gmra.mxu0 %v311
        %v2380 = vpop.f32.mrf.mxu0
        %v2381 = vadd.f32 0.0, %v2380
        %v2382 = vpop.f32.mrf.mxu0
        %2383 = vmatprep.mubr.f32.mxu0 0.0
        %2384 = vmatmul.mubr.f32.gmra.mxu0 %v313
        %v2385 = vpop.f32.mrf.mxu0
        %v2386 = vadd.f32 0.0, %v2385
        %v2387 = vpop.f32.mrf.mxu0
        %2388 = vmatprep.mubr.f32.mxu0 0.0
        %2389 = vmatmul.mubr.f32.gmra.mxu0 %v824
        %v2390 = vpop.f32.mrf.mxu0
        %v2391 = vadd.f32 0.0, %v2390
        %v2392 = vpop.f32.mrf.mxu0
        %2393 = vmatprep.mubr.f32.mxu0 0.0
        %2394 = vmatmul.mubr.f32.gmra.mxu0 %v826
        %v2395 = vpop.f32.mrf.mxu0
        %v2396 = vadd.f32 0.0, %v2395
        %v2397 = vpop.f32.mrf.mxu0
        %2398 = vmatprep.mubr.f32.mxu0 0.0
        %2399 = vmatmul.mubr.f32.gmra.mxu0 %v2257
        %v2400 = vpop.f32.mrf.mxu0
        %v2401 = vadd.f32 0.0, %v2400
        %v2402 = vpop.f32.mrf.mxu0
        %2403 = vmatprep.mubr.f32.mxu0 0.0
        %2404 = vmatmul.mubr.f32.gmra.mxu0 %v2259
        %v2405 = vpop.f32.mrf.mxu0
        %v2406 = vadd.f32 0.0, %v2405
        %v2407 = vpop.f32.mrf.mxu0
        %2408 = vdwg.mxu0
        %v2409 = vadd.f32 %v2233, %v2331
        %v2410 = vadd.f32 %v2234, %v2336
        %v2411 = vadd.f32 %v2235, %v2341
        %v2412 = vadd.f32 %v2236, %v2346
        %v2413 = vadd.f32 %v2237, %v2351
        %v2414 = vadd.f32 %v2238, %v2356
        %v2415 = vadd.f32 %v2239, %v2361
        %v2416 = vadd.f32 %v2240, %v2366
        %v2417 = vadd.f32 %v2241, %v2371
        %v2418 = vadd.f32 %v2242, %v2376
        %v2419 = vadd.f32 %v2243, %v2381
        %v2420 = vadd.f32 %v2244, %v2386
        %v2421 = vadd.f32 %v2245, %v2391
        %v2422 = vadd.f32 %v2246, %v2396
        %v2423 = vadd.f32 %v2247, %v2401
        %v2424 = vadd.f32 %v2248, %v2406
        %v2425 = vadd.f32 %v2409, %v996
        %v2426 = vadd.f32 %v2410, %v996
        %v2427 = vadd.f32 %v2411, %v996
        %v2428 = vadd.f32 %v2412, %v996
        %v2429 = vadd.f32 %v2413, %v996
        %v2430 = vadd.f32 %v2414, %v996
        %v2431 = vadd.f32 %v2415, %v996
        %v2432 = vadd.f32 %v2416, %v996
        %v2433 = vadd.f32 %v2417, %v996
        %v2434 = vadd.f32 %v2418, %v996
        %v2435 = vadd.f32 %v2419, %v996
        %v2436 = vadd.f32 %v2420, %v996
        %v2437 = vadd.f32 %v2421, %v996
        %v2438 = vadd.f32 %v2422, %v996
        %v2439 = vadd.f32 %v2423, %v996
        %v2440 = vadd.f32 %v2424, %v996
        %s2441 = scalar_lea.vmem %s173, 256 [#allocation2]
        %2442 = vst.msk [vmem:[%s2441] sm:$0xff] %vm282, %v2425
        %2443 = vst.msk [vmem:[%s2441 + $0x8] sm:$0xff] %vm282, %v2426
        %2444 = vst.msk [vmem:[%s2441 + $0x10] sm:$0xff] %vm282, %v2427
        %2445 = vst.msk [vmem:[%s2441 + $0x18] sm:$0xff] %vm282, %v2428
        %2446 = vst.msk [vmem:[%s2441 + $0x20] sm:$0xff] %vm282, %v2429
        %2447 = vst.msk [vmem:[%s2441 + $0x28] sm:$0xff] %vm282, %v2430
        %2448 = vst.msk [vmem:[%s2441 + $0x30] sm:$0xff] %vm282, %v2431
        %2449 = vst.msk [vmem:[%s2441 + $0x38] sm:$0xff] %vm282, %v2432
        %2450 = vst.msk [vmem:[%s2441 + $0x40] sm:$0xff] %vm282, %v2433
        %2451 = vst.msk [vmem:[%s2441 + $0x48] sm:$0xff] %vm282, %v2434
        %2452 = vst.msk [vmem:[%s2441 + $0x50] sm:$0xff] %vm282, %v2435
        %2453 = vst.msk [vmem:[%s2441 + $0x58] sm:$0xff] %vm282, %v2436
        %2454 = vst.msk [vmem:[%s2441 + $0x60] sm:$0xff] %vm282, %v2437
        %2455 = vst.msk [vmem:[%s2441 + $0x68] sm:$0xff] %vm282, %v2438
        %2456 = vst.msk [vmem:[%s2441 + $0x70] sm:$0xff] %vm282, %v2439
        %2457 = vst.msk [vmem:[%s2441 + $0x78] sm:$0xff] %vm282, %v2440
        %s2458 = scalar_lea.vmem %s1, 48
        %v2459 = vld [vmem:[%s2458] sm:$0xf]
        %s2460 = scalar_lea.vmem %s1, 52
        %v2461 = vld [vmem:[%s2460] sm:$0xf]
        %v2463 = vsel %vm315, %v2461, 0
        %2465 = vmatprep.subr.mxu0 0.0
        %2466 = vmatpush1.msra.mxu0 0.0
        %2467 = vmatprep.subr.mxu0 0.0
        %2468 = vmatpush1.msra.mxu0 0.0
        %2469 = vmatprep.subr.mxu0 0.0
        %2470 = vmatpush1.msra.mxu0 0.0
        %2471 = vmatprep.subr.mxu0 0.0
        %2472 = vmatpush1.msra.mxu0 0.0
        %2473 = vmatprep.subr.mxu0 0.0
        %2474 = vmatpush1.msra.mxu0 0.0
        %2475 = vmatprep.subr.mxu0 0.0
        %2476 = vmatpush1.msra.mxu0 0.0
        %2477 = vmatprep.subr.mxu0 0.0
        %2478 = vmatpush1.msra.mxu0 0.0
        %2479 = vmatprep.subr.mxu0 0.0
        %2480 = vmatpush1.msra.mxu0 0.0
        %2481 = vmatprep.subr.mxu0 0.0
        %2482 = vmatpush1.msra.mxu0 0.0
        %2483 = vmatprep.subr.mxu0 0.0
        %2484 = vmatpush1.msra.mxu0 0.0
        %2485 = vmatprep.subr.mxu0 0.0
        %2486 = vmatpush1.msra.mxu0 0.0
        %2487 = vmatprep.subr.mxu0 0.0
        %2488 = vmatpush1.msra.mxu0 0.0
        %2489 = vmatprep.subr.mxu0 0.0
        %2490 = vmatpush1.msra.mxu0 0.0
        %2491 = vmatprep.subr.mxu0 0.0
        %2492 = vmatpush1.msra.mxu0 0.0
        %2493 = vmatprep.subr.mxu0 0.0
        %2494 = vmatpush1.msra.mxu0 0.0
        %2495 = vmatprep.subr.mxu0 0.0
        %2496 = vmatpush1.msra.mxu0 %v2463
        %2497 = vmatprep.subr.mxu0 0.0
        %2498 = vmatpush2.msra.mxu0 0.0
        %2499 = vmatprep.subr.mxu0 0.0
        %2500 = vmatpush2.msra.mxu0 0.0
        %2501 = vmatprep.subr.mxu0 0.0
        %2502 = vmatpush2.msra.mxu0 0.0
        %2503 = vmatprep.subr.mxu0 0.0
        %2504 = vmatpush2.msra.mxu0 0.0
        %2505 = vmatprep.subr.mxu0 0.0
        %2506 = vmatpush2.msra.mxu0 0.0
        %2507 = vmatprep.subr.mxu0 0.0
        %2508 = vmatpush2.msra.mxu0 0.0
        %2509 = vmatprep.subr.mxu0 0.0
        %2510 = vmatpush2.msra.mxu0 0.0
        %2511 = vmatprep.subr.mxu0 0.0
        %2512 = vmatpush2.msra.mxu0 0.0
        %2513 = vmatprep.subr.mxu0 0.0
        %2514 = vmatpush2.msra.mxu0 0.0
        %2515 = vmatprep.subr.mxu0 0.0
        %2516 = vmatpush2.msra.mxu0 0.0
        %2517 = vmatprep.subr.mxu0 0.0
        %2518 = vmatpush2.msra.mxu0 0.0
        %2519 = vmatprep.subr.mxu0 0.0
        %2520 = vmatpush2.msra.mxu0 0.0
        %2521 = vmatprep.subr.mxu0 0.0
        %2522 = vmatpush2.msra.mxu0 0.0
        %2523 = vmatprep.subr.mxu0 0.0
        %2524 = vmatpush2.msra.mxu0 0.0
        %2525 = vmatprep.subr.mxu0 0.0
        %2526 = vmatpush2.msra.mxu0 0.0
        %2527 = vmatprep.subr.mxu0 0.0
        %2528 = vmatpush2.msra.mxu0 0.0
        %2529 = vmatprep.mubr.f32.mxu0 0.0
        %2530 = vmatmul.mubr.f32.gmra.mxu0 %v1079
        %v2531 = vpop.f32.mrf.mxu0
        %v2532 = vadd.f32 0.0, %v2531
        %v2533 = vpop.f32.mrf.mxu0
        %2534 = vmatprep.mubr.f32.mxu0 0.0
        %2535 = vmatmul.mubr.f32.gmra.mxu0 %v1081
        %v2536 = vpop.f32.mrf.mxu0
        %v2537 = vadd.f32 0.0, %v2536
        %v2538 = vpop.f32.mrf.mxu0
        %2539 = vmatprep.mubr.f32.mxu0 0.0
        %2540 = vmatmul.mubr.f32.gmra.mxu0 %v1083
        %v2541 = vpop.f32.mrf.mxu0
        %v2542 = vadd.f32 0.0, %v2541
        %v2543 = vpop.f32.mrf.mxu0
        %2544 = vmatprep.mubr.f32.mxu0 0.0
        %2545 = vmatmul.mubr.f32.gmra.mxu0 %v1085
        %v2546 = vpop.f32.mrf.mxu0
        %v2547 = vadd.f32 0.0, %v2546
        %v2548 = vpop.f32.mrf.mxu0
        %2549 = vmatprep.mubr.f32.mxu0 0.0
        %2550 = vmatmul.mubr.f32.gmra.mxu0 %v1087
        %v2551 = vpop.f32.mrf.mxu0
        %v2552 = vadd.f32 0.0, %v2551
        %v2553 = vpop.f32.mrf.mxu0
        %2554 = vmatprep.mubr.f32.mxu0 0.0
        %2555 = vmatmul.mubr.f32.gmra.mxu0 %v1089
        %v2556 = vpop.f32.mrf.mxu0
        %v2557 = vadd.f32 0.0, %v2556
        %v2558 = vpop.f32.mrf.mxu0
        %2559 = vmatprep.mubr.f32.mxu0 0.0
        %2560 = vmatmul.mubr.f32.gmra.mxu0 %v1091
        %v2561 = vpop.f32.mrf.mxu0
        %v2562 = vadd.f32 0.0, %v2561
        %v2563 = vpop.f32.mrf.mxu0
        %2564 = vmatprep.mubr.f32.mxu0 0.0
        %2565 = vmatmul.mubr.f32.gmra.mxu0 %v1093
        %v2566 = vpop.f32.mrf.mxu0
        %v2567 = vadd.f32 0.0, %v2566
        %v2568 = vpop.f32.mrf.mxu0
        %2569 = vmatprep.mubr.f32.mxu0 0.0
        %2570 = vmatmul.mubr.f32.gmra.mxu0 %v1095
        %v2571 = vpop.f32.mrf.mxu0
        %v2572 = vadd.f32 0.0, %v2571
        %v2573 = vpop.f32.mrf.mxu0
        %2574 = vmatprep.mubr.f32.mxu0 0.0
        %2575 = vmatmul.mubr.f32.gmra.mxu0 %v1097
        %v2576 = vpop.f32.mrf.mxu0
        %v2577 = vadd.f32 0.0, %v2576
        %v2578 = vpop.f32.mrf.mxu0
        %2579 = vmatprep.mubr.f32.mxu0 0.0
        %2580 = vmatmul.mubr.f32.gmra.mxu0 %v1099
        %v2581 = vpop.f32.mrf.mxu0
        %v2582 = vadd.f32 0.0, %v2581
        %v2583 = vpop.f32.mrf.mxu0
        %2584 = vmatprep.mubr.f32.mxu0 0.0
        %2585 = vmatmul.mubr.f32.gmra.mxu0 %v1101
        %v2586 = vpop.f32.mrf.mxu0
        %v2587 = vadd.f32 0.0, %v2586
        %v2588 = vpop.f32.mrf.mxu0
        %2589 = vmatprep.mubr.f32.mxu0 0.0
        %2590 = vmatmul.mubr.f32.gmra.mxu0 %v1103
        %v2591 = vpop.f32.mrf.mxu0
        %v2592 = vadd.f32 0.0, %v2591
        %v2593 = vpop.f32.mrf.mxu0
        %2594 = vmatprep.mubr.f32.mxu0 0.0
        %2595 = vmatmul.mubr.f32.gmra.mxu0 %v1105
        %v2596 = vpop.f32.mrf.mxu0
        %v2597 = vadd.f32 0.0, %v2596
        %v2598 = vpop.f32.mrf.mxu0
        %2599 = vmatprep.mubr.f32.mxu0 0.0
        %2600 = vmatmul.mubr.f32.gmra.mxu0 %v1576
        %v2601 = vpop.f32.mrf.mxu0
        %v2602 = vadd.f32 0.0, %v2601
        %v2603 = vpop.f32.mrf.mxu0
        %2604 = vmatprep.mubr.f32.mxu0 0.0
        %2605 = vmatmul.mubr.f32.gmra.mxu0 %v1578
        %v2606 = vpop.f32.mrf.mxu0
        %v2607 = vadd.f32 0.0, %v2606
        %v2608 = vpop.f32.mrf.mxu0
        %2609 = vdwg.mxu0
        %v2611 = vsel %vm315, %v2459, 0
        %2613 = vmatprep.subr.mxu0 0.0
        %2614 = vmatpush1.msra.mxu0 0.0
        %2615 = vmatprep.subr.mxu0 0.0
        %2616 = vmatpush1.msra.mxu0 0.0
        %2617 = vmatprep.subr.mxu0 0.0
        %2618 = vmatpush1.msra.mxu0 0.0
        %2619 = vmatprep.subr.mxu0 0.0
        %2620 = vmatpush1.msra.mxu0 0.0
        %2621 = vmatprep.subr.mxu0 0.0
        %2622 = vmatpush1.msra.mxu0 0.0
        %2623 = vmatprep.subr.mxu0 0.0
        %2624 = vmatpush1.msra.mxu0 0.0
        %2625 = vmatprep.subr.mxu0 0.0
        %2626 = vmatpush1.msra.mxu0 0.0
        %2627 = vmatprep.subr.mxu0 0.0
        %2628 = vmatpush1.msra.mxu0 0.0
        %2629 = vmatprep.subr.mxu0 0.0
        %2630 = vmatpush1.msra.mxu0 0.0
        %2631 = vmatprep.subr.mxu0 0.0
        %2632 = vmatpush1.msra.mxu0 0.0
        %2633 = vmatprep.subr.mxu0 0.0
        %2634 = vmatpush1.msra.mxu0 0.0
        %2635 = vmatprep.subr.mxu0 0.0
        %2636 = vmatpush1.msra.mxu0 0.0
        %2637 = vmatprep.subr.mxu0 0.0
        %2638 = vmatpush1.msra.mxu0 0.0
        %2639 = vmatprep.subr.mxu0 0.0
        %2640 = vmatpush1.msra.mxu0 0.0
        %2641 = vmatprep.subr.mxu0 0.0
        %2642 = vmatpush1.msra.mxu0 0.0
        %2643 = vmatprep.subr.mxu0 0.0
        %2644 = vmatpush1.msra.mxu0 %v2611
        %2645 = vmatprep.subr.mxu0 0.0
        %2646 = vmatpush2.msra.mxu0 0.0
        %2647 = vmatprep.subr.mxu0 0.0
        %2648 = vmatpush2.msra.mxu0 0.0
        %2649 = vmatprep.subr.mxu0 0.0
        %2650 = vmatpush2.msra.mxu0 0.0
        %2651 = vmatprep.subr.mxu0 0.0
        %2652 = vmatpush2.msra.mxu0 0.0
        %2653 = vmatprep.subr.mxu0 0.0
        %2654 = vmatpush2.msra.mxu0 0.0
        %2655 = vmatprep.subr.mxu0 0.0
        %2656 = vmatpush2.msra.mxu0 0.0
        %2657 = vmatprep.subr.mxu0 0.0
        %2658 = vmatpush2.msra.mxu0 0.0
        %2659 = vmatprep.subr.mxu0 0.0
        %2660 = vmatpush2.msra.mxu0 0.0
        %2661 = vmatprep.subr.mxu0 0.0
        %2662 = vmatpush2.msra.mxu0 0.0
        %2663 = vmatprep.subr.mxu0 0.0
        %2664 = vmatpush2.msra.mxu0 0.0
        %2665 = vmatprep.subr.mxu0 0.0
        %2666 = vmatpush2.msra.mxu0 0.0
        %2667 = vmatprep.subr.mxu0 0.0
        %2668 = vmatpush2.msra.mxu0 0.0
        %2669 = vmatprep.subr.mxu0 0.0
        %2670 = vmatpush2.msra.mxu0 0.0
        %2671 = vmatprep.subr.mxu0 0.0
        %2672 = vmatpush2.msra.mxu0 0.0
        %2673 = vmatprep.subr.mxu0 0.0
        %2674 = vmatpush2.msra.mxu0 0.0
        %2675 = vmatprep.subr.mxu0 0.0
        %2676 = vmatpush2.msra.mxu0 0.0
        %2677 = vmatprep.mubr.f32.mxu0 0.0
        %2678 = vmatmul.mubr.f32.gmra.mxu0 %v287
        %v2679 = vpop.f32.mrf.mxu0
        %v2680 = vadd.f32 %v2532, %v2679
        %v2681 = vpop.f32.mrf.mxu0
        %2682 = vmatprep.mubr.f32.mxu0 0.0
        %2683 = vmatmul.mubr.f32.gmra.mxu0 %v289
        %v2684 = vpop.f32.mrf.mxu0
        %v2685 = vadd.f32 %v2537, %v2684
        %v2686 = vpop.f32.mrf.mxu0
        %2687 = vmatprep.mubr.f32.mxu0 0.0
        %2688 = vmatmul.mubr.f32.gmra.mxu0 %v291
        %v2689 = vpop.f32.mrf.mxu0
        %v2690 = vadd.f32 %v2542, %v2689
        %v2691 = vpop.f32.mrf.mxu0
        %2692 = vmatprep.mubr.f32.mxu0 0.0
        %2693 = vmatmul.mubr.f32.gmra.mxu0 %v293
        %v2694 = vpop.f32.mrf.mxu0
        %v2695 = vadd.f32 %v2547, %v2694
        %v2696 = vpop.f32.mrf.mxu0
        %2697 = vmatprep.mubr.f32.mxu0 0.0
        %2698 = vmatmul.mubr.f32.gmra.mxu0 %v295
        %v2699 = vpop.f32.mrf.mxu0
        %v2700 = vadd.f32 %v2552, %v2699
        %v2701 = vpop.f32.mrf.mxu0
        %2702 = vmatprep.mubr.f32.mxu0 0.0
        %2703 = vmatmul.mubr.f32.gmra.mxu0 %v297
        %v2704 = vpop.f32.mrf.mxu0
        %v2705 = vadd.f32 %v2557, %v2704
        %v2706 = vpop.f32.mrf.mxu0
        %2707 = vmatprep.mubr.f32.mxu0 0.0
        %2708 = vmatmul.mubr.f32.gmra.mxu0 %v299
        %v2709 = vpop.f32.mrf.mxu0
        %v2710 = vadd.f32 %v2562, %v2709
        %v2711 = vpop.f32.mrf.mxu0
        %2712 = vmatprep.mubr.f32.mxu0 0.0
        %2713 = vmatmul.mubr.f32.gmra.mxu0 %v301
        %v2714 = vpop.f32.mrf.mxu0
        %v2715 = vadd.f32 %v2567, %v2714
        %v2716 = vpop.f32.mrf.mxu0
        %2717 = vmatprep.mubr.f32.mxu0 0.0
        %2718 = vmatmul.mubr.f32.gmra.mxu0 %v303
        %v2719 = vpop.f32.mrf.mxu0
        %v2720 = vadd.f32 %v2572, %v2719
        %v2721 = vpop.f32.mrf.mxu0
        %2722 = vmatprep.mubr.f32.mxu0 0.0
        %2723 = vmatmul.mubr.f32.gmra.mxu0 %v305
        %v2724 = vpop.f32.mrf.mxu0
        %v2725 = vadd.f32 %v2577, %v2724
        %v2726 = vpop.f32.mrf.mxu0
        %2727 = vmatprep.mubr.f32.mxu0 0.0
        %2728 = vmatmul.mubr.f32.gmra.mxu0 %v307
        %v2729 = vpop.f32.mrf.mxu0
        %v2730 = vadd.f32 %v2582, %v2729
        %v2731 = vpop.f32.mrf.mxu0
        %2732 = vmatprep.mubr.f32.mxu0 0.0
        %2733 = vmatmul.mubr.f32.gmra.mxu0 %v309
        %v2734 = vpop.f32.mrf.mxu0
        %v2735 = vadd.f32 %v2587, %v2734
        %v2736 = vpop.f32.mrf.mxu0
        %2737 = vmatprep.mubr.f32.mxu0 0.0
        %2738 = vmatmul.mubr.f32.gmra.mxu0 %v311
        %v2739 = vpop.f32.mrf.mxu0
        %v2740 = vadd.f32 %v2592, %v2739
        %v2741 = vpop.f32.mrf.mxu0
        %2742 = vmatprep.mubr.f32.mxu0 0.0
        %2743 = vmatmul.mubr.f32.gmra.mxu0 %v313
        %v2744 = vpop.f32.mrf.mxu0
        %v2745 = vadd.f32 %v2597, %v2744
        %v2746 = vpop.f32.mrf.mxu0
        %2747 = vmatprep.mubr.f32.mxu0 0.0
        %2748 = vmatmul.mubr.f32.gmra.mxu0 %v824
        %v2749 = vpop.f32.mrf.mxu0
        %v2750 = vadd.f32 %v2602, %v2749
        %v2751 = vpop.f32.mrf.mxu0
        %2752 = vmatprep.mubr.f32.mxu0 0.0
        %2753 = vmatmul.mubr.f32.gmra.mxu0 %v826
        %v2754 = vpop.f32.mrf.mxu0
        %v2755 = vadd.f32 %v2607, %v2754
        %v2756 = vpop.f32.mrf.mxu0
        %2757 = vdwg.mxu0
        %s2758 = scalar_lea.vmem %s1, 56
        %v2759 = vld [vmem:[%s2758] sm:$0xf]
        %v2761 = vsel %vm315, %v2759, 0
        %2763 = vmatprep.subr.mxu0 0.0
        %2764 = vmatpush1.msra.mxu0 0.0
        %2765 = vmatprep.subr.mxu0 0.0
        %2766 = vmatpush1.msra.mxu0 0.0
        %2767 = vmatprep.subr.mxu0 0.0
        %2768 = vmatpush1.msra.mxu0 0.0
        %2769 = vmatprep.subr.mxu0 0.0
        %2770 = vmatpush1.msra.mxu0 0.0
        %2771 = vmatprep.subr.mxu0 0.0
        %2772 = vmatpush1.msra.mxu0 0.0
        %2773 = vmatprep.subr.mxu0 0.0
        %2774 = vmatpush1.msra.mxu0 0.0
        %2775 = vmatprep.subr.mxu0 0.0
        %2776 = vmatpush1.msra.mxu0 0.0
        %2777 = vmatprep.subr.mxu0 0.0
        %2778 = vmatpush1.msra.mxu0 0.0
        %2779 = vmatprep.subr.mxu0 0.0
        %2780 = vmatpush1.msra.mxu0 0.0
        %2781 = vmatprep.subr.mxu0 0.0
        %2782 = vmatpush1.msra.mxu0 0.0
        %2783 = vmatprep.subr.mxu0 0.0
        %2784 = vmatpush1.msra.mxu0 0.0
        %2785 = vmatprep.subr.mxu0 0.0
        %2786 = vmatpush1.msra.mxu0 0.0
        %2787 = vmatprep.subr.mxu0 0.0
        %2788 = vmatpush1.msra.mxu0 0.0
        %2789 = vmatprep.subr.mxu0 0.0
        %2790 = vmatpush1.msra.mxu0 0.0
        %2791 = vmatprep.subr.mxu0 0.0
        %2792 = vmatpush1.msra.mxu0 0.0
        %2793 = vmatprep.subr.mxu0 0.0
        %2794 = vmatpush1.msra.mxu0 %v2761
        %2795 = vmatprep.subr.mxu0 0.0
        %2796 = vmatpush2.msra.mxu0 0.0
        %2797 = vmatprep.subr.mxu0 0.0
        %2798 = vmatpush2.msra.mxu0 0.0
        %2799 = vmatprep.subr.mxu0 0.0
        %2800 = vmatpush2.msra.mxu0 0.0
        %2801 = vmatprep.subr.mxu0 0.0
        %2802 = vmatpush2.msra.mxu0 0.0
        %2803 = vmatprep.subr.mxu0 0.0
        %2804 = vmatpush2.msra.mxu0 0.0
        %2805 = vmatprep.subr.mxu0 0.0
        %2806 = vmatpush2.msra.mxu0 0.0
        %2807 = vmatprep.subr.mxu0 0.0
        %2808 = vmatpush2.msra.mxu0 0.0
        %2809 = vmatprep.subr.mxu0 0.0
        %2810 = vmatpush2.msra.mxu0 0.0
        %2811 = vmatprep.subr.mxu0 0.0
        %2812 = vmatpush2.msra.mxu0 0.0
        %2813 = vmatprep.subr.mxu0 0.0
        %2814 = vmatpush2.msra.mxu0 0.0
        %2815 = vmatprep.subr.mxu0 0.0
        %2816 = vmatpush2.msra.mxu0 0.0
        %2817 = vmatprep.subr.mxu0 0.0
        %2818 = vmatpush2.msra.mxu0 0.0
        %2819 = vmatprep.subr.mxu0 0.0
        %2820 = vmatpush2.msra.mxu0 0.0
        %2821 = vmatprep.subr.mxu0 0.0
        %2822 = vmatpush2.msra.mxu0 0.0
        %2823 = vmatprep.subr.mxu0 0.0
        %2824 = vmatpush2.msra.mxu0 0.0
        %2825 = vmatprep.subr.mxu0 0.0
        %2826 = vmatpush2.msra.mxu0 0.0
        %2827 = vmatprep.mubr.f32.mxu0 0.0
        %2828 = vmatmul.mubr.f32.gmra.mxu0 %v291
        %v2829 = vpop.f32.mrf.mxu0
        %v2830 = vadd.f32 0.0, %v2829
        %v2831 = vpop.f32.mrf.mxu0
        %2832 = vmatprep.mubr.f32.mxu0 0.0
        %2833 = vmatmul.mubr.f32.gmra.mxu0 %v293
        %v2834 = vpop.f32.mrf.mxu0
        %v2835 = vadd.f32 0.0, %v2834
        %v2836 = vpop.f32.mrf.mxu0
        %2837 = vmatprep.mubr.f32.mxu0 0.0
        %2838 = vmatmul.mubr.f32.gmra.mxu0 %v295
        %v2839 = vpop.f32.mrf.mxu0
        %v2840 = vadd.f32 0.0, %v2839
        %v2841 = vpop.f32.mrf.mxu0
        %2842 = vmatprep.mubr.f32.mxu0 0.0
        %2843 = vmatmul.mubr.f32.gmra.mxu0 %v297
        %v2844 = vpop.f32.mrf.mxu0
        %v2845 = vadd.f32 0.0, %v2844
        %v2846 = vpop.f32.mrf.mxu0
        %2847 = vmatprep.mubr.f32.mxu0 0.0
        %2848 = vmatmul.mubr.f32.gmra.mxu0 %v299
        %v2849 = vpop.f32.mrf.mxu0
        %v2850 = vadd.f32 0.0, %v2849
        %v2851 = vpop.f32.mrf.mxu0
        %2852 = vmatprep.mubr.f32.mxu0 0.0
        %2853 = vmatmul.mubr.f32.gmra.mxu0 %v301
        %v2854 = vpop.f32.mrf.mxu0
        %v2855 = vadd.f32 0.0, %v2854
        %v2856 = vpop.f32.mrf.mxu0
        %2857 = vmatprep.mubr.f32.mxu0 0.0
        %2858 = vmatmul.mubr.f32.gmra.mxu0 %v303
        %v2859 = vpop.f32.mrf.mxu0
        %v2860 = vadd.f32 0.0, %v2859
        %v2861 = vpop.f32.mrf.mxu0
        %2862 = vmatprep.mubr.f32.mxu0 0.0
        %2863 = vmatmul.mubr.f32.gmra.mxu0 %v305
        %v2864 = vpop.f32.mrf.mxu0
        %v2865 = vadd.f32 0.0, %v2864
        %v2866 = vpop.f32.mrf.mxu0
        %2867 = vmatprep.mubr.f32.mxu0 0.0
        %2868 = vmatmul.mubr.f32.gmra.mxu0 %v307
        %v2869 = vpop.f32.mrf.mxu0
        %v2870 = vadd.f32 0.0, %v2869
        %v2871 = vpop.f32.mrf.mxu0
        %2872 = vmatprep.mubr.f32.mxu0 0.0
        %2873 = vmatmul.mubr.f32.gmra.mxu0 %v309
        %v2874 = vpop.f32.mrf.mxu0
        %v2875 = vadd.f32 0.0, %v2874
        %v2876 = vpop.f32.mrf.mxu0
        %2877 = vmatprep.mubr.f32.mxu0 0.0
        %2878 = vmatmul.mubr.f32.gmra.mxu0 %v311
        %v2879 = vpop.f32.mrf.mxu0
        %v2880 = vadd.f32 0.0, %v2879
        %v2881 = vpop.f32.mrf.mxu0
        %2882 = vmatprep.mubr.f32.mxu0 0.0
        %2883 = vmatmul.mubr.f32.gmra.mxu0 %v313
        %v2884 = vpop.f32.mrf.mxu0
        %v2885 = vadd.f32 0.0, %v2884
        %v2886 = vpop.f32.mrf.mxu0
        %2887 = vmatprep.mubr.f32.mxu0 0.0
        %2888 = vmatmul.mubr.f32.gmra.mxu0 %v824
        %v2889 = vpop.f32.mrf.mxu0
        %v2890 = vadd.f32 0.0, %v2889
        %v2891 = vpop.f32.mrf.mxu0
        %2892 = vmatprep.mubr.f32.mxu0 0.0
        %2893 = vmatmul.mubr.f32.gmra.mxu0 %v826
        %v2894 = vpop.f32.mrf.mxu0
        %v2895 = vadd.f32 0.0, %v2894
        %v2896 = vpop.f32.mrf.mxu0
        %2897 = vmatprep.mubr.f32.mxu0 0.0
        %2898 = vmatmul.mubr.f32.gmra.mxu0 %v2257
        %v2899 = vpop.f32.mrf.mxu0
        %v2900 = vadd.f32 0.0, %v2899
        %v2901 = vpop.f32.mrf.mxu0
        %2902 = vmatprep.mubr.f32.mxu0 0.0
        %2903 = vmatmul.mubr.f32.gmra.mxu0 %v2259
        %v2904 = vpop.f32.mrf.mxu0
        %v2905 = vadd.f32 0.0, %v2904
        %v2906 = vpop.f32.mrf.mxu0
        %2907 = vdwg.mxu0
        %v2908 = vadd.f32 %v2680, %v2830
        %v2909 = vadd.f32 %v2685, %v2835
        %v2910 = vadd.f32 %v2690, %v2840
        %v2911 = vadd.f32 %v2695, %v2845
        %v2912 = vadd.f32 %v2700, %v2850
        %v2913 = vadd.f32 %v2705, %v2855
        %v2914 = vadd.f32 %v2710, %v2860
        %v2915 = vadd.f32 %v2715, %v2865
        %v2916 = vadd.f32 %v2720, %v2870
        %v2917 = vadd.f32 %v2725, %v2875
        %v2918 = vadd.f32 %v2730, %v2880
        %v2919 = vadd.f32 %v2735, %v2885
        %v2920 = vadd.f32 %v2740, %v2890
        %v2921 = vadd.f32 %v2745, %v2895
        %v2922 = vadd.f32 %v2750, %v2900
        %v2923 = vadd.f32 %v2755, %v2905
        %s2924 = scalar_lea.vmem %s1, 60
        %v2925 = vld [vmem:[%s2924] sm:$0xf]
        %v2926 = vrot.slane %v210, 2
        %v2927 = vrot.slane %v211, 2
        %v2928 = vsel %vm1034, %v2926, %v2927
        %v2929 = vrot.slane %v212, 2
        %v2930 = vsel %vm1034, %v2927, %v2929
        %v2931 = vsel %vm282, %v2928, 0
        %v2933 = vsel %vm282, %v2930, 0
        %v2936 = vsel %vm315, %v2925, 0
        %2938 = vmatprep.subr.mxu0 0.0
        %2939 = vmatpush1.msra.mxu0 0.0
        %2940 = vmatprep.subr.mxu0 0.0
        %2941 = vmatpush1.msra.mxu0 0.0
        %2942 = vmatprep.subr.mxu0 0.0
        %2943 = vmatpush1.msra.mxu0 0.0
        %2944 = vmatprep.subr.mxu0 0.0
        %2945 = vmatpush1.msra.mxu0 0.0
        %2946 = vmatprep.subr.mxu0 0.0
        %2947 = vmatpush1.msra.mxu0 0.0
        %2948 = vmatprep.subr.mxu0 0.0
        %2949 = vmatpush1.msra.mxu0 0.0
        %2950 = vmatprep.subr.mxu0 0.0
        %2951 = vmatpush1.msra.mxu0 0.0
        %2952 = vmatprep.subr.mxu0 0.0
        %2953 = vmatpush1.msra.mxu0 0.0
        %2954 = vmatprep.subr.mxu0 0.0
        %2955 = vmatpush1.msra.mxu0 0.0
        %2956 = vmatprep.subr.mxu0 0.0
        %2957 = vmatpush1.msra.mxu0 0.0
        %2958 = vmatprep.subr.mxu0 0.0
        %2959 = vmatpush1.msra.mxu0 0.0
        %2960 = vmatprep.subr.mxu0 0.0
        %2961 = vmatpush1.msra.mxu0 0.0
        %2962 = vmatprep.subr.mxu0 0.0
        %2963 = vmatpush1.msra.mxu0 0.0
        %2964 = vmatprep.subr.mxu0 0.0
        %2965 = vmatpush1.msra.mxu0 0.0
        %2966 = vmatprep.subr.mxu0 0.0
        %2967 = vmatpush1.msra.mxu0 0.0
        %2968 = vmatprep.subr.mxu0 0.0
        %2969 = vmatpush1.msra.mxu0 %v2936
        %2970 = vmatprep.subr.mxu0 0.0
        %2971 = vmatpush2.msra.mxu0 0.0
        %2972 = vmatprep.subr.mxu0 0.0
        %2973 = vmatpush2.msra.mxu0 0.0
        %2974 = vmatprep.subr.mxu0 0.0
        %2975 = vmatpush2.msra.mxu0 0.0
        %2976 = vmatprep.subr.mxu0 0.0
        %2977 = vmatpush2.msra.mxu0 0.0
        %2978 = vmatprep.subr.mxu0 0.0
        %2979 = vmatpush2.msra.mxu0 0.0
        %2980 = vmatprep.subr.mxu0 0.0
        %2981 = vmatpush2.msra.mxu0 0.0
        %2982 = vmatprep.subr.mxu0 0.0
        %2983 = vmatpush2.msra.mxu0 0.0
        %2984 = vmatprep.subr.mxu0 0.0
        %2985 = vmatpush2.msra.mxu0 0.0
        %2986 = vmatprep.subr.mxu0 0.0
        %2987 = vmatpush2.msra.mxu0 0.0
        %2988 = vmatprep.subr.mxu0 0.0
        %2989 = vmatpush2.msra.mxu0 0.0
        %2990 = vmatprep.subr.mxu0 0.0
        %2991 = vmatpush2.msra.mxu0 0.0
        %2992 = vmatprep.subr.mxu0 0.0
        %2993 = vmatpush2.msra.mxu0 0.0
        %2994 = vmatprep.subr.mxu0 0.0
        %2995 = vmatpush2.msra.mxu0 0.0
        %2996 = vmatprep.subr.mxu0 0.0
        %2997 = vmatpush2.msra.mxu0 0.0
        %2998 = vmatprep.subr.mxu0 0.0
        %2999 = vmatpush2.msra.mxu0 0.0
        %3000 = vmatprep.subr.mxu0 0.0
        %3001 = vmatpush2.msra.mxu0 0.0
        %3002 = vmatprep.mubr.f32.mxu0 0.0
        %3003 = vmatmul.mubr.f32.gmra.mxu0 %v1083
        %v3004 = vpop.f32.mrf.mxu0
        %v3005 = vadd.f32 0.0, %v3004
        %v3006 = vpop.f32.mrf.mxu0
        %3007 = vmatprep.mubr.f32.mxu0 0.0
        %3008 = vmatmul.mubr.f32.gmra.mxu0 %v1085
        %v3009 = vpop.f32.mrf.mxu0
        %v3010 = vadd.f32 0.0, %v3009
        %v3011 = vpop.f32.mrf.mxu0
        %3012 = vmatprep.mubr.f32.mxu0 0.0
        %3013 = vmatmul.mubr.f32.gmra.mxu0 %v1087
        %v3014 = vpop.f32.mrf.mxu0
        %v3015 = vadd.f32 0.0, %v3014
        %v3016 = vpop.f32.mrf.mxu0
        %3017 = vmatprep.mubr.f32.mxu0 0.0
        %3018 = vmatmul.mubr.f32.gmra.mxu0 %v1089
        %v3019 = vpop.f32.mrf.mxu0
        %v3020 = vadd.f32 0.0, %v3019
        %v3021 = vpop.f32.mrf.mxu0
        %3022 = vmatprep.mubr.f32.mxu0 0.0
        %3023 = vmatmul.mubr.f32.gmra.mxu0 %v1091
        %v3024 = vpop.f32.mrf.mxu0
        %v3025 = vadd.f32 0.0, %v3024
        %v3026 = vpop.f32.mrf.mxu0
        %3027 = vmatprep.mubr.f32.mxu0 0.0
        %3028 = vmatmul.mubr.f32.gmra.mxu0 %v1093
        %v3029 = vpop.f32.mrf.mxu0
        %v3030 = vadd.f32 0.0, %v3029
        %v3031 = vpop.f32.mrf.mxu0
        %3032 = vmatprep.mubr.f32.mxu0 0.0
        %3033 = vmatmul.mubr.f32.gmra.mxu0 %v1095
        %v3034 = vpop.f32.mrf.mxu0
        %v3035 = vadd.f32 0.0, %v3034
        %v3036 = vpop.f32.mrf.mxu0
        %3037 = vmatprep.mubr.f32.mxu0 0.0
        %3038 = vmatmul.mubr.f32.gmra.mxu0 %v1097
        %v3039 = vpop.f32.mrf.mxu0
        %v3040 = vadd.f32 0.0, %v3039
        %v3041 = vpop.f32.mrf.mxu0
        %3042 = vmatprep.mubr.f32.mxu0 0.0
        %3043 = vmatmul.mubr.f32.gmra.mxu0 %v1099
        %v3044 = vpop.f32.mrf.mxu0
        %v3045 = vadd.f32 0.0, %v3044
        %v3046 = vpop.f32.mrf.mxu0
        %3047 = vmatprep.mubr.f32.mxu0 0.0
        %3048 = vmatmul.mubr.f32.gmra.mxu0 %v1101
        %v3049 = vpop.f32.mrf.mxu0
        %v3050 = vadd.f32 0.0, %v3049
        %v3051 = vpop.f32.mrf.mxu0
        %3052 = vmatprep.mubr.f32.mxu0 0.0
        %3053 = vmatmul.mubr.f32.gmra.mxu0 %v1103
        %v3054 = vpop.f32.mrf.mxu0
        %v3055 = vadd.f32 0.0, %v3054
        %v3056 = vpop.f32.mrf.mxu0
        %3057 = vmatprep.mubr.f32.mxu0 0.0
        %3058 = vmatmul.mubr.f32.gmra.mxu0 %v1105
        %v3059 = vpop.f32.mrf.mxu0
        %v3060 = vadd.f32 0.0, %v3059
        %v3061 = vpop.f32.mrf.mxu0
        %3062 = vmatprep.mubr.f32.mxu0 0.0
        %3063 = vmatmul.mubr.f32.gmra.mxu0 %v1576
        %v3064 = vpop.f32.mrf.mxu0
        %v3065 = vadd.f32 0.0, %v3064
        %v3066 = vpop.f32.mrf.mxu0
        %3067 = vmatprep.mubr.f32.mxu0 0.0
        %3068 = vmatmul.mubr.f32.gmra.mxu0 %v1578
        %v3069 = vpop.f32.mrf.mxu0
        %v3070 = vadd.f32 0.0, %v3069
        %v3071 = vpop.f32.mrf.mxu0
        %3072 = vmatprep.mubr.f32.mxu0 0.0
        %3073 = vmatmul.mubr.f32.gmra.mxu0 %v2931
        %v3074 = vpop.f32.mrf.mxu0
        %v3075 = vadd.f32 0.0, %v3074
        %v3076 = vpop.f32.mrf.mxu0
        %3077 = vmatprep.mubr.f32.mxu0 0.0
        %3078 = vmatmul.mubr.f32.gmra.mxu0 %v2933
        %v3079 = vpop.f32.mrf.mxu0
        %v3080 = vadd.f32 0.0, %v3079
        %v3081 = vpop.f32.mrf.mxu0
        %3082 = vdwg.mxu0
        %v3083 = vadd.f32 %v2908, %v3005
        %v3084 = vadd.f32 %v2909, %v3010
        %v3085 = vadd.f32 %v2910, %v3015
        %v3086 = vadd.f32 %v2911, %v3020
        %v3087 = vadd.f32 %v2912, %v3025
        %v3088 = vadd.f32 %v2913, %v3030
        %v3089 = vadd.f32 %v2914, %v3035
        %v3090 = vadd.f32 %v2915, %v3040
        %v3091 = vadd.f32 %v2916, %v3045
        %v3092 = vadd.f32 %v2917, %v3050
        %v3093 = vadd.f32 %v2918, %v3055
        %v3094 = vadd.f32 %v2919, %v3060
        %v3095 = vadd.f32 %v2920, %v3065
        %v3096 = vadd.f32 %v2921, %v3070
        %v3097 = vadd.f32 %v2922, %v3075
        %v3098 = vadd.f32 %v2923, %v3080
        %v3099 = vadd.f32 %v3083, %v996
        %v3100 = vadd.f32 %v3084, %v996
        %v3101 = vadd.f32 %v3085, %v996
        %v3102 = vadd.f32 %v3086, %v996
        %v3103 = vadd.f32 %v3087, %v996
        %v3104 = vadd.f32 %v3088, %v996
        %v3105 = vadd.f32 %v3089, %v996
        %v3106 = vadd.f32 %v3090, %v996
        %v3107 = vadd.f32 %v3091, %v996
        %v3108 = vadd.f32 %v3092, %v996
        %v3109 = vadd.f32 %v3093, %v996
        %v3110 = vadd.f32 %v3094, %v996
        %v3111 = vadd.f32 %v3095, %v996
        %v3112 = vadd.f32 %v3096, %v996
        %v3113 = vadd.f32 %v3097, %v996
        %v3114 = vadd.f32 %v3098, %v996
        %s3115 = scalar_lea.vmem %s173, 384 [#allocation2]
        %3116 = vst.msk [vmem:[%s3115] sm:$0xff] %vm282, %v3099
        %3117 = vst.msk [vmem:[%s3115 + $0x8] sm:$0xff] %vm282, %v3100
        %3118 = vst.msk [vmem:[%s3115 + $0x10] sm:$0xff] %vm282, %v3101
        %3119 = vst.msk [vmem:[%s3115 + $0x18] sm:$0xff] %vm282, %v3102
        %3120 = vst.msk [vmem:[%s3115 + $0x20] sm:$0xff] %vm282, %v3103
        %3121 = vst.msk [vmem:[%s3115 + $0x28] sm:$0xff] %vm282, %v3104
        %3122 = vst.msk [vmem:[%s3115 + $0x30] sm:$0xff] %vm282, %v3105
        %3123 = vst.msk [vmem:[%s3115 + $0x38] sm:$0xff] %vm282, %v3106
        %3124 = vst.msk [vmem:[%s3115 + $0x40] sm:$0xff] %vm282, %v3107
        %3125 = vst.msk [vmem:[%s3115 + $0x48] sm:$0xff] %vm282, %v3108
        %3126 = vst.msk [vmem:[%s3115 + $0x50] sm:$0xff] %vm282, %v3109
        %3127 = vst.msk [vmem:[%s3115 + $0x58] sm:$0xff] %vm282, %v3110
        %3128 = vst.msk [vmem:[%s3115 + $0x60] sm:$0xff] %vm282, %v3111
        %3129 = vst.msk [vmem:[%s3115 + $0x68] sm:$0xff] %vm282, %v3112
        %3130 = vst.msk [vmem:[%s3115 + $0x70] sm:$0xff] %vm282, %v3113
        %3131 = vst.msk [vmem:[%s3115 + $0x78] sm:$0xff] %vm282, %v3114
        %s3132 = sand.u32 %s104, 1
        %s3133 = sand.u32 %s104, 1
        %s3134 = smul.addr %s3133, 512
        %s3135 = scalar_lea.vmem [#allocation2], %s3134
        // Predicated region
        $region33: #{tpu_custom_call.1} parent=31 // pred_check
          %p3136 = pneg %p114
        $region34: #{tpu_custom_call.1} parent=31 // pred_check_branch
          %3138 = sbr.rel (%p3136) target = $region36
        $region35: #{tpu_custom_call.1} parent=31 // pred_region
          %s3139 = smul.u32 8, %s19
          %s3140 = smul.addr %s3139, 2
          %s3141 = smul.addr %s18, 128
          %s3142 = sadd.s32 %s3140, %s3141
          %s3143 = smul.addr %s3142, 8
          %s3144 = scalar_lea.vmem %s3, %s3143
          // Predicated region
          $region37: #{tpu_custom_call.1} parent=35 // pred_check
            _
          $region38: #{tpu_custom_call.1} parent=35 // pred_check_branch
            %3146 = sbr.rel (0) target = $region40
          $region39: #{tpu_custom_call.1} parent=35 // pred_region
            // Predicated region
            $region41: #{tpu_custom_call.1} parent=39 // pred_check
              _
            $region42: #{tpu_custom_call.1} parent=39 // pred_check_branch
              %3148 = sbr.rel (0) target = $region44
            $region43: #{tpu_custom_call.1} parent=39 // pred_region
              // Predicated region
              $region56: #{tpu_custom_call.1} parent=43 // pred_check
                _
              $region57: #{tpu_custom_call.1} parent=43 // pred_check_branch
                %3290 = sbr.rel (0) target = $region59
              $region58: #{tpu_custom_call.1} parent=43 // pred_region
                loop: start=0, step=1, limit=1
                $region60: #{tpu_custom_call.1} parent=58 // loop_pre_header
                  _
                $region61: #{tpu_custom_call.1} parent=58 // loop_header
                  %s3292 = sphi 0, %s3296
                  %p3293 = scmp.ge.s32.totalorder %s3292, 1
                  %s3297 = sphi %s3135, %s3135
                  %s3298 = sphi %s3144, %s3144
                $region62: #{tpu_custom_call.1} parent=58 // loop_header_branch
                  %3295 = sbr.rel (%p3293) target = $region66
                $region63: #{tpu_custom_call.1} parent=58 // loop_body
                  %v3299 = vld [vmem:[%s3297] sm:$0xff]
                  %3300 = vst [vmem:[%s3298] sm:$0xff] %v3299
                  %v3301 = vld [vmem:[%s3297 + $0x8] sm:$0xff]
                  %3302 = vst [vmem:[%s3298 + $0x8] sm:$0xff] %v3301
                  %v3303 = vld [vmem:[%s3297 + $0x10] sm:$0xff]
                  %3304 = vst [vmem:[%s3298 + $0x10] sm:$0xff] %v3303
                  %v3305 = vld [vmem:[%s3297 + $0x18] sm:$0xff]
                  %3306 = vst [vmem:[%s3298 + $0x18] sm:$0xff] %v3305
                  %v3307 = vld [vmem:[%s3297 + $0x20] sm:$0xff]
                  %3308 = vst [vmem:[%s3298 + $0x20] sm:$0xff] %v3307
                  %v3309 = vld [vmem:[%s3297 + $0x28] sm:$0xff]
                  %3310 = vst [vmem:[%s3298 + $0x28] sm:$0xff] %v3309
                  %v3311 = vld [vmem:[%s3297 + $0x30] sm:$0xff]
                  %3312 = vst [vmem:[%s3298 + $0x30] sm:$0xff] %v3311
                  %v3313 = vld [vmem:[%s3297 + $0x38] sm:$0xff]
                  %3314 = vst [vmem:[%s3298 + $0x38] sm:$0xff] %v3313
                  %v3315 = vld [vmem:[%s3297 + $0x40] sm:$0xff]
                  %3316 = vst [vmem:[%s3298 + $0x40] sm:$0xff] %v3315
                  %v3317 = vld [vmem:[%s3297 + $0x48] sm:$0xff]
                  %3318 = vst [vmem:[%s3298 + $0x48] sm:$0xff] %v3317
                  %v3319 = vld [vmem:[%s3297 + $0x50] sm:$0xff]
                  %3320 = vst [vmem:[%s3298 + $0x50] sm:$0xff] %v3319
                  %v3321 = vld [vmem:[%s3297 + $0x58] sm:$0xff]
                  %3322 = vst [vmem:[%s3298 + $0x58] sm:$0xff] %v3321
                  %v3323 = vld [vmem:[%s3297 + $0x60] sm:$0xff]
                  %3324 = vst [vmem:[%s3298 + $0x60] sm:$0xff] %v3323
                  %v3325 = vld [vmem:[%s3297 + $0x68] sm:$0xff]
                  %3326 = vst [vmem:[%s3298 + $0x68] sm:$0xff] %v3325
                  %v3327 = vld [vmem:[%s3297 + $0x70] sm:$0xff]
                  %3328 = vst [vmem:[%s3298 + $0x70] sm:$0xff] %v3327
                  %v3329 = vld [vmem:[%s3297 + $0x78] sm:$0xff]
                  %3330 = vst [vmem:[%s3298 + $0x78] sm:$0xff] %v3329
                  %v3331 = vld [vmem:[%s3297 + $0x80] sm:$0xff]
                  %3332 = vst [vmem:[%s3298 + $0x100] sm:$0xff] %v3331
                  %v3333 = vld [vmem:[%s3297 + $0x88] sm:$0xff]
                  %3334 = vst [vmem:[%s3298 + $0x108] sm:$0xff] %v3333
                  %v3335 = vld [vmem:[%s3297 + $0x90] sm:$0xff]
                  %3336 = vst [vmem:[%s3298 + $0x110] sm:$0xff] %v3335
                  %v3337 = vld [vmem:[%s3297 + $0x98] sm:$0xff]
                  %3338 = vst [vmem:[%s3298 + $0x118] sm:$0xff] %v3337
                  %v3339 = vld [vmem:[%s3297 + $0xa0] sm:$0xff]
                  %3340 = vst [vmem:[%s3298 + $0x120] sm:$0xff] %v3339
                  %v3341 = vld [vmem:[%s3297 + $0xa8] sm:$0xff]
                  %3342 = vst [vmem:[%s3298 + $0x128] sm:$0xff] %v3341
                  %v3343 = vld [vmem:[%s3297 + $0xb0] sm:$0xff]
                  %3344 = vst [vmem:[%s3298 + $0x130] sm:$0xff] %v3343
                  %v3345 = vld [vmem:[%s3297 + $0xb8] sm:$0xff]
                  %3346 = vst [vmem:[%s3298 + $0x138] sm:$0xff] %v3345
                  %v3347 = vld [vmem:[%s3297 + $0xc0] sm:$0xff]
                  %3348 = vst [vmem:[%s3298 + $0x140] sm:$0xff] %v3347
                  %v3349 = vld [vmem:[%s3297 + $0xc8] sm:$0xff]
                  %3350 = vst [vmem:[%s3298 + $0x148] sm:$0xff] %v3349
                  %v3351 = vld [vmem:[%s3297 + $0xd0] sm:$0xff]
                  %3352 = vst [vmem:[%s3298 + $0x150] sm:$0xff] %v3351
                  %v3353 = vld [vmem:[%s3297 + $0xd8] sm:$0xff]
                  %3354 = vst [vmem:[%s3298 + $0x158] sm:$0xff] %v3353
                  %v3355 = vld [vmem:[%s3297 + $0xe0] sm:$0xff]
                  %3356 = vst [vmem:[%s3298 + $0x160] sm:$0xff] %v3355
                  %v3357 = vld [vmem:[%s3297 + $0xe8] sm:$0xff]
                  %3358 = vst [vmem:[%s3298 + $0x168] sm:$0xff] %v3357
                  %v3359 = vld [vmem:[%s3297 + $0xf0] sm:$0xff]
                  %3360 = vst [vmem:[%s3298 + $0x170] sm:$0xff] %v3359
                  %v3361 = vld [vmem:[%s3297 + $0xf8] sm:$0xff]
                  %3362 = vst [vmem:[%s3298 + $0x178] sm:$0xff] %v3361
                  %v3363 = vld [vmem:[%s3297 + $0x100] sm:$0xff]
                  %3364 = vst [vmem:[%s3298 + $0x200] sm:$0xff] %v3363
                  %v3365 = vld [vmem:[%s3297 + $0x108] sm:$0xff]
                  %3366 = vst [vmem:[%s3298 + $0x208] sm:$0xff] %v3365
                  %v3367 = vld [vmem:[%s3297 + $0x110] sm:$0xff]
                  %3368 = vst [vmem:[%s3298 + $0x210] sm:$0xff] %v3367
                  %v3369 = vld [vmem:[%s3297 + $0x118] sm:$0xff]
                  %3370 = vst [vmem:[%s3298 + $0x218] sm:$0xff] %v3369
                  %v3371 = vld [vmem:[%s3297 + $0x120] sm:$0xff]
                  %3372 = vst [vmem:[%s3298 + $0x220] sm:$0xff] %v3371
                  %v3373 = vld [vmem:[%s3297 + $0x128] sm:$0xff]
                  %3374 = vst [vmem:[%s3298 + $0x228] sm:$0xff] %v3373
                  %v3375 = vld [vmem:[%s3297 + $0x130] sm:$0xff]
                  %3376 = vst [vmem:[%s3298 + $0x230] sm:$0xff] %v3375
                  %v3377 = vld [vmem:[%s3297 + $0x138] sm:$0xff]
                  %3378 = vst [vmem:[%s3298 + $0x238] sm:$0xff] %v3377
                  %v3379 = vld [vmem:[%s3297 + $0x140] sm:$0xff]
                  %3380 = vst [vmem:[%s3298 + $0x240] sm:$0xff] %v3379
                  %v3381 = vld [vmem:[%s3297 + $0x148] sm:$0xff]
                  %3382 = vst [vmem:[%s3298 + $0x248] sm:$0xff] %v3381
                  %v3383 = vld [vmem:[%s3297 + $0x150] sm:$0xff]
                  %3384 = vst [vmem:[%s3298 + $0x250] sm:$0xff] %v3383
                  %v3385 = vld [vmem:[%s3297 + $0x158] sm:$0xff]
                  %3386 = vst [vmem:[%s3298 + $0x258] sm:$0xff] %v3385
                  %v3387 = vld [vmem:[%s3297 + $0x160] sm:$0xff]
                  %3388 = vst [vmem:[%s3298 + $0x260] sm:$0xff] %v3387
                  %v3389 = vld [vmem:[%s3297 + $0x168] sm:$0xff]
                  %3390 = vst [vmem:[%s3298 + $0x268] sm:$0xff] %v3389
                  %v3391 = vld [vmem:[%s3297 + $0x170] sm:$0xff]
                  %3392 = vst [vmem:[%s3298 + $0x270] sm:$0xff] %v3391
                  %v3393 = vld [vmem:[%s3297 + $0x178] sm:$0xff]
                  %3394 = vst [vmem:[%s3298 + $0x278] sm:$0xff] %v3393
                  %v3395 = vld [vmem:[%s3297 + $0x180] sm:$0xff]
                  %3396 = vst [vmem:[%s3298 + $0x300] sm:$0xff] %v3395
                  %v3397 = vld [vmem:[%s3297 + $0x188] sm:$0xff]
                  %3398 = vst [vmem:[%s3298 + $0x308] sm:$0xff] %v3397
                  %v3399 = vld [vmem:[%s3297 + $0x190] sm:$0xff]
                  %3400 = vst [vmem:[%s3298 + $0x310] sm:$0xff] %v3399
                  %v3401 = vld [vmem:[%s3297 + $0x198] sm:$0xff]
                  %3402 = vst [vmem:[%s3298 + $0x318] sm:$0xff] %v3401
                  %v3403 = vld [vmem:[%s3297 + $0x1a0] sm:$0xff]
                  %3404 = vst [vmem:[%s3298 + $0x320] sm:$0xff] %v3403
                  %v3405 = vld [vmem:[%s3297 + $0x1a8] sm:$0xff]
                  %3406 = vst [vmem:[%s3298 + $0x328] sm:$0xff] %v3405
                  %v3407 = vld [vmem:[%s3297 + $0x1b0] sm:$0xff]
                  %3408 = vst [vmem:[%s3298 + $0x330] sm:$0xff] %v3407
                  %v3409 = vld [vmem:[%s3297 + $0x1b8] sm:$0xff]
                  %3410 = vst [vmem:[%s3298 + $0x338] sm:$0xff] %v3409
                  %v3411 = vld [vmem:[%s3297 + $0x1c0] sm:$0xff]
                  %3412 = vst [vmem:[%s3298 + $0x340] sm:$0xff] %v3411
                  %v3413 = vld [vmem:[%s3297 + $0x1c8] sm:$0xff]
                  %3414 = vst [vmem:[%s3298 + $0x348] sm:$0xff] %v3413
                  %v3415 = vld [vmem:[%s3297 + $0x1d0] sm:$0xff]
                  %3416 = vst [vmem:[%s3298 + $0x350] sm:$0xff] %v3415
                  %v3417 = vld [vmem:[%s3297 + $0x1d8] sm:$0xff]
                  %3418 = vst [vmem:[%s3298 + $0x358] sm:$0xff] %v3417
                  %v3419 = vld [vmem:[%s3297 + $0x1e0] sm:$0xff]
                  %3420 = vst [vmem:[%s3298 + $0x360] sm:$0xff] %v3419
                  %v3421 = vld [vmem:[%s3297 + $0x1e8] sm:$0xff]
                  %3422 = vst [vmem:[%s3298 + $0x368] sm:$0xff] %v3421
                  %v3423 = vld [vmem:[%s3297 + $0x1f0] sm:$0xff]
                  %3424 = vst [vmem:[%s3298 + $0x370] sm:$0xff] %v3423
                  %v3425 = vld [vmem:[%s3297 + $0x1f8] sm:$0xff]
                  %3426 = vst [vmem:[%s3298 + $0x378] sm:$0xff] %v3425
                $region64: #{tpu_custom_call.1} parent=58 // loop_footer
                  %s3296 = sadd.s32 1, %s3292
                $region65: #{tpu_custom_call.1} parent=58 // loop_footer_branch
                  %3291 = sbr.rel target = $region61
                $region66: #{tpu_custom_call.1} parent=58 // loop_exit
                  _
              $region59: #{tpu_custom_call.1} parent=43 // pred_fallthru
                _
              // Predicated region
              $region67: #{tpu_custom_call.1} parent=43 // pred_check
                _
              $region68: #{tpu_custom_call.1} parent=43 // pred_check_branch
                %3428 = sbr.rel target = $region70
              $region69: #{tpu_custom_call.1} parent=43 // pred_region
                _
              $region70: #{tpu_custom_call.1} parent=43 // pred_fallthru
                _
            $region44: #{tpu_custom_call.1} parent=39 // pred_fallthru
              _
            // Predicated region
            $region45: #{tpu_custom_call.1} parent=39 // pred_check
              _
            $region46: #{tpu_custom_call.1} parent=39 // pred_check_branch
              %3150 = sbr.rel target = $region48
            $region47: #{tpu_custom_call.1} parent=39 // pred_region
              %s3152 = ssub.s32 256, 1
              loop: start=0, step=1, limit=1
              $region49: #{tpu_custom_call.1} parent=47 // loop_pre_header
                _
              $region50: #{tpu_custom_call.1} parent=47 // loop_header
                %s3154 = sphi 0, %s3158
                %p3155 = scmp.ge.s32.totalorder %s3154, 1
                %s3159 = sphi %s3135, %s3135
                %s3160 = sphi %s3144, %s3144
              $region51: #{tpu_custom_call.1} parent=47 // loop_header_branch
                %3157 = sbr.rel (%p3155) target = $region55
              $region52: #{tpu_custom_call.1} parent=47 // loop_body
                %v3161 = vld [vmem:[%s3159] sm:%s3152]
                %3162 = vst [vmem:[%s3160] sm:%s3152] %v3161
                %v3163 = vld [vmem:[%s3159 + $0x8] sm:%s3152]
                %3164 = vst [vmem:[%s3160 + $0x8] sm:%s3152] %v3163
                %v3165 = vld [vmem:[%s3159 + $0x10] sm:%s3152]
                %3166 = vst [vmem:[%s3160 + $0x10] sm:%s3152] %v3165
                %v3167 = vld [vmem:[%s3159 + $0x18] sm:%s3152]
                %3168 = vst [vmem:[%s3160 + $0x18] sm:%s3152] %v3167
                %v3169 = vld [vmem:[%s3159 + $0x20] sm:%s3152]
                %3170 = vst [vmem:[%s3160 + $0x20] sm:%s3152] %v3169
                %v3171 = vld [vmem:[%s3159 + $0x28] sm:%s3152]
                %3172 = vst [vmem:[%s3160 + $0x28] sm:%s3152] %v3171
                %v3173 = vld [vmem:[%s3159 + $0x30] sm:%s3152]
                %3174 = vst [vmem:[%s3160 + $0x30] sm:%s3152] %v3173
                %v3175 = vld [vmem:[%s3159 + $0x38] sm:%s3152]
                %3176 = vst [vmem:[%s3160 + $0x38] sm:%s3152] %v3175
                %v3177 = vld [vmem:[%s3159 + $0x40] sm:%s3152]
                %3178 = vst [vmem:[%s3160 + $0x40] sm:%s3152] %v3177
                %v3179 = vld [vmem:[%s3159 + $0x48] sm:%s3152]
                %3180 = vst [vmem:[%s3160 + $0x48] sm:%s3152] %v3179
                %v3181 = vld [vmem:[%s3159 + $0x50] sm:%s3152]
                %3182 = vst [vmem:[%s3160 + $0x50] sm:%s3152] %v3181
                %v3183 = vld [vmem:[%s3159 + $0x58] sm:%s3152]
                %3184 = vst [vmem:[%s3160 + $0x58] sm:%s3152] %v3183
                %v3185 = vld [vmem:[%s3159 + $0x60] sm:%s3152]
                %3186 = vst [vmem:[%s3160 + $0x60] sm:%s3152] %v3185
                %v3187 = vld [vmem:[%s3159 + $0x68] sm:%s3152]
                %3188 = vst [vmem:[%s3160 + $0x68] sm:%s3152] %v3187
                %v3189 = vld [vmem:[%s3159 + $0x70] sm:%s3152]
                %3190 = vst [vmem:[%s3160 + $0x70] sm:%s3152] %v3189
                %v3191 = vld [vmem:[%s3159 + $0x78] sm:%s3152]
                %3192 = vst [vmem:[%s3160 + $0x78] sm:%s3152] %v3191
                %v3193 = vld [vmem:[%s3159 + $0x80] sm:%s3152]
                %3194 = vst [vmem:[%s3160 + $0x100] sm:%s3152] %v3193
                %v3195 = vld [vmem:[%s3159 + $0x88] sm:%s3152]
                %3196 = vst [vmem:[%s3160 + $0x108] sm:%s3152] %v3195
                %v3197 = vld [vmem:[%s3159 + $0x90] sm:%s3152]
                %3198 = vst [vmem:[%s3160 + $0x110] sm:%s3152] %v3197
                %v3199 = vld [vmem:[%s3159 + $0x98] sm:%s3152]
                %3200 = vst [vmem:[%s3160 + $0x118] sm:%s3152] %v3199
                %v3201 = vld [vmem:[%s3159 + $0xa0] sm:%s3152]
                %3202 = vst [vmem:[%s3160 + $0x120] sm:%s3152] %v3201
                %v3203 = vld [vmem:[%s3159 + $0xa8] sm:%s3152]
                %3204 = vst [vmem:[%s3160 + $0x128] sm:%s3152] %v3203
                %v3205 = vld [vmem:[%s3159 + $0xb0] sm:%s3152]
                %3206 = vst [vmem:[%s3160 + $0x130] sm:%s3152] %v3205
                %v3207 = vld [vmem:[%s3159 + $0xb8] sm:%s3152]
                %3208 = vst [vmem:[%s3160 + $0x138] sm:%s3152] %v3207
                %v3209 = vld [vmem:[%s3159 + $0xc0] sm:%s3152]
                %3210 = vst [vmem:[%s3160 + $0x140] sm:%s3152] %v3209
                %v3211 = vld [vmem:[%s3159 + $0xc8] sm:%s3152]
                %3212 = vst [vmem:[%s3160 + $0x148] sm:%s3152] %v3211
                %v3213 = vld [vmem:[%s3159 + $0xd0] sm:%s3152]
                %3214 = vst [vmem:[%s3160 + $0x150] sm:%s3152] %v3213
                %v3215 = vld [vmem:[%s3159 + $0xd8] sm:%s3152]
                %3216 = vst [vmem:[%s3160 + $0x158] sm:%s3152] %v3215
                %v3217 = vld [vmem:[%s3159 + $0xe0] sm:%s3152]
                %3218 = vst [vmem:[%s3160 + $0x160] sm:%s3152] %v3217
                %v3219 = vld [vmem:[%s3159 + $0xe8] sm:%s3152]
                %3220 = vst [vmem:[%s3160 + $0x168] sm:%s3152] %v3219
                %v3221 = vld [vmem:[%s3159 + $0xf0] sm:%s3152]
                %3222 = vst [vmem:[%s3160 + $0x170] sm:%s3152] %v3221
                %v3223 = vld [vmem:[%s3159 + $0xf8] sm:%s3152]
                %3224 = vst [vmem:[%s3160 + $0x178] sm:%s3152] %v3223
                %v3225 = vld [vmem:[%s3159 + $0x100] sm:%s3152]
                %3226 = vst [vmem:[%s3160 + $0x200] sm:%s3152] %v3225
                %v3227 = vld [vmem:[%s3159 + $0x108] sm:%s3152]
                %3228 = vst [vmem:[%s3160 + $0x208] sm:%s3152] %v3227
                %v3229 = vld [vmem:[%s3159 + $0x110] sm:%s3152]
                %3230 = vst [vmem:[%s3160 + $0x210] sm:%s3152] %v3229
                %v3231 = vld [vmem:[%s3159 + $0x118] sm:%s3152]
                %3232 = vst [vmem:[%s3160 + $0x218] sm:%s3152] %v3231
                %v3233 = vld [vmem:[%s3159 + $0x120] sm:%s3152]
                %3234 = vst [vmem:[%s3160 + $0x220] sm:%s3152] %v3233
                %v3235 = vld [vmem:[%s3159 + $0x128] sm:%s3152]
                %3236 = vst [vmem:[%s3160 + $0x228] sm:%s3152] %v3235
                %v3237 = vld [vmem:[%s3159 + $0x130] sm:%s3152]
                %3238 = vst [vmem:[%s3160 + $0x230] sm:%s3152] %v3237
                %v3239 = vld [vmem:[%s3159 + $0x138] sm:%s3152]
                %3240 = vst [vmem:[%s3160 + $0x238] sm:%s3152] %v3239
                %v3241 = vld [vmem:[%s3159 + $0x140] sm:%s3152]
                %3242 = vst [vmem:[%s3160 + $0x240] sm:%s3152] %v3241
                %v3243 = vld [vmem:[%s3159 + $0x148] sm:%s3152]
                %3244 = vst [vmem:[%s3160 + $0x248] sm:%s3152] %v3243
                %v3245 = vld [vmem:[%s3159 + $0x150] sm:%s3152]
                %3246 = vst [vmem:[%s3160 + $0x250] sm:%s3152] %v3245
                %v3247 = vld [vmem:[%s3159 + $0x158] sm:%s3152]
                %3248 = vst [vmem:[%s3160 + $0x258] sm:%s3152] %v3247
                %v3249 = vld [vmem:[%s3159 + $0x160] sm:%s3152]
                %3250 = vst [vmem:[%s3160 + $0x260] sm:%s3152] %v3249
                %v3251 = vld [vmem:[%s3159 + $0x168] sm:%s3152]
                %3252 = vst [vmem:[%s3160 + $0x268] sm:%s3152] %v3251
                %v3253 = vld [vmem:[%s3159 + $0x170] sm:%s3152]
                %3254 = vst [vmem:[%s3160 + $0x270] sm:%s3152] %v3253
                %v3255 = vld [vmem:[%s3159 + $0x178] sm:%s3152]
                %3256 = vst [vmem:[%s3160 + $0x278] sm:%s3152] %v3255
                %v3257 = vld [vmem:[%s3159 + $0x180] sm:%s3152]
                %3258 = vst [vmem:[%s3160 + $0x300] sm:%s3152] %v3257
                %v3259 = vld [vmem:[%s3159 + $0x188] sm:%s3152]
                %3260 = vst [vmem:[%s3160 + $0x308] sm:%s3152] %v3259
                %v3261 = vld [vmem:[%s3159 + $0x190] sm:%s3152]
                %3262 = vst [vmem:[%s3160 + $0x310] sm:%s3152] %v3261
                %v3263 = vld [vmem:[%s3159 + $0x198] sm:%s3152]
                %3264 = vst [vmem:[%s3160 + $0x318] sm:%s3152] %v3263
                %v3265 = vld [vmem:[%s3159 + $0x1a0] sm:%s3152]
                %3266 = vst [vmem:[%s3160 + $0x320] sm:%s3152] %v3265
                %v3267 = vld [vmem:[%s3159 + $0x1a8] sm:%s3152]
                %3268 = vst [vmem:[%s3160 + $0x328] sm:%s3152] %v3267
                %v3269 = vld [vmem:[%s3159 + $0x1b0] sm:%s3152]
                %3270 = vst [vmem:[%s3160 + $0x330] sm:%s3152] %v3269
                %v3271 = vld [vmem:[%s3159 + $0x1b8] sm:%s3152]
                %3272 = vst [vmem:[%s3160 + $0x338] sm:%s3152] %v3271
                %v3273 = vld [vmem:[%s3159 + $0x1c0] sm:%s3152]
                %3274 = vst [vmem:[%s3160 + $0x340] sm:%s3152] %v3273
                %v3275 = vld [vmem:[%s3159 + $0x1c8] sm:%s3152]
                %3276 = vst [vmem:[%s3160 + $0x348] sm:%s3152] %v3275
                %v3277 = vld [vmem:[%s3159 + $0x1d0] sm:%s3152]
                %3278 = vst [vmem:[%s3160 + $0x350] sm:%s3152] %v3277
                %v3279 = vld [vmem:[%s3159 + $0x1d8] sm:%s3152]
                %3280 = vst [vmem:[%s3160 + $0x358] sm:%s3152] %v3279
                %v3281 = vld [vmem:[%s3159 + $0x1e0] sm:%s3152]
                %3282 = vst [vmem:[%s3160 + $0x360] sm:%s3152] %v3281
                %v3283 = vld [vmem:[%s3159 + $0x1e8] sm:%s3152]
                %3284 = vst [vmem:[%s3160 + $0x368] sm:%s3152] %v3283
                %v3285 = vld [vmem:[%s3159 + $0x1f0] sm:%s3152]
                %3286 = vst [vmem:[%s3160 + $0x370] sm:%s3152] %v3285
                %v3287 = vld [vmem:[%s3159 + $0x1f8] sm:%s3152]
                %3288 = vst [vmem:[%s3160 + $0x378] sm:%s3152] %v3287
              $region53: #{tpu_custom_call.1} parent=47 // loop_footer
                %s3158 = sadd.s32 1, %s3154
              $region54: #{tpu_custom_call.1} parent=47 // loop_footer_branch
                %3153 = sbr.rel target = $region50
              $region55: #{tpu_custom_call.1} parent=47 // loop_exit
                _
            $region48: #{tpu_custom_call.1} parent=39 // pred_fallthru
              _
          $region40: #{tpu_custom_call.1} parent=35 // pred_fallthru
            _
          %3429 = vnop
        $region36: #{tpu_custom_call.1} parent=31 // pred_fallthru
          _
      $region32: #{tpu_custom_call.1} parent=5 // pred_fallthru
        _
      %p3430 = scmp.le.s32.totalorder 2, %s9
      // Predicated region
      $region71: #{tpu_custom_call.1} parent=5 // pred_check
        %p3431 = pneg %p3430
      $region72: #{tpu_custom_call.1} parent=5 // pred_check_branch
        %3433 = sbr.rel (%p3431) target = $region74
      $region73: #{tpu_custom_call.1} parent=5 // pred_region
        %s3434 = ssub.s32 %s9, 2
        // Predicated region
        $region75: #{tpu_custom_call.1} parent=73 // pred_check
          %p3435 = pneg %p120
        $region76: #{tpu_custom_call.1} parent=73 // pred_check_branch
          %3437 = sbr.rel (%p3435) target = $region78
        $region77: #{tpu_custom_call.1} parent=73 // pred_region
          %s3438 = sand.u32 %s105, 1
          %s3439 = sand.u32 %s105, 1
          %s3440 = smul.addr %s3439, 512
          %s3441 = scalar_lea.vmem [#allocation2], %s3440
        $region78: #{tpu_custom_call.1} parent=73 // pred_fallthru
          _
      $region74: #{tpu_custom_call.1} parent=5 // pred_fallthru
        _
    $region6: #{tpu_custom_call.1} parent=1 // loop_footer
      %s13 = sadd.s32 1, %s9
    $region7: #{tpu_custom_call.1} parent=1 // loop_footer_branch
      %8 = sbr.rel target = $region3
    $region8: #{tpu_custom_call.1} parent=1 // loop_exit
      _

</llo_original>
